<compile_context>
chip_gen: v7x
topology: tpu7x:2x2x1
jax: 0.10.0
libtpu: 0.0.40
codegen_flags: <defaults>
</compile_context>

<pallas_src>
import functools

import jax
import jax.numpy as jnp
from jax import lax
from jax.experimental import pallas as pl
from jax.experimental.pallas import tpu as pltpu


def _compiler_params(semantics):
    """Per-generation VMEM limit instead of one hard-coded number."""
    try:
        vmem_cap = int(pltpu.get_tpu_info().vmem_capacity_bytes)
    except Exception:                                   # conservative fallback
        vmem_cap = 64 * 1024 * 1024
    limit = min(vmem_cap * 3 // 4, 100 * 1024 * 1024)
    return pltpu.CompilerParams(dimension_semantics=semantics,
                                vmem_limit_bytes=limit)


# ----------------------------- Pallas kernels ------------------------------


def _upconv_kernel(x_ref, w_ref, b_ref, o_ref):
    # ConvTranspose2d(k=2, s=2) == one matmul over every pixel of the batch.
    # x_ref: (Cin, N*H1*W1) bf16, w_ref: (4*cmid, Cin) bf16, b_ref: (4*cmid,1) f32.
    acc = jnp.dot(w_ref[...], x_ref[...], preferred_element_type=jnp.float32)
    o_ref[...] = (acc + b_ref[...]).astype(o_ref.dtype)


def _im2col_3x3(x, H, W):
    """x: (H, W, C) -> list of 9 (H*W, C) taps of a 3x3 SAME stencil.

    No HBM padding: two zero rows are concatenated top/bottom (leading-dim
    concat), the slab is flattened to ((H+4)*W, C) and every tap is a shifted
    static slice of that flat slab; the left/right column wrap-around is
    masked with an iota-derived column index.
    """
    C = x.shape[-1]
    zrows = jnp.zeros((2, W, C), x.dtype)
    xf = jnp.concatenate([zrows, x, zrows], axis=0).reshape((H + 4) * W, C)
    col = lax.broadcasted_iota(jnp.int32, (H * W, C), 0) % W
    taps = []
    for kh in range(3):
        for kw in range(3):
            start = (kh + 1) * W + (kw - 1)
            t = xf[start:start + H * W, :]
            if kw == 0:                         # q - 1 < 0 -> zero
                t = jnp.where(col >= 1, t, jnp.zeros_like(t))
            elif kw == 2:                       # q + 1 >= W -> zero
                t = jnp.where(col <= W - 2, t, jnp.zeros_like(t))
            taps.append(t)
    return taps


def _conv_gn_relu(patch, w, b, g, bt, hw, cout):
    """One big-K matmul + bias + GroupNorm(num_groups=1) + ReLU (f32)."""
    acc = jnp.dot(patch, w, preferred_element_type=jnp.float32) + b
    inv_n = 1.0 / float(hw * cout)
    mu = jnp.sum(acc) * inv_n
    d = acc - mu
    var = jnp.sum(d * d) * inv_n                # two-pass: cancellation-safe
    y = d * lax.rsqrt(var + 1e-5) * g + bt
    return jnp.maximum(y, 0.0)


def _transpose_via_mxu(y, cout):
    """(H*W, Cout) -> (Cout, H*W) via a tiny identity matmul.

    Gives a lane-dense (multiple-of-128) store when Cout < 128 and always
    lowers (plain dot_general with a transposed RHS)."""
    r = lax.broadcasted_iota(jnp.int32, (cout, cout), 0)
    c = lax.broadcasted_iota(jnp.int32, (cout, cout), 1)
    eye = (r == c).astype(y.dtype)
    return lax.dot_general(eye, y, (((1,), (1,)), ((), ())),
                           preferred_element_type=jnp.float32)


def _make_double_conv_kernel(H, W):
    hw = H * W

    def kernel(x2_ref, x1_ref, w1_ref, b1_ref, g1_ref, bt1_ref,
               w2_ref, b2_ref, g2_ref, bt2_ref, o_ref):
        cout = o_ref.shape[0]

        # ---- conv1: fused concat([x2, x1_up]) + conv3x3 + GN(1) + ReLU ----
        taps = (_im2col_3x3(x2_ref[...], H, W) +
                _im2col_3x3(x1_ref[...], H, W))
        patch1 = jnp.concatenate(taps, axis=1)            # (H*W, 9*(c2+cmid))
        h = _conv_gn_relu(patch1, w1_ref[...], b1_ref[...], g1_ref[...],
                          bt1_ref[...], hw, cout)          # (H*W, cout) f32

        # ---- conv2 on the VMEM-resident h (never written to HBM) ----
        x_mid = h.reshape(H, W, cout).astype(jnp.bfloat16)
        patch2 = jnp.concatenate(_im2col_3x3(x_mid, H, W), axis=1)
        y = _conv_gn_relu(patch2, w2_ref[...], b2_ref[...], g2_ref[...],
                          bt2_ref[...], hw, cout)           # (H*W, cout) f32

        # lane-dense store: (cout, H*W); H*W is a multiple of 128.
        o_ref[...] = _transpose_via_mxu(y, cout).astype(o_ref.dtype)

    return kernel


# ------------------------------ pallas_call wrappers ------------------------


def _upconv(x1t, w, b, out_dtype):
    # TODO(synk): for production sizes tile the pixel (lane) axis instead of a
    # single whole-batch block.
    C4, Cin = w.shape
    T = x1t.shape[1]
    return pl.pallas_call(
        _upconv_kernel,
        out_shape=jax.ShapeDtypeStruct((C4, T), out_dtype),
        grid=(1,),
        in_specs=[
            pl.BlockSpec((Cin, T), lambda i: (0, 0)),
            pl.BlockSpec((C4, Cin), lambda i: (0, 0)),
            pl.BlockSpec((C4, 1), lambda i: (0, 0)),
        ],
        out_specs=pl.BlockSpec((C4, T), lambda i: (0, 0)),
        compiler_params=_compiler_params(("arbitrary",)),
    )(x1t, w, b)


def _double_conv(x2_nhwc, x1_nhwc, w1, b1, g1, bt1, w2, b2, g2, bt2, out_dtype):
    N, H, W, c2 = x2_nhwc.shape
    cmid = x1_nhwc.shape[-1]
    k1, O = w1.shape
    kernel = _make_double_conv_kernel(H, W)
    # TODO(synk): for production feature-map sizes this whole-sample block must
    # be spatially tiled with a two-pass (partial sum/sumsq) GroupNorm so it
    # fits v7x's 64 MiB VMEM and exposes >=2 parallel blocks even when N == 1.
    return pl.pallas_call(
        kernel,
        out_shape=jax.ShapeDtypeStruct((N, O, H * W), out_dtype),
        grid=(N,),
        in_specs=[
            pl.BlockSpec((None, H, W, c2), lambda n: (n, 0, 0, 0)),
            pl.BlockSpec((None, H, W, cmid), lambda n: (n, 0, 0, 0)),
            pl.BlockSpec((k1, O), lambda n: (0, 0)),
            pl.BlockSpec((1, O), lambda n: (0, 0)),
            pl.BlockSpec((1, O), lambda n: (0, 0)),
            pl.BlockSpec((1, O), lambda n: (0, 0)),
            pl.BlockSpec((9 * O, O), lambda n: (0, 0)),
            pl.BlockSpec((1, O), lambda n: (0, 0)),
            pl.BlockSpec((1, O), lambda n: (0, 0)),
            pl.BlockSpec((1, O), lambda n: (0, 0)),
        ],
        out_specs=pl.BlockSpec((None, O, H * W), lambda n: (n, 0, 0)),
        compiler_params=_compiler_params(("parallel",)),
    )(x2_nhwc, x1_nhwc, w1, b1, g1, bt1, w2, b2, g2, bt2)


# ------------------------------- params ------------------------------------


def init_params(key, in_channels, skip_channels, out_channels):
    cmid = in_channels // 2
    ccat = cmid + skip_channels
    ks = jax.random.split(key, 10)

    def rnd(k, shape, scale=0.1):
        return scale * jax.random.normal(k, shape, jnp.float32)

    return dict(
        up_w=rnd(ks[0], (in_channels, cmid, 2, 2)),   # ConvTranspose2d (I,O,kH,kW)
        up_b=rnd(ks[1], (cmid,)),
        c1_w=rnd(ks[2], (out_channels, ccat, 3, 3)),  # Conv2d (O,I,kH,kW)
        c1_b=rnd(ks[3], (out_channels,)),
        gn1_g=1.0 + rnd(ks[4], (out_channels,)),
        gn1_b=rnd(ks[5], (out_channels,)),
        c2_w=rnd(ks[6], (out_channels, out_channels, 3, 3)),
        c2_b=rnd(ks[7], (out_channels,)),
        gn2_g=1.0 + rnd(ks[8], (out_channels,)),
        gn2_b=rnd(ks[9], (out_channels,)),
    )


# ------------------------------- forward -----------------------------------


def up_forward(params, x1_nchw, x2_nchw):
    N, Cin, H1, W1 = x1_nchw.shape
    cmid = params["up_w"].shape[1]
    c2 = x2_nchw.shape[1]
    H2, W2 = x2_nchw.shape[2], x2_nchw.shape[3]
    O = params["c1_w"].shape[0]

    # ---- ConvTranspose2d(k=2, s=2): one batched matmul, lane-dense output ----
    x1t = jnp.transpose(x1_nchw, (1, 0, 2, 3)).reshape(Cin, N * H1 * W1)
    x1t = x1t.astype(jnp.bfloat16)
    w_ct = jnp.transpose(params["up_w"], (2, 3, 1, 0)).reshape(4 * cmid, Cin)
    b_ct = jnp.tile(params["up_b"], 4).reshape(4 * cmid, 1)
    y = _upconv(x1t, w_ct.astype(jnp.bfloat16), b_ct, jnp.bfloat16)

    # ---- 2x2 sub-pixel interleave (tiny bf16 tensor, XLA glue only) ----
    # TODO(synk): fold the upconv matmul + interleave into the conv kernel
    # below (the strided output scatter is not expressible via BlockSpecs).
    y = y.reshape(2, 2, cmid, N, H1, W1).transpose(3, 4, 0, 5, 1, 2)
    x1_up = y.reshape(N, 2 * H1, 2 * W1, cmid)
    dY, dX = H2 - 2 * H1, W2 - 2 * W1
    if dY or dX:   # F.pad only when x2 is not exactly 2x x1 (rare; else no-op)
        x1_up = jnp.pad(
            x1_up,
            ((0, 0), (dY // 2, dY - dY // 2), (dX // 2, dX - dX // 2), (0, 0)))

    x2_nhwc = jnp.transpose(x2_nchw, (0, 2, 3, 1)).astype(jnp.bfloat16)

    # ---- weights in single-matmul im2col layout: K rows = (branch, tap, c) ----
    w_hwio1 = jnp.transpose(params["c1_w"], (2, 3, 1, 0))        # (3,3,ccat,O)
    w1 = jnp.concatenate(
        [w_hwio1[:, :, :c2, :].reshape(9 * c2, O),
         w_hwio1[:, :, c2:, :].reshape(9 * cmid, O)], axis=0)
    w2 = jnp.transpose(params["c2_w"], (2, 3, 1, 0)).reshape(9 * O, O)

    # ---- DoubleConv (concat + conv3x3 + GN(1) + ReLU, twice) in one kernel ----
    out = _double_conv(
        x2_nhwc, x1_up,
        w1.astype(jnp.bfloat16), params["c1_b"].reshape(1, O),
        params["gn1_g"].reshape(1, O), params["gn1_b"].reshape(1, O),
        w2.astype(jnp.bfloat16), params["c2_b"].reshape(1, O),
        params["gn2_g"].reshape(1, O), params["gn2_b"].reshape(1, O),
        jnp.float32)                                             # (N, O, H2*W2)

    return out.reshape(N, O, H2, W2)              # already NCHW, no transpose


# --------------------------- pure-JAX f32 reference -------------------------


def up_forward_ref(params, x1_nchw, x2_nchw):
    x1 = jnp.transpose(x1_nchw, (0, 2, 3, 1)).astype(jnp.float32)
    x2 = jnp.transpose(x2_nchw, (0, 2, 3, 1)).astype(jnp.float32)
    N, H1, W1, Cin = x1.shape
    cmid = params["up_w"].shape[1]

    t = jnp.einsum("nijc,cokl->nijklo", x1, params["up_w"])   # (N,H1,W1,2,2,cmid)
    t = t.transpose(0, 1, 3, 2, 4, 5).reshape(N, 2 * H1, 2 * W1, cmid)
    x1_up = t + params["up_b"]

    H2, W2 = x2.shape[1], x2.shape[2]
    dY, dX = H2 - x1_up.shape[1], W2 - x1_up.shape[2]
    x1_up = jnp.pad(
        x1_up, ((0, 0), (dY // 2, dY - dY // 2), (dX // 2, dX - dX // 2), (0, 0))
    )
    x = jnp.concatenate([x2, x1_up], axis=-1)

    def conv3x3(h, w_oihw, b):
        w_hwio = jnp.transpose(w_oihw, (2, 3, 1, 0))
        out = jax.lax.conv_general_dilated(
            h, w_hwio, (1, 1), "SAME", dimension_numbers=("NHWC", "HWIO", "NHWC")
        )
        return out + b

    def gn1(h, g, bt, eps=1e-5):
        mu = jnp.mean(h, axis=(1, 2, 3), keepdims=True)
        var = jnp.mean((h - mu) ** 2, axis=(1, 2, 3), keepdims=True)
        return (h - mu) / jnp.sqrt(var + eps) * g + bt

    h = jnp.maximum(gn1(conv3x3(x, params["c1_w"], params["c1_b"]),
                        params["gn1_g"], params["gn1_b"]), 0.0)
    h = jnp.maximum(gn1(conv3x3(h, params["c2_w"], params["c2_b"]),
                        params["gn2_g"], params["gn2_b"]), 0.0)
    return jnp.transpose(h, (0, 3, 1, 2))


# ---------------------------------- main ------------------------------------


if __name__ == "__main__":
    key = jax.random.PRNGKey(0)
    in_channels, skip_channels, out_channels = 8, 4, 8
    kp, k1, k2 = jax.random.split(key, 3)
    params = init_params(kp, in_channels, skip_channels, out_channels)

    # x1: low-res feature map (NCHW), x2: skip connection at 2x spatial size.
    x1 = jax.random.normal(k1, (2, in_channels, 8, 8), jnp.float32)
    x2 = jax.random.normal(k2, (2, skip_channels, 16, 16), jnp.float32)

    fwd = jax.jit(functools.partial(up_forward, params))
    out = jax.block_until_ready(fwd(x1, x2))
    assert out.shape == (2, out_channels, 16, 16), out.shape

    # Tolerance is loosened vs. the pure-f32 path because the MXU matmul
    # operands (activations + weights) and the intermediate upsample map are
    # bf16; accumulation and the GroupNorm epilogue remain f32.
    ref = up_forward_ref(params, x1, x2)
    err = float(jnp.max(jnp.abs(out - ref)))
    assert err < 8e-2, f"max abs err {err}"

    print("KERNEL_OK")
</pallas_src>

<mosaic_0001>
module attributes {stable_mosaic.version = 11 : i64} {
  func.func @_upconv_kernel(%arg0: i32, %arg1: memref<8x128xbf16, #tpu.memory_space<vmem>>, %arg2: memref<16x8xbf16, #tpu.memory_space<vmem>>, %arg3: memref<16x1xf32, #tpu.memory_space<vmem>>, %arg4: memref<16x128xbf16, #tpu.memory_space<vmem>>) attributes {dimension_semantics = [#tpu.dimension_semantics<arbitrary>], iteration_bounds = array<i64: 1>, scalar_prefetch = 0 : i64, scratch_operands = 0 : i64, tpu.core_type = #tpu.core_type<tc>, window_params = [{pipeline_mode = #tpu.pipeline_mode<synchronous>, transform_indices = @transform_0, window_bounds = array<i64: 8, 128>}, {pipeline_mode = #tpu.pipeline_mode<synchronous>, transform_indices = @transform_1, window_bounds = array<i64: 16, 8>}, {pipeline_mode = #tpu.pipeline_mode<synchronous>, transform_indices = @transform_2, window_bounds = array<i64: 16, 1>}, {pipeline_mode = #tpu.pipeline_mode<synchronous>, transform_indices = @transform_3, window_bounds = array<i64: 16, 128>}]} {
    %c0 = arith.constant 0 : index
    %c0_0 = arith.constant 0 : index
    %0 = vector.load %arg2[%c0, %c0_0] : memref<16x8xbf16, #tpu.memory_space<vmem>>, vector<16x8xbf16>
    %c0_1 = arith.constant 0 : index
    %c0_2 = arith.constant 0 : index
    %1 = vector.load %arg1[%c0_1, %c0_2] : memref<8x128xbf16, #tpu.memory_space<vmem>>, vector<8x128xbf16>
    %cst = arith.constant dense<0.000000e+00> : vector<16x128xf32>
    %2 = tpu.matmul %0, %1, %cst {dimension_numbers = #tpu.dot_dimension_numbers<[1], [0], [0], [1], [0, 0, 1, 1], [], []>} : vector<16x8xbf16>, vector<8x128xbf16>, vector<16x128xf32> -> vector<16x128xf32>
    %c0_3 = arith.constant 0 : index
    %c0_4 = arith.constant 0 : index
    %3 = vector.load %arg3[%c0_3, %c0_4] : memref<16x1xf32, #tpu.memory_space<vmem>>, vector<16x1xf32>
    %4 = vector.broadcast %3 : vector<16x1xf32> to vector<16x128xf32>
    %5 = arith.addf %2, %4 : vector<16x128xf32>
    %6 = arith.truncf %5 : vector<16x128xf32> to vector<16x128xbf16>
    %c0_5 = arith.constant 0 : index
    %c0_6 = arith.constant 0 : index
    %7 = vector.load %arg4[%c0_5, %c0_6] : memref<16x128xbf16, #tpu.memory_space<vmem>>, vector<16x128xbf16>
    tpu.vector_store %arg4[%c0_5, %c0_6], %6 {strides = array<i32>} : memref<16x128xbf16, #tpu.memory_space<vmem>>, vector<16x128xbf16>,
    return
  }
  func.func @transform_0(%arg0: i32) -> (i32, i32) {
    %c0_i32 = arith.constant 0 : i32
    %c0_i32_0 = arith.constant 0 : i32
    %c0_i32_1 = arith.constant 0 : i32
    return %c0_i32, %c0_i32_0 : i32, i32
  }
  func.func @transform_1(%arg0: i32) -> (i32, i32) {
    %c0_i32 = arith.constant 0 : i32
    %c0_i32_0 = arith.constant 0 : i32
    %c0_i32_1 = arith.constant 0 : i32
    return %c0_i32, %c0_i32_0 : i32, i32
  }
  func.func @transform_2(%arg0: i32) -> (i32, i32) {
    %c0_i32 = arith.constant 0 : i32
    %c0_i32_0 = arith.constant 0 : i32
    %c0_i32_1 = arith.constant 0 : i32
    return %c0_i32, %c0_i32_0 : i32, i32
  }
  func.func @transform_3(%arg0: i32) -> (i32, i32) {
    %c0_i32 = arith.constant 0 : i32
    %c0_i32_0 = arith.constant 0 : i32
    %c0_i32_1 = arith.constant 0 : i32
    return %c0_i32, %c0_i32_0 : i32, i32
  }
}

module attributes {stable_mosaic.version = 11 : i64} {
  func.func @kernel(%arg0: i32, %arg1: memref<1x16x16x4xbf16, #tpu.memory_space<vmem>>, %arg2: memref<1x16x16x4xbf16, #tpu.memory_space<vmem>>, %arg3: memref<72x8xbf16, #tpu.memory_space<vmem>>, %arg4: memref<1x8xf32, #tpu.memory_space<vmem>>, %arg5: memref<1x8xf32, #tpu.memory_space<vmem>>, %arg6: memref<1x8xf32, #tpu.memory_space<vmem>>, %arg7: memref<72x8xbf16, #tpu.memory_space<vmem>>, %arg8: memref<1x8xf32, #tpu.memory_space<vmem>>, %arg9: memref<1x8xf32, #tpu.memory_space<vmem>>, %arg10: memref<1x8xf32, #tpu.memory_space<vmem>>, %arg11: memref<1x8x256xf32, #tpu.memory_space<vmem>>) attributes {dimension_semantics = [#tpu.dimension_semantics<parallel>], iteration_bounds = array<i64: 2>, scalar_prefetch = 0 : i64, scratch_operands = 0 : i64, tpu.core_type = #tpu.core_type<tc>, window_params = [{transform_indices = @transform_0, window_bounds = array<i64: 1, 16, 16, 4>}, {transform_indices = @transform_1, window_bounds = array<i64: 1, 16, 16, 4>}, {pipeline_mode = #tpu.pipeline_mode<synchronous>, transform_indices = @transform_2, window_bounds = array<i64: 72, 8>}, {pipeline_mode = #tpu.pipeline_mode<synchronous>, transform_indices = @transform_3, window_bounds = array<i64: 1, 8>}, {pipeline_mode = #tpu.pipeline_mode<synchronous>, transform_indices = @transform_4, window_bounds = array<i64: 1, 8>}, {pipeline_mode = #tpu.pipeline_mode<synchronous>, transform_indices = @transform_5, window_bounds = array<i64: 1, 8>}, {pipeline_mode = #tpu.pipeline_mode<synchronous>, transform_indices = @transform_6, window_bounds = array<i64: 72, 8>}, {pipeline_mode = #tpu.pipeline_mode<synchronous>, transform_indices = @transform_7, window_bounds = array<i64: 1, 8>}, {pipeline_mode = #tpu.pipeline_mode<synchronous>, transform_indices = @transform_8, window_bounds = array<i64: 1, 8>}, {pipeline_mode = #tpu.pipeline_mode<synchronous>, transform_indices = @transform_9, window_bounds = array<i64: 1, 8>}, {transform_indices = @transform_10, window_bounds = array<i64: 1, 8, 256>}]} {
    %c0 = arith.constant 0 : index
    %c0_0 = arith.constant 0 : index
    %c0_1 = arith.constant 0 : index
    %c0_2 = arith.constant 0 : index
    %0 = vector.load %arg1[%c0, %c0_0, %c0_1, %c0_2] : memref<1x16x16x4xbf16, #tpu.memory_space<vmem>>, vector<1x16x16x4xbf16>
    %1 = vector.shape_cast %0 : vector<1x16x16x4xbf16> to vector<16x16x4xbf16>
    %cst = arith.constant 0.000000e+00 : bf16
    %2 = vector.broadcast %cst : bf16 to vector<2x16x4xbf16>
    %3 = tpu.concatenate %2, %1, %2 in 0 : vector<2x16x4xbf16>, vector<16x16x4xbf16>, vector<2x16x4xbf16> -> vector<20x16x4xbf16>
    %4 = vector.shape_cast %3 : vector<20x16x4xbf16> to vector<320x4xbf16>
    %5 = tpu.iota {dimensions = array<i32: 0>} : vector<256x4xi32>
    %c16_i32 = arith.constant 16 : i32
    %c0_i32 = arith.constant 0 : i32
    %6 = arith.cmpi eq, %c16_i32, %c0_i32 : i32
    %c1_i32 = arith.constant 1 : i32
    %7 = arith.select %6, %c1_i32, %c16_i32 : i32
    %8 = vector.broadcast %7 : i32 to vector<256x4xi32>
    %9 = arith.remsi %5, %8 : vector<256x4xi32>
    %c0_i32_3 = arith.constant 0 : i32
    %10 = vector.broadcast %c0_i32_3 : i32 to vector<256x4xi32>
    %11 = arith.cmpi ne, %9, %10 : vector<256x4xi32>
    %c0_i32_4 = arith.constant 0 : i32
    %12 = vector.broadcast %c0_i32_4 : i32 to vector<256x4xi32>
    %13 = arith.cmpi slt, %9, %12 : vector<256x4xi32>
    %c0_i32_5 = arith.constant 0 : i32
    %14 = arith.cmpi slt, %7, %c0_i32_5 : i32
    %15 = vector.broadcast %14 : i1 to vector<256x4xi1>
    %16 = vector.broadcast %15 : vector<256x4xi1> to vector<256x4xi1>
    %17 = arith.xori %13, %16 : vector<256x4xi1>
    %18 = arith.andi %17, %11 : vector<256x4xi1>
    %19 = vector.broadcast %7 : i32 to vector<256x4xi32>
    %20 = arith.addi %9, %19 : vector<256x4xi32>
    %21 = arith.select %18, %20, %9 : vector<256x4xi1>, vector<256x4xi32>
    %22 = vector.extract_strided_slice %4 {offsets = [15, 0], sizes = [256, 4], strides = [1, 1]} : vector<320x4xbf16> to vector<256x4xbf16>
    %c1_i32_6 = arith.constant 1 : i32
    %23 = vector.broadcast %c1_i32_6 : i32 to vector<256x4xi32>
    %24 = arith.cmpi sge, %21, %23 : vector<256x4xi32>
    %cst_7 = arith.constant 0.000000e+00 : bf16
    %25 = vector.broadcast %cst_7 : bf16 to vector<256x4xbf16>
    %26 = arith.select %24, %22, %25 : vector<256x4xi1>, vector<256x4xbf16>
    %27 = vector.extract_strided_slice %4 {offsets = [16, 0], sizes = [256, 4], strides = [1, 1]} : vector<320x4xbf16> to vector<256x4xbf16>
    %28 = vector.extract_strided_slice %4 {offsets = [17, 0], sizes = [256, 4], strides = [1, 1]} : vector<320x4xbf16> to vector<256x4xbf16>
    %c14_i32 = arith.constant 14 : i32
    %29 = vector.broadcast %c14_i32 : i32 to vector<256x4xi32>
    %30 = arith.cmpi sle, %21, %29 : vector<256x4xi32>
    %cst_8 = arith.constant 0.000000e+00 : bf16
    %31 = vector.broadcast %cst_8 : bf16 to vector<256x4xbf16>
    %32 = arith.select %30, %28, %31 : vector<256x4xi1>, vector<256x4xbf16>
    %33 = vector.extract_strided_slice %4 {offsets = [31, 0], sizes = [256, 4], strides = [1, 1]} : vector<320x4xbf16> to vector<256x4xbf16>
    %c1_i32_9 = arith.constant 1 : i32
    %34 = vector.broadcast %c1_i32_9 : i32 to vector<256x4xi32>
    %35 = arith.cmpi sge, %21, %34 : vector<256x4xi32>
    %cst_10 = arith.constant 0.000000e+00 : bf16
    %36 = vector.broadcast %cst_10 : bf16 to vector<256x4xbf16>
    %37 = arith.select %35, %33, %36 : vector<256x4xi1>, vector<256x4xbf16>
    %38 = vector.extract_strided_slice %4 {offsets = [32, 0], sizes = [256, 4], strides = [1, 1]} : vector<320x4xbf16> to vector<256x4xbf16>
    %39 = vector.extract_strided_slice %4 {offsets = [33, 0], sizes = [256, 4], strides = [1, 1]} : vector<320x4xbf16> to vector<256x4xbf16>
    %c14_i32_11 = arith.constant 14 : i32
    %40 = vector.broadcast %c14_i32_11 : i32 to vector<256x4xi32>
    %41 = arith.cmpi sle, %21, %40 : vector<256x4xi32>
    %cst_12 = arith.constant 0.000000e+00 : bf16
    %42 = vector.broadcast %cst_12 : bf16 to vector<256x4xbf16>
    %43 = arith.select %41, %39, %42 : vector<256x4xi1>, vector<256x4xbf16>
    %44 = vector.extract_strided_slice %4 {offsets = [47, 0], sizes = [256, 4], strides = [1, 1]} : vector<320x4xbf16> to vector<256x4xbf16>
    %c1_i32_13 = arith.constant 1 : i32
    %45 = vector.broadcast %c1_i32_13 : i32 to vector<256x4xi32>
    %46 = arith.cmpi sge, %21, %45 : vector<256x4xi32>
    %cst_14 = arith.constant 0.000000e+00 : bf16
    %47 = vector.broadcast %cst_14 : bf16 to vector<256x4xbf16>
    %48 = arith.select %46, %44, %47 : vector<256x4xi1>, vector<256x4xbf16>
    %49 = vector.extract_strided_slice %4 {offsets = [48, 0], sizes = [256, 4], strides = [1, 1]} : vector<320x4xbf16> to vector<256x4xbf16>
    %50 = vector.extract_strided_slice %4 {offsets = [49, 0], sizes = [256, 4], strides = [1, 1]} : vector<320x4xbf16> to vector<256x4xbf16>
    %c14_i32_15 = arith.constant 14 : i32
    %51 = vector.broadcast %c14_i32_15 : i32 to vector<256x4xi32>
    %52 = arith.cmpi sle, %21, %51 : vector<256x4xi32>
    %cst_16 = arith.constant 0.000000e+00 : bf16
    %53 = vector.broadcast %cst_16 : bf16 to vector<256x4xbf16>
    %54 = arith.select %52, %50, %53 : vector<256x4xi1>, vector<256x4xbf16>
    %c0_17 = arith.constant 0 : index
    %c0_18 = arith.constant 0 : index
    %c0_19 = arith.constant 0 : index
    %c0_20 = arith.constant 0 : index
    %55 = vector.load %arg2[%c0_17, %c0_18, %c0_19, %c0_20] : memref<1x16x16x4xbf16, #tpu.memory_space<vmem>>, vector<1x16x16x4xbf16>
    %56 = vector.shape_cast %55 : vector<1x16x16x4xbf16> to vector<16x16x4xbf16>
    %cst_21 = arith.constant 0.000000e+00 : bf16
    %57 = vector.broadcast %cst_21 : bf16 to vector<2x16x4xbf16>
    %58 = tpu.concatenate %57, %56, %57 in 0 : vector<2x16x4xbf16>, vector<16x16x4xbf16>, vector<2x16x4xbf16> -> vector<20x16x4xbf16>
    %59 = vector.shape_cast %58 : vector<20x16x4xbf16> to vector<320x4xbf16>
    %60 = tpu.iota {dimensions = array<i32: 0>} : vector<256x4xi32>
    %c16_i32_22 = arith.constant 16 : i32
    %c0_i32_23 = arith.constant 0 : i32
    %61 = arith.cmpi eq, %c16_i32_22, %c0_i32_23 : i32
    %c1_i32_24 = arith.constant 1 : i32
    %62 = arith.select %61, %c1_i32_24, %c16_i32_22 : i32
    %63 = vector.broadcast %62 : i32 to vector<256x4xi32>
    %64 = arith.remsi %60, %63 : vector<256x4xi32>
    %c0_i32_25 = arith.constant 0 : i32
    %65 = vector.broadcast %c0_i32_25 : i32 to vector<256x4xi32>
    %66 = arith.cmpi ne, %64, %65 : vector<256x4xi32>
    %c0_i32_26 = arith.constant 0 : i32
    %67 = vector.broadcast %c0_i32_26 : i32 to vector<256x4xi32>
    %68 = arith.cmpi slt, %64, %67 : vector<256x4xi32>
    %c0_i32_27 = arith.constant 0 : i32
    %69 = arith.cmpi slt, %62, %c0_i32_27 : i32
    %70 = vector.broadcast %69 : i1 to vector<256x4xi1>
    %71 = vector.broadcast %70 : vector<256x4xi1> to vector<256x4xi1>
    %72 = arith.xori %68, %71 : vector<256x4xi1>
    %73 = arith.andi %72, %66 : vector<256x4xi1>
    %74 = vector.broadcast %62 : i32 to vector<256x4xi32>
    %75 = arith.addi %64, %74 : vector<256x4xi32>
    %76 = arith.select %73, %75, %64 : vector<256x4xi1>, vector<256x4xi32>
    %77 = vector.extract_strided_slice %59 {offsets = [15, 0], sizes = [256, 4], strides = [1, 1]} : vector<320x4xbf16> to vector<256x4xbf16>
    %c1_i32_28 = arith.constant 1 : i32
    %78 = vector.broadcast %c1_i32_28 : i32 to vector<256x4xi32>
    %79 = arith.cmpi sge, %76, %78 : vector<256x4xi32>
    %cst_29 = arith.constant 0.000000e+00 : bf16
    %80 = vector.broadcast %cst_29 : bf16 to vector<256x4xbf16>
    %81 = arith.select %79, %77, %80 : vector<256x4xi1>, vector<256x4xbf16>
    %82 = vector.extract_strided_slice %59 {offsets = [16, 0], sizes = [256, 4], strides = [1, 1]} : vector<320x4xbf16> to vector<256x4xbf16>
    %83 = vector.extract_strided_slice %59 {offsets = [17, 0], sizes = [256, 4], strides = [1, 1]} : vector<320x4xbf16> to vector<256x4xbf16>
    %c14_i32_30 = arith.constant 14 : i32
    %84 = vector.broadcast %c14_i32_30 : i32 to vector<256x4xi32>
    %85 = arith.cmpi sle, %76, %84 : vector<256x4xi32>
    %cst_31 = arith.constant 0.000000e+00 : bf16
    %86 = vector.broadcast %cst_31 : bf16 to vector<256x4xbf16>
    %87 = arith.select %85, %83, %86 : vector<256x4xi1>, vector<256x4xbf16>
    %88 = vector.extract_strided_slice %59 {offsets = [31, 0], sizes = [256, 4], strides = [1, 1]} : vector<320x4xbf16> to vector<256x4xbf16>
    %c1_i32_32 = arith.constant 1 : i32
    %89 = vector.broadcast %c1_i32_32 : i32 to vector<256x4xi32>
    %90 = arith.cmpi sge, %76, %89 : vector<256x4xi32>
    %cst_33 = arith.constant 0.000000e+00 : bf16
    %91 = vector.broadcast %cst_33 : bf16 to vector<256x4xbf16>
    %92 = arith.select %90, %88, %91 : vector<256x4xi1>, vector<256x4xbf16>
    %93 = vector.extract_strided_slice %59 {offsets = [32, 0], sizes = [256, 4], strides = [1, 1]} : vector<320x4xbf16> to vector<256x4xbf16>
    %94 = vector.extract_strided_slice %59 {offsets = [33, 0], sizes = [256, 4], strides = [1, 1]} : vector<320x4xbf16> to vector<256x4xbf16>
    %c14_i32_34 = arith.constant 14 : i32
    %95 = vector.broadcast %c14_i32_34 : i32 to vector<256x4xi32>
    %96 = arith.cmpi sle, %76, %95 : vector<256x4xi32>
    %cst_35 = arith.constant 0.000000e+00 : bf16
    %97 = vector.broadcast %cst_35 : bf16 to vector<256x4xbf16>
    %98 = arith.select %96, %94, %97 : vector<256x4xi1>, vector<256x4xbf16>
    %99 = vector.extract_strided_slice %59 {offsets = [47, 0], sizes = [256, 4], strides = [1, 1]} : vector<320x4xbf16> to vector<256x4xbf16>
    %c1_i32_36 = arith.constant 1 : i32
    %100 = vector.broadcast %c1_i32_36 : i32 to vector<256x4xi32>
    %101 = arith.cmpi sge, %76, %100 : vector<256x4xi32>
    %cst_37 = arith.constant 0.000000e+00 : bf16
    %102 = vector.broadcast %cst_37 : bf16 to vector<256x4xbf16>
    %103 = arith.select %101, %99, %102 : vector<256x4xi1>, vector<256x4xbf16>
    %104 = vector.extract_strided_slice %59 {offsets = [48, 0], sizes = [256, 4], strides = [1, 1]} : vector<320x4xbf16> to vector<256x4xbf16>
    %105 = vector.extract_strided_slice %59 {offsets = [49, 0], sizes = [256, 4], strides = [1, 1]} : vector<320x4xbf16> to vector<256x4xbf16>
    %c14_i32_38 = arith.constant 14 : i32
    %106 = vector.broadcast %c14_i32_38 : i32 to vector<256x4xi32>
    %107 = arith.cmpi sle, %76, %106 : vector<256x4xi32>
    %cst_39 = arith.constant 0.000000e+00 : bf16
    %108 = vector.broadcast %cst_39 : bf16 to vector<256x4xbf16>
    %109 = arith.select %107, %105, %108 : vector<256x4xi1>, vector<256x4xbf16>
    %110 = tpu.concatenate %26, %27, %32, %37, %38, %43, %48, %49, %54, %81, %82, %87, %92, %93, %98, %103 in 1 : vector<256x4xbf16>, vector<256x4xbf16>, vector<256x4xbf16>, vector<256x4xbf16>, vector<256x4xbf16>, vector<256x4xbf16>, vector<256x4xbf16>, vector<256x4xbf16>, vector<256x4xbf16>, vector<256x4xbf16>, vector<256x4xbf16>, vector<256x4xbf16>, vector<256x4xbf16>, vector<256x4xbf16>, vector<256x4xbf16>, vector<256x4xbf16> -> vector<256x64xbf16>
    %111 = tpu.concatenate %104, %109 in 1 : vector<256x4xbf16>, vector<256x4xbf16> -> vector<256x8xbf16>
    %112 = tpu.concatenate %110, %111 in 1 : vector<256x64xbf16>, vector<256x8xbf16> -> vector<256x72xbf16>
    %c0_40 = arith.constant 0 : index
    %c0_41 = arith.constant 0 : index
    %113 = vector.load %arg3[%c0_40, %c0_41] : memref<72x8xbf16, #tpu.memory_space<vmem>>, vector<72x8xbf16>
    %c0_42 = arith.constant 0 : index
    %c0_43 = arith.constant 0 : index
    %114 = vector.load %arg4[%c0_42, %c0_43] : memref<1x8xf32, #tpu.memory_space<vmem>>, vector<1x8xf32>
    %c0_44 = arith.constant 0 : index
    %c0_45 = arith.constant 0 : index
    %115 = vector.load %arg5[%c0_44, %c0_45] : memref<1x8xf32, #tpu.memory_space<vmem>>, vector<1x8xf32>
    %c0_46 = arith.constant 0 : index
    %c0_47 = arith.constant 0 : index
    %116 = vector.load %arg6[%c0_46, %c0_47] : memref<1x8xf32, #tpu.memory_space<vmem>>, vector<1x8xf32>
    %cst_48 = arith.constant dense<0.000000e+00> : vector<256x8xf32>
    %117 = tpu.matmul %112, %113, %cst_48 {dimension_numbers = #tpu.dot_dimension_numbers<[1], [0], [0], [1], [0, 0, 1, 1], [], []>} : vector<256x72xbf16>, vector<72x8xbf16>, vector<256x8xf32> -> vector<256x8xf32>
    %118 = vector.broadcast %114 : vector<1x8xf32> to vector<256x8xf32>
    %119 = arith.addf %117, %118 : vector<256x8xf32>
    %120 = vector.shape_cast %119 : vector<256x8xf32> to vector<1x256x8xf32>
    %cst_49 = arith.constant dense<0.000000e+00> : vector<1xf32>
    %121 = vector.multi_reduction <add>, %120, %cst_49 [1, 2] : vector<1x256x8xf32> to vector<1xf32>
    %122 = vector.shape_cast %121 : vector<1xf32> to vector<1x1x1xf32>
    %123 = vector.extract %122[0, 0, 0] : f32 from vector<1x1x1xf32>
    %cst_50 = arith.constant 4.8828125E-4 : f32
    %124 = arith.mulf %123, %cst_50 : f32
    %125 = vector.broadcast %124 : f32 to vector<256x8xf32>
    %126 = arith.subf %119, %125 : vector<256x8xf32>
    %127 = arith.mulf %126, %126 : vector<256x8xf32>
    %128 = vector.shape_cast %127 : vector<256x8xf32> to vector<1x256x8xf32>
    %cst_51 = arith.constant dense<0.000000e+00> : vector<1xf32>
    %129 = vector.multi_reduction <add>, %128, %cst_51 [1, 2] : vector<1x256x8xf32> to vector<1xf32>
    %130 = vector.shape_cast %129 : vector<1xf32> to vector<1x1x1xf32>
    %131 = vector.extract %130[0, 0, 0] : f32 from vector<1x1x1xf32>
    %cst_52 = arith.constant 4.8828125E-4 : f32
    %132 = arith.mulf %131, %cst_52 : f32
    %cst_53 = arith.constant 9.99999974E-6 : f32
    %133 = arith.addf %132, %cst_53 : f32
    %134 = math.rsqrt %133 : f32
    %135 = vector.broadcast %134 : f32 to vector<256x8xf32>
    %136 = arith.mulf %126, %135 : vector<256x8xf32>
    %137 = vector.broadcast %115 : vector<1x8xf32> to vector<256x8xf32>
    %138 = arith.mulf %136, %137 : vector<256x8xf32>
    %139 = vector.broadcast %116 : vector<1x8xf32> to vector<256x8xf32>
    %140 = arith.addf %138, %139 : vector<256x8xf32>
    %cst_54 = arith.constant 0.000000e+00 : f32
    %141 = vector.broadcast %cst_54 : f32 to vector<256x8xf32>
    %142 = arith.maximumf %140, %141 : vector<256x8xf32>
    %143 = vector.shape_cast %142 : vector<256x8xf32> to vector<16x16x8xf32>
    %144 = arith.truncf %143 : vector<16x16x8xf32> to vector<16x16x8xbf16>
    %cst_55 = arith.constant 0.000000e+00 : bf16
    %145 = vector.broadcast %cst_55 : bf16 to vector<2x16x8xbf16>
    %146 = tpu.concatenate %145, %144, %145 in 0 : vector<2x16x8xbf16>, vector<16x16x8xbf16>, vector<2x16x8xbf16> -> vector<20x16x8xbf16>
    %147 = vector.shape_cast %146 : vector<20x16x8xbf16> to vector<320x8xbf16>
    %148 = tpu.iota {dimensions = array<i32: 0>} : vector<256x8xi32>
    %c16_i32_56 = arith.constant 16 : i32
    %c0_i32_57 = arith.constant 0 : i32
    %149 = arith.cmpi eq, %c16_i32_56, %c0_i32_57 : i32
    %c1_i32_58 = arith.constant 1 : i32
    %150 = arith.select %149, %c1_i32_58, %c16_i32_56 : i32
    %151 = vector.broadcast %150 : i32 to vector<256x8xi32>
    %152 = arith.remsi %148, %151 : vector<256x8xi32>
    %c0_i32_59 = arith.constant 0 : i32
    %153 = vector.broadcast %c0_i32_59 : i32 to vector<256x8xi32>
    %154 = arith.cmpi ne, %152, %153 : vector<256x8xi32>
    %c0_i32_60 = arith.constant 0 : i32
    %155 = vector.broadcast %c0_i32_60 : i32 to vector<256x8xi32>
    %156 = arith.cmpi slt, %152, %155 : vector<256x8xi32>
    %c0_i32_61 = arith.constant 0 : i32
    %157 = arith.cmpi slt, %150, %c0_i32_61 : i32
    %158 = vector.broadcast %157 : i1 to vector<256x8xi1>
    %159 = vector.broadcast %158 : vector<256x8xi1> to vector<256x8xi1>
    %160 = arith.xori %156, %159 : vector<256x8xi1>
    %161 = arith.andi %160, %154 : vector<256x8xi1>
    %162 = vector.broadcast %150 : i32 to vector<256x8xi32>
    %163 = arith.addi %152, %162 : vector<256x8xi32>
    %164 = arith.select %161, %163, %152 : vector<256x8xi1>, vector<256x8xi32>
    %165 = vector.extract_strided_slice %147 {offsets = [15, 0], sizes = [256, 8], strides = [1, 1]} : vector<320x8xbf16> to vector<256x8xbf16>
    %c1_i32_62 = arith.constant 1 : i32
    %166 = vector.broadcast %c1_i32_62 : i32 to vector<256x8xi32>
    %167 = arith.cmpi sge, %164, %166 : vector<256x8xi32>
    %cst_63 = arith.constant 0.000000e+00 : bf16
    %168 = vector.broadcast %cst_63 : bf16 to vector<256x8xbf16>
    %169 = arith.select %167, %165, %168 : vector<256x8xi1>, vector<256x8xbf16>
    %170 = vector.extract_strided_slice %147 {offsets = [16, 0], sizes = [256, 8], strides = [1, 1]} : vector<320x8xbf16> to vector<256x8xbf16>
    %171 = vector.extract_strided_slice %147 {offsets = [17, 0], sizes = [256, 8], strides = [1, 1]} : vector<320x8xbf16> to vector<256x8xbf16>
    %c14_i32_64 = arith.constant 14 : i32
    %172 = vector.broadcast %c14_i32_64 : i32 to vector<256x8xi32>
    %173 = arith.cmpi sle, %164, %172 : vector<256x8xi32>
    %cst_65 = arith.constant 0.000000e+00 : bf16
    %174 = vector.broadcast %cst_65 : bf16 to vector<256x8xbf16>
    %175 = arith.select %173, %171, %174 : vector<256x8xi1>, vector<256x8xbf16>
    %176 = vector.extract_strided_slice %147 {offsets = [31, 0], sizes = [256, 8], strides = [1, 1]} : vector<320x8xbf16> to vector<256x8xbf16>
    %c1_i32_66 = arith.constant 1 : i32
    %177 = vector.broadcast %c1_i32_66 : i32 to vector<256x8xi32>
    %178 = arith.cmpi sge, %164, %177 : vector<256x8xi32>
    %cst_67 = arith.constant 0.000000e+00 : bf16
    %179 = vector.broadcast %cst_67 : bf16 to vector<256x8xbf16>
    %180 = arith.select %178, %176, %179 : vector<256x8xi1>, vector<256x8xbf16>
    %181 = vector.extract_strided_slice %147 {offsets = [32, 0], sizes = [256, 8], strides = [1, 1]} : vector<320x8xbf16> to vector<256x8xbf16>
    %182 = vector.extract_strided_slice %147 {offsets = [33, 0], sizes = [256, 8], strides = [1, 1]} : vector<320x8xbf16> to vector<256x8xbf16>
    %c14_i32_68 = arith.constant 14 : i32
    %183 = vector.broadcast %c14_i32_68 : i32 to vector<256x8xi32>
    %184 = arith.cmpi sle, %164, %183 : vector<256x8xi32>
    %cst_69 = arith.constant 0.000000e+00 : bf16
    %185 = vector.broadcast %cst_69 : bf16 to vector<256x8xbf16>
    %186 = arith.select %184, %182, %185 : vector<256x8xi1>, vector<256x8xbf16>
    %187 = vector.extract_strided_slice %147 {offsets = [47, 0], sizes = [256, 8], strides = [1, 1]} : vector<320x8xbf16> to vector<256x8xbf16>
    %c1_i32_70 = arith.constant 1 : i32
    %188 = vector.broadcast %c1_i32_70 : i32 to vector<256x8xi32>
    %189 = arith.cmpi sge, %164, %188 : vector<256x8xi32>
    %cst_71 = arith.constant 0.000000e+00 : bf16
    %190 = vector.broadcast %cst_71 : bf16 to vector<256x8xbf16>
    %191 = arith.select %189, %187, %190 : vector<256x8xi1>, vector<256x8xbf16>
    %192 = vector.extract_strided_slice %147 {offsets = [48, 0], sizes = [256, 8], strides = [1, 1]} : vector<320x8xbf16> to vector<256x8xbf16>
    %193 = vector.extract_strided_slice %147 {offsets = [49, 0], sizes = [256, 8], strides = [1, 1]} : vector<320x8xbf16> to vector<256x8xbf16>
    %c14_i32_72 = arith.constant 14 : i32
    %194 = vector.broadcast %c14_i32_72 : i32 to vector<256x8xi32>
    %195 = arith.cmpi sle, %164, %194 : vector<256x8xi32>
    %cst_73 = arith.constant 0.000000e+00 : bf16
    %196 = vector.broadcast %cst_73 : bf16 to vector<256x8xbf16>
    %197 = arith.select %195, %193, %196 : vector<256x8xi1>, vector<256x8xbf16>
    %198 = tpu.concatenate %169, %170, %175, %180, %181, %186, %191, %192, %197 in 1 : vector<256x8xbf16>, vector<256x8xbf16>, vector<256x8xbf16>, vector<256x8xbf16>, vector<256x8xbf16>, vector<256x8xbf16>, vector<256x8xbf16>, vector<256x8xbf16>, vector<256x8xbf16> -> vector<256x72xbf16>
    %c0_74 = arith.constant 0 : index
    %c0_75 = arith.constant 0 : index
    %199 = vector.load %arg7[%c0_74, %c0_75] : memref<72x8xbf16, #tpu.memory_space<vmem>>, vector<72x8xbf16>
    %c0_76 = arith.constant 0 : index
    %c0_77 = arith.constant 0 : index
    %200 = vector.load %arg8[%c0_76, %c0_77] : memref<1x8xf32, #tpu.memory_space<vmem>>, vector<1x8xf32>
    %c0_78 = arith.constant 0 : index
    %c0_79 = arith.constant 0 : index
    %201 = vector.load %arg9[%c0_78, %c0_79] : memref<1x8xf32, #tpu.memory_space<vmem>>, vector<1x8xf32>
    %c0_80 = arith.constant 0 : index
    %c0_81 = arith.constant 0 : index
    %202 = vector.load %arg10[%c0_80, %c0_81] : memref<1x8xf32, #tpu.memory_space<vmem>>, vector<1x8xf32>
    %cst_82 = arith.constant dense<0.000000e+00> : vector<256x8xf32>
    %203 = tpu.matmul %198, %199, %cst_82 {dimension_numbers = #tpu.dot_dimension_numbers<[1], [0], [0], [1], [0, 0, 1, 1], [], []>} : vector<256x72xbf16>, vector<72x8xbf16>, vector<256x8xf32> -> vector<256x8xf32>
    %204 = vector.broadcast %200 : vector<1x8xf32> to vector<256x8xf32>
    %205 = arith.addf %203, %204 : vector<256x8xf32>
    %206 = vector.shape_cast %205 : vector<256x8xf32> to vector<1x256x8xf32>
    %cst_83 = arith.constant dense<0.000000e+00> : vector<1xf32>
    %207 = vector.multi_reduction <add>, %206, %cst_83 [1, 2] : vector<1x256x8xf32> to vector<1xf32>
    %208 = vector.shape_cast %207 : vector<1xf32> to vector<1x1x1xf32>
    %209 = vector.extract %208[0, 0, 0] : f32 from vector<1x1x1xf32>
    %cst_84 = arith.constant 4.8828125E-4 : f32
    %210 = arith.mulf %209, %cst_84 : f32
    %211 = vector.broadcast %210 : f32 to vector<256x8xf32>
    %212 = arith.subf %205, %211 : vector<256x8xf32>
    %213 = arith.mulf %212, %212 : vector<256x8xf32>
    %214 = vector.shape_cast %213 : vector<256x8xf32> to vector<1x256x8xf32>
    %cst_85 = arith.constant dense<0.000000e+00> : vector<1xf32>
    %215 = vector.multi_reduction <add>, %214, %cst_85 [1, 2] : vector<1x256x8xf32> to vector<1xf32>
    %216 = vector.shape_cast %215 : vector<1xf32> to vector<1x1x1xf32>
    %217 = vector.extract %216[0, 0, 0] : f32 from vector<1x1x1xf32>
    %cst_86 = arith.constant 4.8828125E-4 : f32
    %218 = arith.mulf %217, %cst_86 : f32
    %cst_87 = arith.constant 9.99999974E-6 : f32
    %219 = arith.addf %218, %cst_87 : f32
    %220 = math.rsqrt %219 : f32
    %221 = vector.broadcast %220 : f32 to vector<256x8xf32>
    %222 = arith.mulf %212, %221 : vector<256x8xf32>
    %223 = vector.broadcast %201 : vector<1x8xf32> to vector<256x8xf32>
    %224 = arith.mulf %222, %223 : vector<256x8xf32>
    %225 = vector.broadcast %202 : vector<1x8xf32> to vector<256x8xf32>
    %226 = arith.addf %224, %225 : vector<256x8xf32>
    %cst_88 = arith.constant 0.000000e+00 : f32
    %227 = vector.broadcast %cst_88 : f32 to vector<256x8xf32>
    %228 = arith.maximumf %226, %227 : vector<256x8xf32>
    %229 = tpu.iota {dimensions = array<i32: 0>} : vector<8x8xi32>
    %230 = tpu.iota {dimensions = array<i32: 1>} : vector<8x8xi32>
    %231 = arith.cmpi eq, %229, %230 : vector<8x8xi32>
    %232 = arith.extui %231 : vector<8x8xi1> to vector<8x8xi32>
    %233 = arith.sitofp %232 : vector<8x8xi32> to vector<8x8xf32>
    %cst_89 = arith.constant dense<0.000000e+00> : vector<8x256xf32>
    %234 = tpu.matmul %233, %228, %cst_89 {dimension_numbers = #tpu.dot_dimension_numbers<[1], [1], [0], [0], [0, 0, 1, 0], [], []>} : vector<8x8xf32>, vector<256x8xf32>, vector<8x256xf32> -> vector<8x256xf32>
    %c0_90 = arith.constant 0 : index
    %c0_91 = arith.constant 0 : index
    %c0_92 = arith.constant 0 : index
    %235 = vector.load %arg11[%c0_90, %c0_91, %c0_92] : memref<1x8x256xf32, #tpu.memory_space<vmem>>, vector<1x8x256xf32>
    %236 = vector.shape_cast %235 : vector<1x8x256xf32> to vector<8x256xf32>
    %237 = vector.shape_cast %234 : vector<8x256xf32> to vector<1x8x256xf32>
    tpu.vector_store %arg11[%c0_90, %c0_91, %c0_92], %237 {strides = array<i32>} : memref<1x8x256xf32, #tpu.memory_space<vmem>>, vector<1x8x256xf32>,
    return
  }
  func.func @transform_0(%arg0: i32) -> (i32, i32, i32, i32) {
    %c0_i32 = arith.constant 0 : i32
    %c0_i32_0 = arith.constant 0 : i32
    %c0_i32_1 = arith.constant 0 : i32
    %c0_i32_2 = arith.constant 0 : i32
    return %arg0, %c0_i32, %c0_i32_0, %c0_i32_1 : i32, i32, i32, i32
  }
  func.func @transform_1(%arg0: i32) -> (i32, i32, i32, i32) {
    %c0_i32 = arith.constant 0 : i32
    %c0_i32_0 = arith.constant 0 : i32
    %c0_i32_1 = arith.constant 0 : i32
    %c0_i32_2 = arith.constant 0 : i32
    return %arg0, %c0_i32, %c0_i32_0, %c0_i32_1 : i32, i32, i32, i32
  }
  func.func @transform_2(%arg0: i32) -> (i32, i32) {
    %c0_i32 = arith.constant 0 : i32
    %c0_i32_0 = arith.constant 0 : i32
    %c0_i32_1 = arith.constant 0 : i32
    return %c0_i32, %c0_i32_0 : i32, i32
  }
  func.func @transform_3(%arg0: i32) -> (i32, i32) {
    %c0_i32 = arith.constant 0 : i32
    %c0_i32_0 = arith.constant 0 : i32
    %c0_i32_1 = arith.constant 0 : i32
    return %c0_i32, %c0_i32_0 : i32, i32
  }
  func.func @transform_4(%arg0: i32) -> (i32, i32) {
    %c0_i32 = arith.constant 0 : i32
    %c0_i32_0 = arith.constant 0 : i32
    %c0_i32_1 = arith.constant 0 : i32
    return %c0_i32, %c0_i32_0 : i32, i32
  }
  func.func @transform_5(%arg0: i32) -> (i32, i32) {
    %c0_i32 = arith.constant 0 : i32
    %c0_i32_0 = arith.constant 0 : i32
    %c0_i32_1 = arith.constant 0 : i32
    return %c0_i32, %c0_i32_0 : i32, i32
  }
  func.func @transform_6(%arg0: i32) -> (i32, i32) {
    %c0_i32 = arith.constant 0 : i32
    %c0_i32_0 = arith.constant 0 : i32
    %c0_i32_1 = arith.constant 0 : i32
    return %c0_i32, %c0_i32_0 : i32, i32
  }
  func.func @transform_7(%arg0: i32) -> (i32, i32) {
    %c0_i32 = arith.constant 0 : i32
    %c0_i32_0 = arith.constant 0 : i32
    %c0_i32_1 = arith.constant 0 : i32
    return %c0_i32, %c0_i32_0 : i32, i32
  }
  func.func @transform_8(%arg0: i32) -> (i32, i32) {
    %c0_i32 = arith.constant 0 : i32
    %c0_i32_0 = arith.constant 0 : i32
    %c0_i32_1 = arith.constant 0 : i32
    return %c0_i32, %c0_i32_0 : i32, i32
  }
  func.func @transform_9(%arg0: i32) -> (i32, i32) {
    %c0_i32 = arith.constant 0 : i32
    %c0_i32_0 = arith.constant 0 : i32
    %c0_i32_1 = arith.constant 0 : i32
    return %c0_i32, %c0_i32_0 : i32, i32
  }
  func.func @transform_10(%arg0: i32) -> (i32, i32, i32) {
    %c0_i32 = arith.constant 0 : i32
    %c0_i32_0 = arith.constant 0 : i32
    %c0_i32_1 = arith.constant 0 : i32
    return %arg0, %c0_i32, %c0_i32_0 : i32, i32, i32
  }
}

</mosaic_0001>

<llo_original>
// kernel: tile.6
$region0: #{tile.6}
  #allocation0 [shape = 's32[1]{0}', space=sflag, size = 0x4, scoped, tag = 'scoped memory for tile.6']
  %s0 = inlined_call_operand.vmem [shape: f32[4], index: 0, kind: input, shape index: {}]
  %s1 = inlined_call_operand.vmem [shape: f32[4,4], index: 1, kind: output, shape index: {}]
  // Predicated region
  $region2: #{tile.6} parent=0 // pred_check
    _
  $region3: #{tile.6} parent=0 // pred_check_branch
    %3 = sbr.rel (0) target = $region5
  $region4: #{tile.6} parent=0 // pred_region
    _
  $region5: #{tile.6} parent=0 // pred_fallthru
    _
  %v4 = vld [vmem:[%s0] ss:$0 sm:$0xff]
  %5 = vst [vmem:[%s1] sm:$0xf] %v4

// kernel: tile.0
$region0: #{tile.0}
  %s0 = inlined_call_operand.vmem [shape: f32[4,4], index: 0, kind: input, shape index: {}]
  %s1 = inlined_call_operand.vmem [shape: f32[16,1], index: 1, kind: output, shape index: {}]
  $region1: #{tile.0} parent=0
    #allocation0 [shape = 'u8[4096]{0}', space=vmem, size = 0x1000, scoped, tag = 'scoped mem for input reshape']
    %s3 = sshllo.u32 0, 4
    %v4 = vld [vmem:[%s0] sm:%s3]
    %5 = vst [vmem:[#allocation0] sm:%s3] %v4
    %v6 = vld [vmem:[#allocation0] sm:$0xf]
    %vm7 = vcmask 7168
    %8 = vst.msk [vmem:[%s1] ss:$4 sm:$0xf] %vm7, %v6
    %v9 = vld [vmem:[#allocation0] sm:$0xf]
    %10 = vrot.lane.b32.xlu0 %v9, 127
    %v11 = vpop.permute.xlu0 %10
    %vm12 = vcmask 7168
    %s13 = scalar_lea.vmem %s1, 1
    %14 = vst.msk [vmem:[%s13] ss:$4 sm:$0xf] %vm12, %v11
    %v15 = vld [vmem:[#allocation0] sm:$0xf]
    %16 = vrot.lane.b32.xlu0 %v15, 126
    %v17 = vpop.permute.xlu0 %16
    %vm18 = vcmask 7168
    %s19 = scalar_lea.vmem %s1, 2
    %20 = vst.msk [vmem:[%s19] ss:$4 sm:$0xf] %vm18, %v17
    %v21 = vld [vmem:[#allocation0] sm:$0xf]
    %22 = vrot.lane.b32.xlu0 %v21, 125
    %v23 = vpop.permute.xlu0 %22
    %vm24 = vcmask 7168
    %s25 = scalar_lea.vmem %s1, 3
    %26 = vst.msk [vmem:[%s25] ss:$4 sm:$0xf] %vm24, %v23

// kernel: up_forward.2
$region0: #{up_forward.2}
  #allocation0 [shape = 'u32[]', space=smem, size = 0x4, offset = 0x4, fixed_abs, tag = 'smem constant byte address 0x4 - core index']
  #allocation1 [shape = 'u32[144,128]{1,0:T(1,128)}', space=vmem, size = 0x12000, scoped, tag = 'internal scratch']
  %s0 = inlined_call_operand.vmem [shape: bf16[8,128], index: 0, kind: input, shape index: {}]
  %s1 = inlined_call_operand.vmem [shape: bf16[16,8], index: 1, kind: input, shape index: {}]
  %s2 = inlined_call_operand.vmem [shape: f32[16,1], index: 2, kind: input, shape index: {}]
  %s3 = inlined_call_operand.vmem [shape: bf16[16,128], index: 3, kind: output, shape index: {}]
  %s4 = sld [smem:[#allocation0]]
  $region22: #{up_forward.2} parent=0
    _
  %s6 = ssub.s32 1, %s4
  %s7 = scalar_select 0, %s6, %s4
  // Predicated region
  $region2: #{up_forward.2} parent=0 // pred_check
    _
  $region3: #{up_forward.2} parent=0 // pred_check_branch
    %9 = sbr.rel (0) target = $region5
  $region4: #{up_forward.2} parent=0 // pred_region
    _
  $region5: #{up_forward.2} parent=0 // pred_fallthru
    _
  // Predicated region
  $region6: #{up_forward.2} parent=0 // pred_check
    _
  $region7: #{up_forward.2} parent=0 // pred_check_branch
    %11 = sbr.rel (0) target = $region9
  $region8: #{up_forward.2} parent=0 // pred_region
    _
  $region9: #{up_forward.2} parent=0 // pred_fallthru
    _
  // Predicated region
  $region10: #{up_forward.2} parent=0 // pred_check
    _
  $region11: #{up_forward.2} parent=0 // pred_check_branch
    %13 = sbr.rel (0) target = $region13
  $region12: #{up_forward.2} parent=0 // pred_region
    _
  $region13: #{up_forward.2} parent=0 // pred_fallthru
    _
  %v15 = vld [vmem:[%s1] sm:$0xf]
  %v16 = vld [vmem:[%s1 + $0x4] sm:$0xf]
  %v17 = vld [vmem:[%s0] sm:$0xf]
  %v18 = vld [vmem:[%s2] sm:$0xff]
  %v19 = vld [vmem:[%s2 + $0x8] sm:$0xff]
  %21 = vset.pattern.permute.xlu0 0
  %22 = vperm.xlu0 %21, %v18
  %v23 = vpop.permute.xlu0 %22
  %26 = vset.pattern.permute.xlu0 0
  %27 = vperm.xlu0 %26, %v19
  %v28 = vpop.permute.xlu0 %27
  %v32 = vunpack.c.l.b16 %v15
  %v33 = vunpack.c.l.b16 %v16
  %v34 = vpack.c.b16 %v33, %v32
  %vm35 = vcmask 64512
  %v37 = vsel %vm35, %v34, 0
  %vm39 = vcmask 1043456
  %v41 = vsel %vm39, %v17, 0
  %43 = vmatprep.subr.bf16.mxu0 0
  %44 = vmatpush1.bf16.msra.mxu0 %v41
  %45 = vmatprep.subr.bf16.mxu0 0
  %46 = vmatpush1.bf16.msra.mxu0 0
  %47 = vmatprep.subr.bf16.mxu0 0
  %48 = vmatpush1.bf16.msra.mxu0 0
  %49 = vmatprep.subr.bf16.mxu0 0
  %50 = vmatpush1.bf16.msra.mxu0 0
  %51 = vmatprep.subr.bf16.mxu0 0
  %52 = vmatpush1.bf16.msra.mxu0 0
  %53 = vmatprep.subr.bf16.mxu0 0
  %54 = vmatpush1.bf16.msra.mxu0 0
  %55 = vmatprep.subr.bf16.mxu0 0
  %56 = vmatpush1.bf16.msra.mxu0 0
  %57 = vmatprep.subr.bf16.mxu0 0
  %58 = vmatpush1.bf16.msra.mxu0 0
  %59 = vmatprep.subr.bf16.mxu0 0
  %60 = vmatpush1.bf16.msra.mxu0 0
  %61 = vmatprep.subr.bf16.mxu0 0
  %62 = vmatpush1.bf16.msra.mxu0 0
  %63 = vmatprep.subr.bf16.mxu0 0
  %64 = vmatpush1.bf16.msra.mxu0 0
  %65 = vmatprep.subr.bf16.mxu0 0
  %66 = vmatpush1.bf16.msra.mxu0 0
  %67 = vmatprep.subr.bf16.mxu0 0
  %68 = vmatpush1.bf16.msra.mxu0 0
  %69 = vmatprep.subr.bf16.mxu0 0
  %70 = vmatpush1.bf16.msra.mxu0 0
  %71 = vmatprep.subr.bf16.mxu0 0
  %72 = vmatpush1.bf16.msra.mxu0 0
  %73 = vmatprep.subr.bf16.mxu0 0
  %74 = vmatpush1.bf16.msra.mxu0 0
  %75 = vmatprep.mubr.bf16.mxu0 0
  %76 = vmatmul.mubr.bf16.gmra.mrb[0].mxu0 %v37
  %v77 = vpop.f32.mrb[0].mxu0
  %v78 = vadd.f32 %v23, %v77
  %v79 = vpop.f32.mrb[0].mxu0
  %v80 = vpop.f32.mrb[0].mxu0
  %v81 = vadd.f32 %v28, %v80
  %v82 = vpop.f32.mrb[0].mxu0
  %83 = vdwg.mxu0
  %v84 = vpack.c.bf16 %v81, %v78
  %v86 = vunpack.c.l.b16 %v84
  %v87 = vunpack.c.h.b16 %v84
  %v88 = vpack.c.b16 %v86, %v86
  %v89 = vpack.c.b16 %v87, %v87
  %92 = vst [vmem:[%s3] sm:$0xf] %v88
  %93 = vst [vmem:[%s3 + $0x4] sm:$0xf] %v89
  // Predicated region
  $region14: #{up_forward.2} parent=0 // pred_check
    _
  $region15: #{up_forward.2} parent=0 // pred_check_branch
    %95 = sbr.rel (0) target = $region17
  $region16: #{up_forward.2} parent=0 // pred_region
    _
  $region17: #{up_forward.2} parent=0 // pred_fallthru
    _
  // Predicated region
  $region18: #{up_forward.2} parent=0 // pred_check
    _
  $region19: #{up_forward.2} parent=0 // pred_check_branch
    %97 = sbr.rel (0) target = $region21
  $region20: #{up_forward.2} parent=0 // pred_region
    _
  $region21: #{up_forward.2} parent=0 // pred_fallthru
    _

// kernel: up_forward.3
$region0: #{up_forward.3}
  #allocation0 [shape = 'u32[]', space=smem, size = 0x4, offset = 0x4, fixed_abs, tag = 'smem constant byte address 0x4 - core index']
  #allocation1 [shape = 'u32[144,128]{1,0:T(1,128)}', space=vmem, size = 0x12000, scoped, tag = 'internal scratch']
  %s0 = inlined_call_operand.vmem [shape: bf16[2,16,16,4], index: 0, kind: input, shape index: {}]
  %s1 = inlined_call_operand.vmem [shape: bf16[2,16,16,4], index: 1, kind: input, shape index: {}]
  %s2 = inlined_call_operand.vmem [shape: bf16[72,8], index: 2, kind: input, shape index: {}]
  %s3 = inlined_call_operand.vmem [shape: f32[1,8], index: 3, kind: input, shape index: {}]
  %s4 = inlined_call_operand.vmem [shape: f32[1,8], index: 4, kind: input, shape index: {}]
  %s5 = inlined_call_operand.vmem [shape: f32[1,8], index: 5, kind: input, shape index: {}]
  %s6 = inlined_call_operand.vmem [shape: bf16[72,8], index: 6, kind: input, shape index: {}]
  %s7 = inlined_call_operand.vmem [shape: f32[1,8], index: 7, kind: input, shape index: {}]
  %s8 = inlined_call_operand.vmem [shape: f32[1,8], index: 8, kind: input, shape index: {}]
  %s9 = inlined_call_operand.vmem [shape: f32[1,8], index: 9, kind: input, shape index: {}]
  %s10 = inlined_call_operand.vmem [shape: f32[2,8,256], index: 10, kind: output, shape index: {}]
  %s11 = sld [smem:[#allocation0]]
  $region73: #{up_forward.3} parent=0
    _
  %s13 = ssub.s32 1, %s11
  %s14 = scalar_select 0, %s13, %s11
  loop: start=0, step=1, limit=4
  $region2: #{up_forward.3} parent=0 // loop_pre_header
    _
  $region3: #{up_forward.3} parent=0 // loop_header
    %s16 = sphi 0, %s20
    %p17 = scmp.ge.s32.totalorder %s16, 4
    %s26 = sphi 0, %s28
    %s29 = sphi 0, %s26
    %s30 = sphi 0, %s29
    %s46 = sphi 0, %s30
    %s52 = sphi 0, %s54
    %s55 = sphi 0, %s52
    %s56 = sphi 0, %s55
    %s72 = sphi 0, %s56
    %s76 = sphi 0, %s76
    %s78 = sphi 0, %s76
    %s79 = sphi 0, %s78
    %s93 = sphi 0, %s79
    %s97 = sphi 0, %s97
    %s99 = sphi 0, %s97
    %s100 = sphi 0, %s99
    %s114 = sphi 0, %s100
    %s118 = sphi 0, %s118
    %s120 = sphi 0, %s118
    %s121 = sphi 0, %s120
    %s135 = sphi 0, %s121
    %s139 = sphi 0, %s139
    %s141 = sphi 0, %s139
    %s142 = sphi 0, %s141
    %s156 = sphi 0, %s142
    %s160 = sphi 0, %s160
    %s162 = sphi 0, %s160
    %s163 = sphi 0, %s162
    %s177 = sphi 0, %s163
    %s181 = sphi 0, %s181
    %s183 = sphi 0, %s181
    %s184 = sphi 0, %s183
    %s198 = sphi 0, %s184
    %s202 = sphi 0, %s202
    %s204 = sphi 0, %s202
    %s205 = sphi 0, %s204
    %s219 = sphi 0, %s205
    %s223 = sphi 0, %s223
    %s225 = sphi 0, %s223
    %s226 = sphi 0, %s225
    %s240 = sphi 0, %s226
    %s246 = sphi 0, %s248
    %s249 = sphi 0, %s246
    %s250 = sphi 0, %s249
    %s266 = sphi 0, %s250
  $region4: #{up_forward.3} parent=0 // loop_header_branch
    %19 = sbr.rel (%p17) target = $region8
  $region5: #{up_forward.3} parent=0 // loop_body
    %s21 = ssub.s32 %s16, 1
    %s22 = ssub.s32 %s16, 2
    %s23 = sadd.s32 %s16, 1
    %s24 = ssub.s32 %s16, %s23
    %p25 = scmp.eq.s32.totalorder %s24, 0
    %s27 = sadd.s32 %s26, 1
    %s28 = scalar_select %p25, %s26, %s27
    %p31 = pneg %p25
    %p32 = scmp.eq.s32.totalorder %s16, 1
    %p33 = por %p31, %p32
    %p34 = scmp.ne.s32.totalorder %s26, %s29
    %p35 = scmp.eq.s32.totalorder %s16, 0
    %p36 = por %p34, %p35
    %p37 = scmp.ne.s32.totalorder %s26, %s29
    %p38 = scmp.eq.s32.totalorder %s21, 1
    %p39 = por %p37, %p38
    %p40 = scmp.ne.s32.totalorder %s29, %s30
    %p41 = scmp.eq.s32.totalorder %s21, 0
    %p42 = por %p40, %p41
    %p43 = scmp.ne.s32.totalorder %s29, %s30
    %p44 = scmp.eq.s32.totalorder %s22, 1
    %p45 = por %p43, %p44
    %p47 = scmp.ne.s32.totalorder %s30, %s46
    %p48 = scmp.eq.s32.totalorder %s22, 0
    %p49 = por %p47, %p48
    %s50 = ssub.s32 %s16, %s23
    %p51 = scmp.eq.s32.totalorder %s50, 0
    %s53 = sadd.s32 %s52, 1
    %s54 = scalar_select %p51, %s52, %s53
    %p57 = pneg %p51
    %p58 = scmp.eq.s32.totalorder %s16, 1
    %p59 = por %p57, %p58
    %p60 = scmp.ne.s32.totalorder %s52, %s55
    %p61 = scmp.eq.s32.totalorder %s16, 0
    %p62 = por %p60, %p61
    %p63 = scmp.ne.s32.totalorder %s52, %s55
    %p64 = scmp.eq.s32.totalorder %s21, 1
    %p65 = por %p63, %p64
    %p66 = scmp.ne.s32.totalorder %s55, %s56
    %p67 = scmp.eq.s32.totalorder %s21, 0
    %p68 = por %p66, %p67
    %p69 = scmp.ne.s32.totalorder %s55, %s56
    %p70 = scmp.eq.s32.totalorder %s22, 1
    %p71 = por %p69, %p70
    %p73 = scmp.ne.s32.totalorder %s56, %s72
    %p74 = scmp.eq.s32.totalorder %s22, 0
    %p75 = por %p73, %p74
    %s77 = sadd.s32 %s76, 1
    %p80 = scmp.eq.s32.totalorder %s16, 1
    %p81 = scmp.ne.s32.totalorder %s76, %s78
    %p82 = scmp.eq.s32.totalorder %s16, 0
    %p83 = por %p81, %p82
    %p84 = scmp.ne.s32.totalorder %s76, %s78
    %p85 = scmp.eq.s32.totalorder %s21, 1
    %p86 = por %p84, %p85
    %p87 = scmp.ne.s32.totalorder %s78, %s79
    %p88 = scmp.eq.s32.totalorder %s21, 0
    %p89 = por %p87, %p88
    %p90 = scmp.ne.s32.totalorder %s78, %s79
    %p91 = scmp.eq.s32.totalorder %s22, 1
    %p92 = por %p90, %p91
    %p94 = scmp.ne.s32.totalorder %s79, %s93
    %p95 = scmp.eq.s32.totalorder %s22, 0
    %p96 = por %p94, %p95
    %s98 = sadd.s32 %s97, 1
    %p101 = scmp.eq.s32.totalorder %s16, 1
    %p102 = scmp.ne.s32.totalorder %s97, %s99
    %p103 = scmp.eq.s32.totalorder %s16, 0
    %p104 = por %p102, %p103
    %p105 = scmp.ne.s32.totalorder %s97, %s99
    %p106 = scmp.eq.s32.totalorder %s21, 1
    %p107 = por %p105, %p106
    %p108 = scmp.ne.s32.totalorder %s99, %s100
    %p109 = scmp.eq.s32.totalorder %s21, 0
    %p110 = por %p108, %p109
    %p111 = scmp.ne.s32.totalorder %s99, %s100
    %p112 = scmp.eq.s32.totalorder %s22, 1
    %p113 = por %p111, %p112
    %p115 = scmp.ne.s32.totalorder %s100, %s114
    %p116 = scmp.eq.s32.totalorder %s22, 0
    %p117 = por %p115, %p116
    %s119 = sadd.s32 %s118, 1
    %p122 = scmp.eq.s32.totalorder %s16, 1
    %p123 = scmp.ne.s32.totalorder %s118, %s120
    %p124 = scmp.eq.s32.totalorder %s16, 0
    %p125 = por %p123, %p124
    %p126 = scmp.ne.s32.totalorder %s118, %s120
    %p127 = scmp.eq.s32.totalorder %s21, 1
    %p128 = por %p126, %p127
    %p129 = scmp.ne.s32.totalorder %s120, %s121
    %p130 = scmp.eq.s32.totalorder %s21, 0
    %p131 = por %p129, %p130
    %p132 = scmp.ne.s32.totalorder %s120, %s121
    %p133 = scmp.eq.s32.totalorder %s22, 1
    %p134 = por %p132, %p133
    %p136 = scmp.ne.s32.totalorder %s121, %s135
    %p137 = scmp.eq.s32.totalorder %s22, 0
    %p138 = por %p136, %p137
    %s140 = sadd.s32 %s139, 1
    %p143 = scmp.eq.s32.totalorder %s16, 1
    %p144 = scmp.ne.s32.totalorder %s139, %s141
    %p145 = scmp.eq.s32.totalorder %s16, 0
    %p146 = por %p144, %p145
    %p147 = scmp.ne.s32.totalorder %s139, %s141
    %p148 = scmp.eq.s32.totalorder %s21, 1
    %p149 = por %p147, %p148
    %p150 = scmp.ne.s32.totalorder %s141, %s142
    %p151 = scmp.eq.s32.totalorder %s21, 0
    %p152 = por %p150, %p151
    %p153 = scmp.ne.s32.totalorder %s141, %s142
    %p154 = scmp.eq.s32.totalorder %s22, 1
    %p155 = por %p153, %p154
    %p157 = scmp.ne.s32.totalorder %s142, %s156
    %p158 = scmp.eq.s32.totalorder %s22, 0
    %p159 = por %p157, %p158
    %s161 = sadd.s32 %s160, 1
    %p164 = scmp.eq.s32.totalorder %s16, 1
    %p165 = scmp.ne.s32.totalorder %s160, %s162
    %p166 = scmp.eq.s32.totalorder %s16, 0
    %p167 = por %p165, %p166
    %p168 = scmp.ne.s32.totalorder %s160, %s162
    %p169 = scmp.eq.s32.totalorder %s21, 1
    %p170 = por %p168, %p169
    %p171 = scmp.ne.s32.totalorder %s162, %s163
    %p172 = scmp.eq.s32.totalorder %s21, 0
    %p173 = por %p171, %p172
    %p174 = scmp.ne.s32.totalorder %s162, %s163
    %p175 = scmp.eq.s32.totalorder %s22, 1
    %p176 = por %p174, %p175
    %p178 = scmp.ne.s32.totalorder %s163, %s177
    %p179 = scmp.eq.s32.totalorder %s22, 0
    %p180 = por %p178, %p179
    %s182 = sadd.s32 %s181, 1
    %p185 = scmp.eq.s32.totalorder %s16, 1
    %p186 = scmp.ne.s32.totalorder %s181, %s183
    %p187 = scmp.eq.s32.totalorder %s16, 0
    %p188 = por %p186, %p187
    %p189 = scmp.ne.s32.totalorder %s181, %s183
    %p190 = scmp.eq.s32.totalorder %s21, 1
    %p191 = por %p189, %p190
    %p192 = scmp.ne.s32.totalorder %s183, %s184
    %p193 = scmp.eq.s32.totalorder %s21, 0
    %p194 = por %p192, %p193
    %p195 = scmp.ne.s32.totalorder %s183, %s184
    %p196 = scmp.eq.s32.totalorder %s22, 1
    %p197 = por %p195, %p196
    %p199 = scmp.ne.s32.totalorder %s184, %s198
    %p200 = scmp.eq.s32.totalorder %s22, 0
    %p201 = por %p199, %p200
    %s203 = sadd.s32 %s202, 1
    %p206 = scmp.eq.s32.totalorder %s16, 1
    %p207 = scmp.ne.s32.totalorder %s202, %s204
    %p208 = scmp.eq.s32.totalorder %s16, 0
    %p209 = por %p207, %p208
    %p210 = scmp.ne.s32.totalorder %s202, %s204
    %p211 = scmp.eq.s32.totalorder %s21, 1
    %p212 = por %p210, %p211
    %p213 = scmp.ne.s32.totalorder %s204, %s205
    %p214 = scmp.eq.s32.totalorder %s21, 0
    %p215 = por %p213, %p214
    %p216 = scmp.ne.s32.totalorder %s204, %s205
    %p217 = scmp.eq.s32.totalorder %s22, 1
    %p218 = por %p216, %p217
    %p220 = scmp.ne.s32.totalorder %s205, %s219
    %p221 = scmp.eq.s32.totalorder %s22, 0
    %p222 = por %p220, %p221
    %s224 = sadd.s32 %s223, 1
    %p227 = scmp.eq.s32.totalorder %s16, 1
    %p228 = scmp.ne.s32.totalorder %s223, %s225
    %p229 = scmp.eq.s32.totalorder %s16, 0
    %p230 = por %p228, %p229
    %p231 = scmp.ne.s32.totalorder %s223, %s225
    %p232 = scmp.eq.s32.totalorder %s21, 1
    %p233 = por %p231, %p232
    %p234 = scmp.ne.s32.totalorder %s225, %s226
    %p235 = scmp.eq.s32.totalorder %s21, 0
    %p236 = por %p234, %p235
    %p237 = scmp.ne.s32.totalorder %s225, %s226
    %p238 = scmp.eq.s32.totalorder %s22, 1
    %p239 = por %p237, %p238
    %p241 = scmp.ne.s32.totalorder %s226, %s240
    %p242 = scmp.eq.s32.totalorder %s22, 0
    %p243 = por %p241, %p242
    %s244 = ssub.s32 %s16, %s23
    %p245 = scmp.eq.s32.totalorder %s244, 0
    %s247 = sadd.s32 %s246, 1
    %s248 = scalar_select %p245, %s246, %s247
    %p251 = pneg %p245
    %p252 = scmp.eq.s32.totalorder %s16, 1
    %p253 = por %p251, %p252
    %p254 = scmp.ne.s32.totalorder %s246, %s249
    %p255 = scmp.eq.s32.totalorder %s16, 0
    %p256 = por %p254, %p255
    %p257 = scmp.ne.s32.totalorder %s246, %s249
    %p258 = scmp.eq.s32.totalorder %s21, 1
    %p259 = por %p257, %p258
    %p260 = scmp.ne.s32.totalorder %s249, %s250
    %p261 = scmp.eq.s32.totalorder %s21, 0
    %p262 = por %p260, %p261
    %p263 = scmp.ne.s32.totalorder %s249, %s250
    %p264 = scmp.eq.s32.totalorder %s22, 1
    %p265 = por %p263, %p264
    %p267 = scmp.ne.s32.totalorder %s250, %s266
    %p268 = scmp.eq.s32.totalorder %s22, 0
    %p269 = por %p267, %p268
    %p270 = scmp.le.s32.totalorder 1, %s16
    %p271 = scmp.lt.s32.totalorder %s16, 3
    %p272 = pnand %p270, %p271
    %p273 = pneg %p272
    // Predicated region
    $region9: #{up_forward.3} parent=5 // pred_check
      _
    $region10: #{up_forward.3} parent=5 // pred_check_branch
      %275 = sbr.rel (%p272) target = $region12
    $region11: #{up_forward.3} parent=5 // pred_region
      %s276 = ssub.s32 %s16, 1
      // Predicated region
      $region13: #{up_forward.3} parent=11 // pred_check
        %p277 = pneg %p89
      $region14: #{up_forward.3} parent=11 // pred_check_branch
        %279 = sbr.rel (%p277) target = $region16
      $region15: #{up_forward.3} parent=11 // pred_region
        _
      $region16: #{up_forward.3} parent=11 // pred_fallthru
        _
      // Predicated region
      $region17: #{up_forward.3} parent=11 // pred_check
        %p280 = pneg %p110
      $region18: #{up_forward.3} parent=11 // pred_check_branch
        %282 = sbr.rel (%p280) target = $region20
      $region19: #{up_forward.3} parent=11 // pred_region
        _
      $region20: #{up_forward.3} parent=11 // pred_fallthru
        _
      // Predicated region
      $region21: #{up_forward.3} parent=11 // pred_check
        %p283 = pneg %p131
      $region22: #{up_forward.3} parent=11 // pred_check_branch
        %285 = sbr.rel (%p283) target = $region24
      $region23: #{up_forward.3} parent=11 // pred_region
        _
      $region24: #{up_forward.3} parent=11 // pred_fallthru
        _
      // Predicated region
      $region25: #{up_forward.3} parent=11 // pred_check
        %p286 = pneg %p152
      $region26: #{up_forward.3} parent=11 // pred_check_branch
        %288 = sbr.rel (%p286) target = $region28
      $region27: #{up_forward.3} parent=11 // pred_region
        _
      $region28: #{up_forward.3} parent=11 // pred_fallthru
        _
      // Predicated region
      $region29: #{up_forward.3} parent=11 // pred_check
        %p289 = pneg %p173
      $region30: #{up_forward.3} parent=11 // pred_check_branch
        %291 = sbr.rel (%p289) target = $region32
      $region31: #{up_forward.3} parent=11 // pred_region
        _
      $region32: #{up_forward.3} parent=11 // pred_fallthru
        _
      // Predicated region
      $region33: #{up_forward.3} parent=11 // pred_check
        %p292 = pneg %p194
      $region34: #{up_forward.3} parent=11 // pred_check_branch
        %294 = sbr.rel (%p292) target = $region36
      $region35: #{up_forward.3} parent=11 // pred_region
        _
      $region36: #{up_forward.3} parent=11 // pred_fallthru
        _
      // Predicated region
      $region37: #{up_forward.3} parent=11 // pred_check
        %p295 = pneg %p215
      $region38: #{up_forward.3} parent=11 // pred_check_branch
        %297 = sbr.rel (%p295) target = $region40
      $region39: #{up_forward.3} parent=11 // pred_region
        _
      $region40: #{up_forward.3} parent=11 // pred_fallthru
        _
      // Predicated region
      $region41: #{up_forward.3} parent=11 // pred_check
        %p298 = pneg %p236
      $region42: #{up_forward.3} parent=11 // pred_check_branch
        %300 = sbr.rel (%p298) target = $region44
      $region43: #{up_forward.3} parent=11 // pred_region
        _
      $region44: #{up_forward.3} parent=11 // pred_fallthru
        _
    $region12: #{up_forward.3} parent=5 // pred_fallthru
      _
    %p301 = scmp.lt.s32.totalorder %s16, 2
    // Predicated region
    $region45: #{up_forward.3} parent=5 // pred_check
      %p302 = pneg %p301
    $region46: #{up_forward.3} parent=5 // pred_check_branch
      %304 = sbr.rel (%p302) target = $region48
    $region47: #{up_forward.3} parent=5 // pred_region
      // Predicated region
      $region49: #{up_forward.3} parent=47 // pred_check
        %p305 = pneg %p36
      $region50: #{up_forward.3} parent=47 // pred_check_branch
        %307 = sbr.rel (%p305) target = $region52
      $region51: #{up_forward.3} parent=47 // pred_region
        %p308 = scmp.lt.s32.totalorder %s16, 1
        %s309 = scalar_select %p308, %s16, 1
        %s310 = smul.addr %s309, 32
        %s311 = smul.addr %s310, 4
        %s312 = scalar_lea.vmem %s0, %s311
      $region52: #{up_forward.3} parent=47 // pred_fallthru
        _
      // Predicated region
      $region53: #{up_forward.3} parent=47 // pred_check
        %p313 = pneg %p62
      $region54: #{up_forward.3} parent=47 // pred_check_branch
        %315 = sbr.rel (%p313) target = $region56
      $region55: #{up_forward.3} parent=47 // pred_region
        %p316 = scmp.lt.s32.totalorder %s16, 1
        %s317 = scalar_select %p316, %s16, 1
        %s318 = smul.addr %s317, 32
        %s319 = smul.addr %s318, 4
        %s320 = scalar_lea.vmem %s1, %s319
      $region56: #{up_forward.3} parent=47 // pred_fallthru
        _
    $region48: #{up_forward.3} parent=5 // pred_fallthru
      _
    %p321 = scmp.le.s32.totalorder 1, %s16
    %p322 = scmp.lt.s32.totalorder %s16, 3
    %p323 = pnand %p321, %p322
    %p324 = pneg %p323
    // Predicated region
    $region57: #{up_forward.3} parent=5 // pred_check
      _
    $region58: #{up_forward.3} parent=5 // pred_check_branch
      %326 = sbr.rel (%p323) target = $region60
    $region59: #{up_forward.3} parent=5 // pred_region
      %s327 = ssub.s32 %s16, 1
      %p328 = scmp.lt.s32.totalorder %s21, 1
      %s329 = scalar_select %p328, %s21, 1
      %s330 = smul.addr %s329, 32
      %s331 = smul.addr %s330, 4
      %s332 = scalar_lea.vmem %s0, %s331
      %p333 = pneg %p42
      %p334 = pneg %p39
      %p335 = scmp.lt.s32.totalorder %s21, 1
      %s336 = scalar_select %p335, %s21, 1
      %s337 = smul.addr %s336, 32
      %s338 = smul.addr %s337, 4
      %s339 = scalar_lea.vmem %s1, %s338
      %p340 = pneg %p68
      %p341 = pneg %p65
      %p342 = pneg %p89
      %p343 = pneg %p86
      %p344 = pneg %p110
      %p345 = pneg %p107
      %p346 = pneg %p131
      %p347 = pneg %p128
      %p348 = pneg %p152
      %p349 = pneg %p149
      %p350 = pneg %p173
      %p351 = pneg %p170
      %p352 = pneg %p194
      %p353 = pneg %p191
      %p354 = pneg %p215
      %p355 = pneg %p212
      %p356 = pneg %p236
      %p357 = pneg %p233
      %p358 = pneg %p262
      %p359 = pneg %p259
      %p360 = scmp.lt.s32.totalorder %s21, 1
      %s361 = scalar_select %p360, %s21, 1
      %s362 = smul.addr %s361, 2
      %s363 = smul.addr %s362, 8
      %s364 = scalar_lea.vmem %s10, %s363
      %p365 = scmp.lt.s32.totalorder %s21, 1
      %s366 = scalar_select %p365, %s21, 1
      %s367 = smul.addr %s366, 32
      %s368 = smul.addr %s367, 4
      %s369 = scalar_lea.vmem %s0, %s368
      %p370 = scmp.lt.s32.totalorder %s21, 1
      %s371 = scalar_select %p370, %s21, 1
      %s372 = smul.addr %s371, 32
      %s373 = smul.addr %s372, 4
      %s374 = scalar_lea.vmem %s1, %s373
      %p375 = scmp.lt.s32.totalorder %s21, 1
      %s376 = scalar_select %p375, %s21, 1
      %s377 = smul.addr %s376, 2
      %s378 = smul.addr %s377, 8
      %s379 = scalar_lea.vmem %s10, %s378
      %v383 = vld [vmem:[%s369] sm:$0xf]
      %v384 = vld [vmem:[%s369 + $0x4] sm:$0xf]
      %v385 = vld [vmem:[%s369 + $0x8] sm:$0xf]
      %v386 = vld [vmem:[%s369 + $0xc] sm:$0xf]
      %v387 = vld [vmem:[%s369 + $0x10] sm:$0xf]
      %v388 = vld [vmem:[%s369 + $0x14] sm:$0xf]
      %v389 = vld [vmem:[%s369 + $0x18] sm:$0xf]
      %v390 = vld [vmem:[%s369 + $0x1c] sm:$0xf]
      %v391 = vld [vmem:[%s369 + $0x20] sm:$0xf]
      %v392 = vld [vmem:[%s369 + $0x24] sm:$0xf]
      %v393 = vld [vmem:[%s369 + $0x28] sm:$0xf]
      %v394 = vld [vmem:[%s369 + $0x2c] sm:$0xf]
      %v395 = vld [vmem:[%s369 + $0x30] sm:$0xf]
      %v396 = vld [vmem:[%s369 + $0x34] sm:$0xf]
      %v397 = vld [vmem:[%s369 + $0x38] sm:$0xf]
      %v398 = vld [vmem:[%s369 + $0x3c] sm:$0xf]
      %v399 = vld [vmem:[%s369 + $0x40] sm:$0xf]
      %v400 = vld [vmem:[%s369 + $0x44] sm:$0xf]
      %v401 = vld [vmem:[%s369 + $0x48] sm:$0xf]
      %v402 = vld [vmem:[%s369 + $0x4c] sm:$0xf]
      %v403 = vld [vmem:[%s369 + $0x50] sm:$0xf]
      %v404 = vld [vmem:[%s369 + $0x54] sm:$0xf]
      %v405 = vld [vmem:[%s369 + $0x58] sm:$0xf]
      %v406 = vld [vmem:[%s369 + $0x5c] sm:$0xf]
      %v407 = vld [vmem:[%s369 + $0x60] sm:$0xf]
      %v408 = vld [vmem:[%s369 + $0x64] sm:$0xf]
      %v409 = vld [vmem:[%s369 + $0x68] sm:$0xf]
      %v410 = vld [vmem:[%s369 + $0x6c] sm:$0xf]
      %v411 = vld [vmem:[%s369 + $0x70] sm:$0xf]
      %v412 = vld [vmem:[%s369 + $0x74] sm:$0xf]
      %v413 = vld [vmem:[%s369 + $0x78] sm:$0xf]
      %v414 = vld [vmem:[%s369 + $0x7c] sm:$0xf]
      %v447 = vunpack.c.l.b16 %v383
      %v448 = vunpack.c.l.b16 %v384
      %v449 = vunpack.c.l.b16 %v385
      %v450 = vunpack.c.l.b16 %v386
      %v451 = vunpack.c.l.b16 %v387
      %v452 = vunpack.c.l.b16 %v388
      %v453 = vunpack.c.l.b16 %v389
      %v454 = vunpack.c.l.b16 %v390
      %v455 = vunpack.c.l.b16 %v391
      %v456 = vunpack.c.l.b16 %v392
      %v457 = vunpack.c.l.b16 %v393
      %v458 = vunpack.c.l.b16 %v394
      %v459 = vunpack.c.l.b16 %v395
      %v460 = vunpack.c.l.b16 %v396
      %v461 = vunpack.c.l.b16 %v397
      %v462 = vunpack.c.l.b16 %v398
      %v463 = vunpack.c.l.b16 %v399
      %v464 = vunpack.c.l.b16 %v400
      %v465 = vunpack.c.l.b16 %v401
      %v466 = vunpack.c.l.b16 %v402
      %v467 = vunpack.c.l.b16 %v403
      %v468 = vunpack.c.l.b16 %v404
      %v469 = vunpack.c.l.b16 %v405
      %v470 = vunpack.c.l.b16 %v406
      %v471 = vunpack.c.l.b16 %v407
      %v472 = vunpack.c.l.b16 %v408
      %v473 = vunpack.c.l.b16 %v409
      %v474 = vunpack.c.l.b16 %v410
      %v475 = vunpack.c.l.b16 %v411
      %v476 = vunpack.c.l.b16 %v412
      %v477 = vunpack.c.l.b16 %v413
      %v478 = vunpack.c.l.b16 %v414
      %v479 = vpack.c.b16 %v448, %v447
      %v480 = vpack.c.b16 %v450, %v449
      %v481 = vpack.c.b16 %v452, %v451
      %v482 = vpack.c.b16 %v454, %v453
      %v483 = vpack.c.b16 %v456, %v455
      %v484 = vpack.c.b16 %v458, %v457
      %v485 = vpack.c.b16 %v460, %v459
      %v486 = vpack.c.b16 %v462, %v461
      %v487 = vpack.c.b16 %v464, %v463
      %v488 = vpack.c.b16 %v466, %v465
      %v489 = vpack.c.b16 %v468, %v467
      %v490 = vpack.c.b16 %v470, %v469
      %v491 = vpack.c.b16 %v472, %v471
      %v492 = vpack.c.b16 %v474, %v473
      %v493 = vpack.c.b16 %v476, %v475
      %v494 = vpack.c.b16 %v478, %v477
      %v511 = vlaneseq
      %v512 = vshrl.u32 %v511, 7
      %v513 = vadd.s32 %v512, 8
      %v514 = vadd.s32 %v512, 16
      %v515 = vadd.s32 %v512, 24
      %v516 = vadd.s32 %v512, 32
      %v517 = vadd.s32 %v512, 40
      %v518 = vadd.s32 %v512, 48
      %v519 = vadd.s32 %v512, 56
      %v520 = vadd.s32 %v512, 64
      %v521 = vadd.s32 %v512, 72
      %v522 = vadd.s32 %v512, 80
      %v523 = vadd.s32 %v512, 88
      %v524 = vadd.s32 %v512, 96
      %v525 = vadd.s32 %v512, 104
      %v526 = vadd.s32 %v512, 112
      %v527 = vadd.s32 %v512, 120
      %v528 = vadd.s32 %v512, 128
      %v529 = vadd.s32 %v512, 136
      %v530 = vadd.s32 %v512, 144
      %v531 = vadd.s32 %v512, 152
      %v532 = vadd.s32 %v512, 160
      %v533 = vadd.s32 %v512, 168
      %v534 = vadd.s32 %v512, 176
      %v535 = vadd.s32 %v512, 184
      %v536 = vadd.s32 %v512, 192
      %v537 = vadd.s32 %v512, 200
      %v538 = vadd.s32 %v512, 208
      %v539 = vadd.s32 %v512, 216
      %v540 = vadd.s32 %v512, 224
      %v541 = vadd.s32 %v512, 232
      %v542 = vadd.s32 %v512, 240
      %v543 = vadd.s32 %v512, 248
      %vm544 = vcmp.lt.s32.totalorder %v512, 0
      %v545 = vsub.s32 0, %v512
      %v546 = vsel %vm544, %v545, %v512
      %v547 = vshrl.u32 %v546, 4
      %v548 = vand.u32 %v546, 15
      %v549 = vsub.s32 0, %v548
      %v550 = vsel %vm544, %v549, %v548
      %vm551 = vcmp.lt.s32.totalorder %v513, 0
      %v552 = vsub.s32 0, %v513
      %v553 = vsel %vm551, %v552, %v513
      %v554 = vshrl.u32 %v553, 4
      %v555 = vand.u32 %v553, 15
      %v556 = vsub.s32 0, %v555
      %v557 = vsel %vm551, %v556, %v555
      %vm558 = vcmp.lt.s32.totalorder %v514, 0
      %v559 = vsub.s32 0, %v514
      %v560 = vsel %vm558, %v559, %v514
      %v561 = vshrl.u32 %v560, 4
      %v562 = vand.u32 %v560, 15
      %v563 = vsub.s32 0, %v562
      %v564 = vsel %vm558, %v563, %v562
      %vm565 = vcmp.lt.s32.totalorder %v515, 0
      %v566 = vsub.s32 0, %v515
      %v567 = vsel %vm565, %v566, %v515
      %v568 = vshrl.u32 %v567, 4
      %v569 = vand.u32 %v567, 15
      %v570 = vsub.s32 0, %v569
      %v571 = vsel %vm565, %v570, %v569
      %vm572 = vcmp.lt.s32.totalorder %v516, 0
      %v573 = vsub.s32 0, %v516
      %v574 = vsel %vm572, %v573, %v516
      %v575 = vshrl.u32 %v574, 4
      %v576 = vand.u32 %v574, 15
      %v577 = vsub.s32 0, %v576
      %v578 = vsel %vm572, %v577, %v576
      %vm579 = vcmp.lt.s32.totalorder %v517, 0
      %v580 = vsub.s32 0, %v517
      %v581 = vsel %vm579, %v580, %v517
      %v582 = vshrl.u32 %v581, 4
      %v583 = vand.u32 %v581, 15
      %v584 = vsub.s32 0, %v583
      %v585 = vsel %vm579, %v584, %v583
      %vm586 = vcmp.lt.s32.totalorder %v518, 0
      %v587 = vsub.s32 0, %v518
      %v588 = vsel %vm586, %v587, %v518
      %v589 = vshrl.u32 %v588, 4
      %v590 = vand.u32 %v588, 15
      %v591 = vsub.s32 0, %v590
      %v592 = vsel %vm586, %v591, %v590
      %vm593 = vcmp.lt.s32.totalorder %v519, 0
      %v594 = vsub.s32 0, %v519
      %v595 = vsel %vm593, %v594, %v519
      %v596 = vshrl.u32 %v595, 4
      %v597 = vand.u32 %v595, 15
      %v598 = vsub.s32 0, %v597
      %v599 = vsel %vm593, %v598, %v597
      %vm600 = vcmp.lt.s32.totalorder %v520, 0
      %v601 = vsub.s32 0, %v520
      %v602 = vsel %vm600, %v601, %v520
      %v603 = vshrl.u32 %v602, 4
      %v604 = vand.u32 %v602, 15
      %v605 = vsub.s32 0, %v604
      %v606 = vsel %vm600, %v605, %v604
      %vm607 = vcmp.lt.s32.totalorder %v521, 0
      %v608 = vsub.s32 0, %v521
      %v609 = vsel %vm607, %v608, %v521
      %v610 = vshrl.u32 %v609, 4
      %v611 = vand.u32 %v609, 15
      %v612 = vsub.s32 0, %v611
      %v613 = vsel %vm607, %v612, %v611
      %vm614 = vcmp.lt.s32.totalorder %v522, 0
      %v615 = vsub.s32 0, %v522
      %v616 = vsel %vm614, %v615, %v522
      %v617 = vshrl.u32 %v616, 4
      %v618 = vand.u32 %v616, 15
      %v619 = vsub.s32 0, %v618
      %v620 = vsel %vm614, %v619, %v618
      %vm621 = vcmp.lt.s32.totalorder %v523, 0
      %v622 = vsub.s32 0, %v523
      %v623 = vsel %vm621, %v622, %v523
      %v624 = vshrl.u32 %v623, 4
      %v625 = vand.u32 %v623, 15
      %v626 = vsub.s32 0, %v625
      %v627 = vsel %vm621, %v626, %v625
      %vm628 = vcmp.lt.s32.totalorder %v524, 0
      %v629 = vsub.s32 0, %v524
      %v630 = vsel %vm628, %v629, %v524
      %v631 = vshrl.u32 %v630, 4
      %v632 = vand.u32 %v630, 15
      %v633 = vsub.s32 0, %v632
      %v634 = vsel %vm628, %v633, %v632
      %vm635 = vcmp.lt.s32.totalorder %v525, 0
      %v636 = vsub.s32 0, %v525
      %v637 = vsel %vm635, %v636, %v525
      %v638 = vshrl.u32 %v637, 4
      %v639 = vand.u32 %v637, 15
      %v640 = vsub.s32 0, %v639
      %v641 = vsel %vm635, %v640, %v639
      %vm642 = vcmp.lt.s32.totalorder %v526, 0
      %v643 = vsub.s32 0, %v526
      %v644 = vsel %vm642, %v643, %v526
      %v645 = vshrl.u32 %v644, 4
      %v646 = vand.u32 %v644, 15
      %v647 = vsub.s32 0, %v646
      %v648 = vsel %vm642, %v647, %v646
      %vm649 = vcmp.lt.s32.totalorder %v527, 0
      %v650 = vsub.s32 0, %v527
      %v651 = vsel %vm649, %v650, %v527
      %v652 = vshrl.u32 %v651, 4
      %v653 = vand.u32 %v651, 15
      %v654 = vsub.s32 0, %v653
      %v655 = vsel %vm649, %v654, %v653
      %vm656 = vcmp.lt.s32.totalorder %v528, 0
      %v657 = vsub.s32 0, %v528
      %v658 = vsel %vm656, %v657, %v528
      %v659 = vshrl.u32 %v658, 4
      %v660 = vand.u32 %v658, 15
      %v661 = vsub.s32 0, %v660
      %v662 = vsel %vm656, %v661, %v660
      %vm663 = vcmp.lt.s32.totalorder %v529, 0
      %v664 = vsub.s32 0, %v529
      %v665 = vsel %vm663, %v664, %v529
      %v666 = vshrl.u32 %v665, 4
      %v667 = vand.u32 %v665, 15
      %v668 = vsub.s32 0, %v667
      %v669 = vsel %vm663, %v668, %v667
      %vm670 = vcmp.lt.s32.totalorder %v530, 0
      %v671 = vsub.s32 0, %v530
      %v672 = vsel %vm670, %v671, %v530
      %v673 = vshrl.u32 %v672, 4
      %v674 = vand.u32 %v672, 15
      %v675 = vsub.s32 0, %v674
      %v676 = vsel %vm670, %v675, %v674
      %vm677 = vcmp.lt.s32.totalorder %v531, 0
      %v678 = vsub.s32 0, %v531
      %v679 = vsel %vm677, %v678, %v531
      %v680 = vshrl.u32 %v679, 4
      %v681 = vand.u32 %v679, 15
      %v682 = vsub.s32 0, %v681
      %v683 = vsel %vm677, %v682, %v681
      %vm684 = vcmp.lt.s32.totalorder %v532, 0
      %v685 = vsub.s32 0, %v532
      %v686 = vsel %vm684, %v685, %v532
      %v687 = vshrl.u32 %v686, 4
      %v688 = vand.u32 %v686, 15
      %v689 = vsub.s32 0, %v688
      %v690 = vsel %vm684, %v689, %v688
      %vm691 = vcmp.lt.s32.totalorder %v533, 0
      %v692 = vsub.s32 0, %v533
      %v693 = vsel %vm691, %v692, %v533
      %v694 = vshrl.u32 %v693, 4
      %v695 = vand.u32 %v693, 15
      %v696 = vsub.s32 0, %v695
      %v697 = vsel %vm691, %v696, %v695
      %vm698 = vcmp.lt.s32.totalorder %v534, 0
      %v699 = vsub.s32 0, %v534
      %v700 = vsel %vm698, %v699, %v534
      %v701 = vshrl.u32 %v700, 4
      %v702 = vand.u32 %v700, 15
      %v703 = vsub.s32 0, %v702
      %v704 = vsel %vm698, %v703, %v702
      %vm705 = vcmp.lt.s32.totalorder %v535, 0
      %v706 = vsub.s32 0, %v535
      %v707 = vsel %vm705, %v706, %v535
      %v708 = vshrl.u32 %v707, 4
      %v709 = vand.u32 %v707, 15
      %v710 = vsub.s32 0, %v709
      %v711 = vsel %vm705, %v710, %v709
      %vm712 = vcmp.lt.s32.totalorder %v536, 0
      %v713 = vsub.s32 0, %v536
      %v714 = vsel %vm712, %v713, %v536
      %v715 = vshrl.u32 %v714, 4
      %v716 = vand.u32 %v714, 15
      %v717 = vsub.s32 0, %v716
      %v718 = vsel %vm712, %v717, %v716
      %vm719 = vcmp.lt.s32.totalorder %v537, 0
      %v720 = vsub.s32 0, %v537
      %v721 = vsel %vm719, %v720, %v537
      %v722 = vshrl.u32 %v721, 4
      %v723 = vand.u32 %v721, 15
      %v724 = vsub.s32 0, %v723
      %v725 = vsel %vm719, %v724, %v723
      %vm726 = vcmp.lt.s32.totalorder %v538, 0
      %v727 = vsub.s32 0, %v538
      %v728 = vsel %vm726, %v727, %v538
      %v729 = vshrl.u32 %v728, 4
      %v730 = vand.u32 %v728, 15
      %v731 = vsub.s32 0, %v730
      %v732 = vsel %vm726, %v731, %v730
      %vm733 = vcmp.lt.s32.totalorder %v539, 0
      %v734 = vsub.s32 0, %v539
      %v735 = vsel %vm733, %v734, %v539
      %v736 = vshrl.u32 %v735, 4
      %v737 = vand.u32 %v735, 15
      %v738 = vsub.s32 0, %v737
      %v739 = vsel %vm733, %v738, %v737
      %vm740 = vcmp.lt.s32.totalorder %v540, 0
      %v741 = vsub.s32 0, %v540
      %v742 = vsel %vm740, %v741, %v540
      %v743 = vshrl.u32 %v742, 4
      %v744 = vand.u32 %v742, 15
      %v745 = vsub.s32 0, %v744
      %v746 = vsel %vm740, %v745, %v744
      %vm747 = vcmp.lt.s32.totalorder %v541, 0
      %v748 = vsub.s32 0, %v541
      %v749 = vsel %vm747, %v748, %v541
      %v750 = vshrl.u32 %v749, 4
      %v751 = vand.u32 %v749, 15
      %v752 = vsub.s32 0, %v751
      %v753 = vsel %vm747, %v752, %v751
      %vm754 = vcmp.lt.s32.totalorder %v542, 0
      %v755 = vsub.s32 0, %v542
      %v756 = vsel %vm754, %v755, %v542
      %v757 = vshrl.u32 %v756, 4
      %v758 = vand.u32 %v756, 15
      %v759 = vsub.s32 0, %v758
      %v760 = vsel %vm754, %v759, %v758
      %vm761 = vcmp.lt.s32.totalorder %v543, 0
      %v762 = vsub.s32 0, %v543
      %v763 = vsel %vm761, %v762, %v543
      %v764 = vshrl.u32 %v763, 4
      %v765 = vand.u32 %v763, 15
      %v766 = vsub.s32 0, %v765
      %v767 = vsel %vm761, %v766, %v765
      %vm768 = vcmp.ne.s32.totalorder %v550, 0
      %vm769 = vcmp.ne.s32.totalorder %v557, 0
      %vm770 = vcmp.ne.s32.totalorder %v564, 0
      %vm771 = vcmp.ne.s32.totalorder %v571, 0
      %vm772 = vcmp.ne.s32.totalorder %v578, 0
      %vm773 = vcmp.ne.s32.totalorder %v585, 0
      %vm774 = vcmp.ne.s32.totalorder %v592, 0
      %vm775 = vcmp.ne.s32.totalorder %v599, 0
      %vm776 = vcmp.ne.s32.totalorder %v606, 0
      %vm777 = vcmp.ne.s32.totalorder %v613, 0
      %vm778 = vcmp.ne.s32.totalorder %v620, 0
      %vm779 = vcmp.ne.s32.totalorder %v627, 0
      %vm780 = vcmp.ne.s32.totalorder %v634, 0
      %vm781 = vcmp.ne.s32.totalorder %v641, 0
      %vm782 = vcmp.ne.s32.totalorder %v648, 0
      %vm783 = vcmp.ne.s32.totalorder %v655, 0
      %vm784 = vcmp.ne.s32.totalorder %v662, 0
      %vm785 = vcmp.ne.s32.totalorder %v669, 0
      %vm786 = vcmp.ne.s32.totalorder %v676, 0
      %vm787 = vcmp.ne.s32.totalorder %v683, 0
      %vm788 = vcmp.ne.s32.totalorder %v690, 0
      %vm789 = vcmp.ne.s32.totalorder %v697, 0
      %vm790 = vcmp.ne.s32.totalorder %v704, 0
      %vm791 = vcmp.ne.s32.totalorder %v711, 0
      %vm792 = vcmp.ne.s32.totalorder %v718, 0
      %vm793 = vcmp.ne.s32.totalorder %v725, 0
      %vm794 = vcmp.ne.s32.totalorder %v732, 0
      %vm795 = vcmp.ne.s32.totalorder %v739, 0
      %vm796 = vcmp.ne.s32.totalorder %v746, 0
      %vm797 = vcmp.ne.s32.totalorder %v753, 0
      %vm798 = vcmp.ne.s32.totalorder %v760, 0
      %vm799 = vcmp.ne.s32.totalorder %v767, 0
      %vm800 = vcmp.lt.s32.totalorder %v550, 0
      %vm801 = vcmp.lt.s32.totalorder %v557, 0
      %vm802 = vcmp.lt.s32.totalorder %v564, 0
      %vm803 = vcmp.lt.s32.totalorder %v571, 0
      %vm804 = vcmp.lt.s32.totalorder %v578, 0
      %vm805 = vcmp.lt.s32.totalorder %v585, 0
      %vm806 = vcmp.lt.s32.totalorder %v592, 0
      %vm807 = vcmp.lt.s32.totalorder %v599, 0
      %vm808 = vcmp.lt.s32.totalorder %v606, 0
      %vm809 = vcmp.lt.s32.totalorder %v613, 0
      %vm810 = vcmp.lt.s32.totalorder %v620, 0
      %vm811 = vcmp.lt.s32.totalorder %v627, 0
      %vm812 = vcmp.lt.s32.totalorder %v634, 0
      %vm813 = vcmp.lt.s32.totalorder %v641, 0
      %vm814 = vcmp.lt.s32.totalorder %v648, 0
      %vm815 = vcmp.lt.s32.totalorder %v655, 0
      %vm816 = vcmp.lt.s32.totalorder %v662, 0
      %vm817 = vcmp.lt.s32.totalorder %v669, 0
      %vm818 = vcmp.lt.s32.totalorder %v676, 0
      %vm819 = vcmp.lt.s32.totalorder %v683, 0
      %vm820 = vcmp.lt.s32.totalorder %v690, 0
      %vm821 = vcmp.lt.s32.totalorder %v697, 0
      %vm822 = vcmp.lt.s32.totalorder %v704, 0
      %vm823 = vcmp.lt.s32.totalorder %v711, 0
      %vm824 = vcmp.lt.s32.totalorder %v718, 0
      %vm825 = vcmp.lt.s32.totalorder %v725, 0
      %vm826 = vcmp.lt.s32.totalorder %v732, 0
      %vm827 = vcmp.lt.s32.totalorder %v739, 0
      %vm828 = vcmp.lt.s32.totalorder %v746, 0
      %vm829 = vcmp.lt.s32.totalorder %v753, 0
      %vm830 = vcmp.lt.s32.totalorder %v760, 0
      %vm831 = vcmp.lt.s32.totalorder %v767, 0
      %vm832 = vmand %vm800, %vm768
      %vm833 = vmand %vm801, %vm769
      %vm834 = vmand %vm802, %vm770
      %vm835 = vmand %vm803, %vm771
      %vm836 = vmand %vm804, %vm772
      %vm837 = vmand %vm805, %vm773
      %vm838 = vmand %vm806, %vm774
      %vm839 = vmand %vm807, %vm775
      %vm840 = vmand %vm808, %vm776
      %vm841 = vmand %vm809, %vm777
      %vm842 = vmand %vm810, %vm778
      %vm843 = vmand %vm811, %vm779
      %vm844 = vmand %vm812, %vm780
      %vm845 = vmand %vm813, %vm781
      %vm846 = vmand %vm814, %vm782
      %vm847 = vmand %vm815, %vm783
      %vm848 = vmand %vm816, %vm784
      %vm849 = vmand %vm817, %vm785
      %vm850 = vmand %vm818, %vm786
      %vm851 = vmand %vm819, %vm787
      %vm852 = vmand %vm820, %vm788
      %vm853 = vmand %vm821, %vm789
      %vm854 = vmand %vm822, %vm790
      %vm855 = vmand %vm823, %vm791
      %vm856 = vmand %vm824, %vm792
      %vm857 = vmand %vm825, %vm793
      %vm858 = vmand %vm826, %vm794
      %vm859 = vmand %vm827, %vm795
      %vm860 = vmand %vm828, %vm796
      %vm861 = vmand %vm829, %vm797
      %vm862 = vmand %vm830, %vm798
      %vm863 = vmand %vm831, %vm799
      %v864 = vadd.s32 %v550, 16
      %v865 = vadd.s32 %v557, 16
      %v866 = vadd.s32 %v564, 16
      %v867 = vadd.s32 %v571, 16
      %v868 = vadd.s32 %v578, 16
      %v869 = vadd.s32 %v585, 16
      %v870 = vadd.s32 %v592, 16
      %v871 = vadd.s32 %v599, 16
      %v872 = vadd.s32 %v606, 16
      %v873 = vadd.s32 %v613, 16
      %v874 = vadd.s32 %v620, 16
      %v875 = vadd.s32 %v627, 16
      %v876 = vadd.s32 %v634, 16
      %v877 = vadd.s32 %v641, 16
      %v878 = vadd.s32 %v648, 16
      %v879 = vadd.s32 %v655, 16
      %v880 = vadd.s32 %v662, 16
      %v881 = vadd.s32 %v669, 16
      %v882 = vadd.s32 %v676, 16
      %v883 = vadd.s32 %v683, 16
      %v884 = vadd.s32 %v690, 16
      %v885 = vadd.s32 %v697, 16
      %v886 = vadd.s32 %v704, 16
      %v887 = vadd.s32 %v711, 16
      %v888 = vadd.s32 %v718, 16
      %v889 = vadd.s32 %v725, 16
      %v890 = vadd.s32 %v732, 16
      %v891 = vadd.s32 %v739, 16
      %v892 = vadd.s32 %v746, 16
      %v893 = vadd.s32 %v753, 16
      %v894 = vadd.s32 %v760, 16
      %v895 = vadd.s32 %v767, 16
      %v896 = vsel %vm832, %v864, %v550
      %v897 = vsel %vm833, %v865, %v557
      %v898 = vsel %vm834, %v866, %v564
      %v899 = vsel %vm835, %v867, %v571
      %v900 = vsel %vm836, %v868, %v578
      %v901 = vsel %vm837, %v869, %v585
      %v902 = vsel %vm838, %v870, %v592
      %v903 = vsel %vm839, %v871, %v599
      %v904 = vsel %vm840, %v872, %v606
      %v905 = vsel %vm841, %v873, %v613
      %v906 = vsel %vm842, %v874, %v620
      %v907 = vsel %vm843, %v875, %v627
      %v908 = vsel %vm844, %v876, %v634
      %v909 = vsel %vm845, %v877, %v641
      %v910 = vsel %vm846, %v878, %v648
      %v911 = vsel %vm847, %v879, %v655
      %v912 = vsel %vm848, %v880, %v662
      %v913 = vsel %vm849, %v881, %v669
      %v914 = vsel %vm850, %v882, %v676
      %v915 = vsel %vm851, %v883, %v683
      %v916 = vsel %vm852, %v884, %v690
      %v917 = vsel %vm853, %v885, %v697
      %v918 = vsel %vm854, %v886, %v704
      %v919 = vsel %vm855, %v887, %v711
      %v920 = vsel %vm856, %v888, %v718
      %v921 = vsel %vm857, %v889, %v725
      %v922 = vsel %vm858, %v890, %v732
      %v923 = vsel %vm859, %v891, %v739
      %v924 = vsel %vm860, %v892, %v746
      %v925 = vsel %vm861, %v893, %v753
      %v926 = vsel %vm862, %v894, %v760
      %v927 = vsel %vm863, %v895, %v767
      %vm928 = vcmp.ge.s32.totalorder %v896, 1
      %vm929 = vcmp.ge.s32.totalorder %v897, 1
      %vm930 = vcmp.ge.s32.totalorder %v898, 1
      %vm931 = vcmp.ge.s32.totalorder %v899, 1
      %vm932 = vcmp.ge.s32.totalorder %v900, 1
      %vm933 = vcmp.ge.s32.totalorder %v901, 1
      %vm934 = vcmp.ge.s32.totalorder %v902, 1
      %vm935 = vcmp.ge.s32.totalorder %v903, 1
      %vm936 = vcmp.ge.s32.totalorder %v904, 1
      %vm937 = vcmp.ge.s32.totalorder %v905, 1
      %vm938 = vcmp.ge.s32.totalorder %v906, 1
      %vm939 = vcmp.ge.s32.totalorder %v907, 1
      %vm940 = vcmp.ge.s32.totalorder %v908, 1
      %vm941 = vcmp.ge.s32.totalorder %v909, 1
      %vm942 = vcmp.ge.s32.totalorder %v910, 1
      %vm943 = vcmp.ge.s32.totalorder %v911, 1
      %vm944 = vcmp.ge.s32.totalorder %v912, 1
      %vm945 = vcmp.ge.s32.totalorder %v913, 1
      %vm946 = vcmp.ge.s32.totalorder %v914, 1
      %vm947 = vcmp.ge.s32.totalorder %v915, 1
      %vm948 = vcmp.ge.s32.totalorder %v916, 1
      %vm949 = vcmp.ge.s32.totalorder %v917, 1
      %vm950 = vcmp.ge.s32.totalorder %v918, 1
      %vm951 = vcmp.ge.s32.totalorder %v919, 1
      %vm952 = vcmp.ge.s32.totalorder %v920, 1
      %vm953 = vcmp.ge.s32.totalorder %v921, 1
      %vm954 = vcmp.ge.s32.totalorder %v922, 1
      %vm955 = vcmp.ge.s32.totalorder %v923, 1
      %vm956 = vcmp.ge.s32.totalorder %v924, 1
      %vm957 = vcmp.ge.s32.totalorder %v925, 1
      %vm958 = vcmp.ge.s32.totalorder %v926, 1
      %vm959 = vcmp.ge.s32.totalorder %v927, 1
      %vm960 = vmpackc.low %vm930, %vm930
      %vm961 = vmpackc.low %vm931, %vm931
      %vm962 = vmpackc.low %vm932, %vm932
      %vm963 = vmpackc.low %vm933, %vm933
      %vm964 = vmpackc.low %vm934, %vm934
      %vm965 = vmpackc.low %vm935, %vm935
      %vm966 = vmpackc.low %vm936, %vm936
      %vm967 = vmpackc.low %vm937, %vm937
      %vm968 = vmpackc.low %vm938, %vm938
      %vm969 = vmpackc.low %vm939, %vm939
      %vm970 = vmpackc.low %vm940, %vm940
      %vm971 = vmpackc.low %vm941, %vm941
      %vm972 = vmpackc.low %vm942, %vm942
      %vm973 = vmpackc.low %vm943, %vm943
      %vm974 = vmpackc.low %vm944, %vm944
      %vm975 = vmpackc.low %vm945, %vm945
      %vm976 = vmpackc.low %vm946, %vm946
      %vm977 = vmpackc.low %vm947, %vm947
      %vm978 = vmpackc.low %vm948, %vm948
      %vm979 = vmpackc.low %vm949, %vm949
      %vm980 = vmpackc.low %vm950, %vm950
      %vm981 = vmpackc.low %vm951, %vm951
      %vm982 = vmpackc.low %vm952, %vm952
      %vm983 = vmpackc.low %vm953, %vm953
      %vm984 = vmpackc.low %vm954, %vm954
      %vm985 = vmpackc.low %vm955, %vm955
      %vm986 = vmpackc.low %vm956, %vm956
      %vm987 = vmpackc.low %vm957, %vm957
      %vm988 = vmpackc.low %vm958, %vm958
      %vm989 = vmpackc.low %vm959, %vm959
      %v990 = vsel %vm960, 65537, 0
      %v991 = vsel %vm961, 65537, 0
      %v992 = vsel %vm962, 65537, 0
      %v993 = vsel %vm963, 65537, 0
      %v994 = vsel %vm964, 65537, 0
      %v995 = vsel %vm965, 65537, 0
      %v996 = vsel %vm966, 65537, 0
      %v997 = vsel %vm967, 65537, 0
      %v998 = vsel %vm968, 65537, 0
      %v999 = vsel %vm969, 65537, 0
      %v1000 = vsel %vm970, 65537, 0
      %v1001 = vsel %vm971, 65537, 0
      %v1002 = vsel %vm972, 65537, 0
      %v1003 = vsel %vm973, 65537, 0
      %v1004 = vsel %vm974, 65537, 0
      %v1005 = vsel %vm975, 65537, 0
      %v1006 = vsel %vm976, 65537, 0
      %v1007 = vsel %vm977, 65537, 0
      %v1008 = vsel %vm978, 65537, 0
      %v1009 = vsel %vm979, 65537, 0
      %v1010 = vsel %vm980, 65537, 0
      %v1011 = vsel %vm981, 65537, 0
      %v1012 = vsel %vm982, 65537, 0
      %v1013 = vsel %vm983, 65537, 0
      %v1014 = vsel %vm984, 65537, 0
      %v1015 = vsel %vm985, 65537, 0
      %v1016 = vsel %vm986, 65537, 0
      %v1017 = vsel %vm987, 65537, 0
      %v1018 = vsel %vm988, 65537, 0
      %v1019 = vsel %vm989, 65537, 0
      %v1020 = vunpack.c.l.b16 %v990
      %v1021 = vunpack.c.l.b16 %v991
      %v1022 = vunpack.c.l.b16 %v992
      %v1023 = vunpack.c.l.b16 %v993
      %v1024 = vunpack.c.l.b16 %v994
      %v1025 = vunpack.c.l.b16 %v995
      %v1026 = vunpack.c.l.b16 %v996
      %v1027 = vunpack.c.l.b16 %v997
      %v1028 = vunpack.c.l.b16 %v998
      %v1029 = vunpack.c.l.b16 %v999
      %v1030 = vunpack.c.l.b16 %v1000
      %v1031 = vunpack.c.l.b16 %v1001
      %v1032 = vunpack.c.l.b16 %v1002
      %v1033 = vunpack.c.l.b16 %v1003
      %v1034 = vunpack.c.l.b16 %v1004
      %v1035 = vunpack.c.l.b16 %v1005
      %v1036 = vunpack.c.l.b16 %v1006
      %v1037 = vunpack.c.l.b16 %v1007
      %v1038 = vunpack.c.l.b16 %v1008
      %v1039 = vunpack.c.l.b16 %v1009
      %v1040 = vunpack.c.l.b16 %v1010
      %v1041 = vunpack.c.l.b16 %v1011
      %v1042 = vunpack.c.l.b16 %v1012
      %v1043 = vunpack.c.l.b16 %v1013
      %v1044 = vunpack.c.l.b16 %v1014
      %v1045 = vunpack.c.l.b16 %v1015
      %v1046 = vunpack.c.l.b16 %v1016
      %v1047 = vunpack.c.l.b16 %v1017
      %v1048 = vunpack.c.l.b16 %v1018
      %v1049 = vunpack.c.l.b16 %v1019
      %v1050 = vpack.c.b16 %v1021, %v1020
      %v1051 = vpack.c.b16 %v1023, %v1022
      %v1052 = vpack.c.b16 %v1025, %v1024
      %v1053 = vpack.c.b16 %v1027, %v1026
      %v1054 = vpack.c.b16 %v1029, %v1028
      %v1055 = vpack.c.b16 %v1031, %v1030
      %v1056 = vpack.c.b16 %v1033, %v1032
      %v1057 = vpack.c.b16 %v1035, %v1034
      %v1058 = vpack.c.b16 %v1037, %v1036
      %v1059 = vpack.c.b16 %v1039, %v1038
      %v1060 = vpack.c.b16 %v1041, %v1040
      %v1061 = vpack.c.b16 %v1043, %v1042
      %v1062 = vpack.c.b16 %v1045, %v1044
      %v1063 = vpack.c.b16 %v1047, %v1046
      %v1064 = vpack.c.b16 %v1049, %v1048
      %vm1065 = vsmask.f32 7424
      %v1067 = vshrl.u32 %v1050, 16
      %v1069 = vshll.u32 %v1050, 16
      %v1071 = vrot.slane %v1069, 1
      %v1072 = vor.u32 %v1067, %v1071
      %v1074 = vshll.u32 %v1051, 16
      %v1076 = vrot.slane %v1074, 1
      %v1077 = vsel %vm1065, %v1072, %v1076
      %v1078 = vshrl.u32 %v1051, 16
      %v1080 = vor.u32 %v1078, %v1076
      %v1082 = vshll.u32 %v1052, 16
      %v1084 = vrot.slane %v1082, 1
      %v1085 = vsel %vm1065, %v1080, %v1084
      %v1086 = vshrl.u32 %v1052, 16
      %v1088 = vor.u32 %v1086, %v1084
      %v1090 = vshll.u32 %v1053, 16
      %v1092 = vrot.slane %v1090, 1
      %v1093 = vsel %vm1065, %v1088, %v1092
      %v1094 = vshrl.u32 %v1053, 16
      %v1096 = vor.u32 %v1094, %v1092
      %v1098 = vshll.u32 %v1054, 16
      %v1100 = vrot.slane %v1098, 1
      %v1101 = vsel %vm1065, %v1096, %v1100
      %v1102 = vshrl.u32 %v1054, 16
      %v1104 = vor.u32 %v1102, %v1100
      %v1106 = vshll.u32 %v1055, 16
      %v1108 = vrot.slane %v1106, 1
      %v1109 = vsel %vm1065, %v1104, %v1108
      %v1110 = vshrl.u32 %v1055, 16
      %v1112 = vor.u32 %v1110, %v1108
      %v1114 = vshll.u32 %v1056, 16
      %v1116 = vrot.slane %v1114, 1
      %v1117 = vsel %vm1065, %v1112, %v1116
      %v1118 = vshrl.u32 %v1056, 16
      %v1120 = vor.u32 %v1118, %v1116
      %v1122 = vshll.u32 %v1057, 16
      %v1124 = vrot.slane %v1122, 1
      %v1125 = vsel %vm1065, %v1120, %v1124
      %v1126 = vshrl.u32 %v1057, 16
      %v1128 = vor.u32 %v1126, %v1124
      %v1130 = vshll.u32 %v1058, 16
      %v1132 = vrot.slane %v1130, 1
      %v1133 = vsel %vm1065, %v1128, %v1132
      %v1134 = vshrl.u32 %v1058, 16
      %v1136 = vor.u32 %v1134, %v1132
      %v1138 = vshll.u32 %v1059, 16
      %v1140 = vrot.slane %v1138, 1
      %v1141 = vsel %vm1065, %v1136, %v1140
      %v1142 = vshrl.u32 %v1059, 16
      %v1144 = vor.u32 %v1142, %v1140
      %v1146 = vshll.u32 %v1060, 16
      %v1148 = vrot.slane %v1146, 1
      %v1149 = vsel %vm1065, %v1144, %v1148
      %v1150 = vshrl.u32 %v1060, 16
      %v1152 = vor.u32 %v1150, %v1148
      %v1154 = vshll.u32 %v1061, 16
      %v1156 = vrot.slane %v1154, 1
      %v1157 = vsel %vm1065, %v1152, %v1156
      %v1158 = vshrl.u32 %v1061, 16
      %v1160 = vor.u32 %v1158, %v1156
      %v1162 = vshll.u32 %v1062, 16
      %v1164 = vrot.slane %v1162, 1
      %v1165 = vsel %vm1065, %v1160, %v1164
      %v1166 = vshrl.u32 %v1062, 16
      %v1168 = vor.u32 %v1166, %v1164
      %v1170 = vshll.u32 %v1063, 16
      %v1172 = vrot.slane %v1170, 1
      %v1173 = vsel %vm1065, %v1168, %v1172
      %v1174 = vshrl.u32 %v1063, 16
      %v1176 = vor.u32 %v1174, %v1172
      %v1178 = vshll.u32 %v1064, 16
      %v1180 = vrot.slane %v1178, 1
      %v1181 = vsel %vm1065, %v1176, %v1180
      %v1182 = vshrl.u32 %v1064, 16
      %v1184 = vor.u32 %v1182, %v1180
      %vm1185 = vcmp.ne.s16.totalorder %v1077, 0
      %vm1186 = vcmp.ne.s16.totalorder %v1085, 0
      %vm1187 = vcmp.ne.s16.totalorder %v1093, 0
      %vm1188 = vcmp.ne.s16.totalorder %v1101, 0
      %vm1189 = vcmp.ne.s16.totalorder %v1109, 0
      %vm1190 = vcmp.ne.s16.totalorder %v1117, 0
      %vm1191 = vcmp.ne.s16.totalorder %v1125, 0
      %vm1192 = vcmp.ne.s16.totalorder %v1133, 0
      %vm1193 = vcmp.ne.s16.totalorder %v1141, 0
      %vm1194 = vcmp.ne.s16.totalorder %v1149, 0
      %vm1195 = vcmp.ne.s16.totalorder %v1157, 0
      %vm1196 = vcmp.ne.s16.totalorder %v1165, 0
      %vm1197 = vcmp.ne.s16.totalorder %v1173, 0
      %vm1198 = vcmp.ne.s16.totalorder %v1181, 0
      %vm1199 = vcmp.ne.s16.totalorder %v1184, 0
      %v1200 = vsel %vm1185, %v479, 0
      %v1201 = vsel %vm1186, %v480, 0
      %v1202 = vsel %vm1187, %v481, 0
      %v1203 = vsel %vm1188, %v482, 0
      %v1204 = vsel %vm1189, %v483, 0
      %v1205 = vsel %vm1190, %v484, 0
      %v1206 = vsel %vm1191, %v485, 0
      %v1207 = vsel %vm1192, %v486, 0
      %v1208 = vsel %vm1193, %v487, 0
      %v1209 = vsel %vm1194, %v488, 0
      %v1210 = vsel %vm1195, %v489, 0
      %v1211 = vsel %vm1196, %v490, 0
      %v1212 = vsel %vm1197, %v491, 0
      %v1213 = vsel %vm1198, %v492, 0
      %v1214 = vsel %vm1199, %v493, 0
      %vm1215 = vcmp.le.s32.totalorder %v896, 14
      %vm1216 = vcmp.le.s32.totalorder %v897, 14
      %vm1217 = vcmp.le.s32.totalorder %v898, 14
      %vm1218 = vcmp.le.s32.totalorder %v899, 14
      %vm1219 = vcmp.le.s32.totalorder %v900, 14
      %vm1220 = vcmp.le.s32.totalorder %v901, 14
      %vm1221 = vcmp.le.s32.totalorder %v902, 14
      %vm1222 = vcmp.le.s32.totalorder %v903, 14
      %vm1223 = vcmp.le.s32.totalorder %v904, 14
      %vm1224 = vcmp.le.s32.totalorder %v905, 14
      %vm1225 = vcmp.le.s32.totalorder %v906, 14
      %vm1226 = vcmp.le.s32.totalorder %v907, 14
      %vm1227 = vcmp.le.s32.totalorder %v908, 14
      %vm1228 = vcmp.le.s32.totalorder %v909, 14
      %vm1229 = vcmp.le.s32.totalorder %v910, 14
      %vm1230 = vcmp.le.s32.totalorder %v911, 14
      %vm1231 = vcmp.le.s32.totalorder %v912, 14
      %vm1232 = vcmp.le.s32.totalorder %v913, 14
      %vm1233 = vcmp.le.s32.totalorder %v914, 14
      %vm1234 = vcmp.le.s32.totalorder %v915, 14
      %vm1235 = vcmp.le.s32.totalorder %v916, 14
      %vm1236 = vcmp.le.s32.totalorder %v917, 14
      %vm1237 = vcmp.le.s32.totalorder %v918, 14
      %vm1238 = vcmp.le.s32.totalorder %v919, 14
      %vm1239 = vcmp.le.s32.totalorder %v920, 14
      %vm1240 = vcmp.le.s32.totalorder %v921, 14
      %vm1241 = vcmp.le.s32.totalorder %v922, 14
      %vm1242 = vcmp.le.s32.totalorder %v923, 14
      %vm1243 = vcmp.le.s32.totalorder %v924, 14
      %vm1244 = vcmp.le.s32.totalorder %v925, 14
      %vm1245 = vcmp.le.s32.totalorder %v926, 14
      %vm1246 = vcmp.le.s32.totalorder %v927, 14
      %vm1247 = vmpackc.low %vm1215, %vm1215
      %vm1248 = vmpackc.low %vm1216, %vm1216
      %vm1249 = vmpackc.low %vm1217, %vm1217
      %vm1250 = vmpackc.low %vm1218, %vm1218
      %vm1251 = vmpackc.low %vm1219, %vm1219
      %vm1252 = vmpackc.low %vm1220, %vm1220
      %vm1253 = vmpackc.low %vm1221, %vm1221
      %vm1254 = vmpackc.low %vm1222, %vm1222
      %vm1255 = vmpackc.low %vm1223, %vm1223
      %vm1256 = vmpackc.low %vm1224, %vm1224
      %vm1257 = vmpackc.low %vm1225, %vm1225
      %vm1258 = vmpackc.low %vm1226, %vm1226
      %vm1259 = vmpackc.low %vm1227, %vm1227
      %vm1260 = vmpackc.low %vm1228, %vm1228
      %vm1261 = vmpackc.low %vm1229, %vm1229
      %vm1262 = vmpackc.low %vm1230, %vm1230
      %vm1263 = vmpackc.low %vm1231, %vm1231
      %vm1264 = vmpackc.low %vm1232, %vm1232
      %vm1265 = vmpackc.low %vm1233, %vm1233
      %vm1266 = vmpackc.low %vm1234, %vm1234
      %vm1267 = vmpackc.low %vm1235, %vm1235
      %vm1268 = vmpackc.low %vm1236, %vm1236
      %vm1269 = vmpackc.low %vm1237, %vm1237
      %vm1270 = vmpackc.low %vm1238, %vm1238
      %vm1271 = vmpackc.low %vm1239, %vm1239
      %vm1272 = vmpackc.low %vm1240, %vm1240
      %vm1273 = vmpackc.low %vm1241, %vm1241
      %vm1274 = vmpackc.low %vm1242, %vm1242
      %vm1275 = vmpackc.low %vm1243, %vm1243
      %vm1276 = vmpackc.low %vm1244, %vm1244
      %vm1277 = vmpackc.low %vm1245, %vm1245
      %vm1278 = vmpackc.low %vm1246, %vm1246
      %v1279 = vsel %vm1247, 65537, 0
      %v1280 = vsel %vm1248, 65537, 0
      %v1281 = vsel %vm1249, 65537, 0
      %v1282 = vsel %vm1250, 65537, 0
      %v1283 = vsel %vm1251, 65537, 0
      %v1284 = vsel %vm1252, 65537, 0
      %v1285 = vsel %vm1253, 65537, 0
      %v1286 = vsel %vm1254, 65537, 0
      %v1287 = vsel %vm1255, 65537, 0
      %v1288 = vsel %vm1256, 65537, 0
      %v1289 = vsel %vm1257, 65537, 0
      %v1290 = vsel %vm1258, 65537, 0
      %v1291 = vsel %vm1259, 65537, 0
      %v1292 = vsel %vm1260, 65537, 0
      %v1293 = vsel %vm1261, 65537, 0
      %v1294 = vsel %vm1262, 65537, 0
      %v1295 = vsel %vm1263, 65537, 0
      %v1296 = vsel %vm1264, 65537, 0
      %v1297 = vsel %vm1265, 65537, 0
      %v1298 = vsel %vm1266, 65537, 0
      %v1299 = vsel %vm1267, 65537, 0
      %v1300 = vsel %vm1268, 65537, 0
      %v1301 = vsel %vm1269, 65537, 0
      %v1302 = vsel %vm1270, 65537, 0
      %v1303 = vsel %vm1271, 65537, 0
      %v1304 = vsel %vm1272, 65537, 0
      %v1305 = vsel %vm1273, 65537, 0
      %v1306 = vsel %vm1274, 65537, 0
      %v1307 = vsel %vm1275, 65537, 0
      %v1308 = vsel %vm1276, 65537, 0
      %v1309 = vsel %vm1277, 65537, 0
      %v1310 = vsel %vm1278, 65537, 0
      %v1311 = vunpack.c.l.b16 %v1279
      %v1312 = vunpack.c.l.b16 %v1280
      %v1313 = vunpack.c.l.b16 %v1281
      %v1314 = vunpack.c.l.b16 %v1282
      %v1315 = vunpack.c.l.b16 %v1283
      %v1316 = vunpack.c.l.b16 %v1284
      %v1317 = vunpack.c.l.b16 %v1285
      %v1318 = vunpack.c.l.b16 %v1286
      %v1319 = vunpack.c.l.b16 %v1287
      %v1320 = vunpack.c.l.b16 %v1288
      %v1321 = vunpack.c.l.b16 %v1289
      %v1322 = vunpack.c.l.b16 %v1290
      %v1323 = vunpack.c.l.b16 %v1291
      %v1324 = vunpack.c.l.b16 %v1292
      %v1325 = vunpack.c.l.b16 %v1293
      %v1326 = vunpack.c.l.b16 %v1294
      %v1327 = vunpack.c.l.b16 %v1295
      %v1328 = vunpack.c.l.b16 %v1296
      %v1329 = vunpack.c.l.b16 %v1297
      %v1330 = vunpack.c.l.b16 %v1298
      %v1331 = vunpack.c.l.b16 %v1299
      %v1332 = vunpack.c.l.b16 %v1300
      %v1333 = vunpack.c.l.b16 %v1301
      %v1334 = vunpack.c.l.b16 %v1302
      %v1335 = vunpack.c.l.b16 %v1303
      %v1336 = vunpack.c.l.b16 %v1304
      %v1337 = vunpack.c.l.b16 %v1305
      %v1338 = vunpack.c.l.b16 %v1306
      %v1339 = vunpack.c.l.b16 %v1307
      %v1340 = vunpack.c.l.b16 %v1308
      %v1341 = vunpack.c.l.b16 %v1309
      %v1342 = vunpack.c.l.b16 %v1310
      %v1343 = vpack.c.b16 %v1312, %v1311
      %v1344 = vpack.c.b16 %v1314, %v1313
      %v1345 = vpack.c.b16 %v1316, %v1315
      %v1346 = vpack.c.b16 %v1318, %v1317
      %v1347 = vpack.c.b16 %v1320, %v1319
      %v1348 = vpack.c.b16 %v1322, %v1321
      %v1349 = vpack.c.b16 %v1324, %v1323
      %v1350 = vpack.c.b16 %v1326, %v1325
      %v1351 = vpack.c.b16 %v1328, %v1327
      %v1352 = vpack.c.b16 %v1330, %v1329
      %v1353 = vpack.c.b16 %v1332, %v1331
      %v1354 = vpack.c.b16 %v1334, %v1333
      %v1355 = vpack.c.b16 %v1336, %v1335
      %v1356 = vpack.c.b16 %v1338, %v1337
      %v1357 = vpack.c.b16 %v1340, %v1339
      %v1358 = vpack.c.b16 %v1342, %v1341
      %vm1359 = vsmask.f32 256
      %v1361 = vshrl.u32 %v1343, 16
      %v1363 = vrot.slane %v1361, 7
      %v1365 = vshrl.u32 %v1344, 16
      %v1367 = vrot.slane %v1365, 7
      %v1368 = vshll.u32 %v1344, 16
      %v1370 = vor.u32 %v1367, %v1368
      %v1371 = vsel %vm1359, %v1363, %v1370
      %v1373 = vshrl.u32 %v1345, 16
      %v1375 = vrot.slane %v1373, 7
      %v1376 = vshll.u32 %v1345, 16
      %v1378 = vor.u32 %v1375, %v1376
      %v1379 = vsel %vm1359, %v1367, %v1378
      %v1381 = vshrl.u32 %v1346, 16
      %v1383 = vrot.slane %v1381, 7
      %v1384 = vshll.u32 %v1346, 16
      %v1386 = vor.u32 %v1383, %v1384
      %v1387 = vsel %vm1359, %v1375, %v1386
      %v1389 = vshrl.u32 %v1347, 16
      %v1391 = vrot.slane %v1389, 7
      %v1392 = vshll.u32 %v1347, 16
      %v1394 = vor.u32 %v1391, %v1392
      %v1395 = vsel %vm1359, %v1383, %v1394
      %v1397 = vshrl.u32 %v1348, 16
      %v1399 = vrot.slane %v1397, 7
      %v1400 = vshll.u32 %v1348, 16
      %v1402 = vor.u32 %v1399, %v1400
      %v1403 = vsel %vm1359, %v1391, %v1402
      %v1405 = vshrl.u32 %v1349, 16
      %v1407 = vrot.slane %v1405, 7
      %v1408 = vshll.u32 %v1349, 16
      %v1410 = vor.u32 %v1407, %v1408
      %v1411 = vsel %vm1359, %v1399, %v1410
      %v1413 = vshrl.u32 %v1350, 16
      %v1415 = vrot.slane %v1413, 7
      %v1416 = vshll.u32 %v1350, 16
      %v1418 = vor.u32 %v1415, %v1416
      %v1419 = vsel %vm1359, %v1407, %v1418
      %v1421 = vshrl.u32 %v1351, 16
      %v1423 = vrot.slane %v1421, 7
      %v1424 = vshll.u32 %v1351, 16
      %v1426 = vor.u32 %v1423, %v1424
      %v1427 = vsel %vm1359, %v1415, %v1426
      %v1429 = vshrl.u32 %v1352, 16
      %v1431 = vrot.slane %v1429, 7
      %v1432 = vshll.u32 %v1352, 16
      %v1434 = vor.u32 %v1431, %v1432
      %v1435 = vsel %vm1359, %v1423, %v1434
      %v1437 = vshrl.u32 %v1353, 16
      %v1439 = vrot.slane %v1437, 7
      %v1440 = vshll.u32 %v1353, 16
      %v1442 = vor.u32 %v1439, %v1440
      %v1443 = vsel %vm1359, %v1431, %v1442
      %v1445 = vshrl.u32 %v1354, 16
      %v1447 = vrot.slane %v1445, 7
      %v1448 = vshll.u32 %v1354, 16
      %v1450 = vor.u32 %v1447, %v1448
      %v1451 = vsel %vm1359, %v1439, %v1450
      %v1453 = vshrl.u32 %v1355, 16
      %v1455 = vrot.slane %v1453, 7
      %v1456 = vshll.u32 %v1355, 16
      %v1458 = vor.u32 %v1455, %v1456
      %v1459 = vsel %vm1359, %v1447, %v1458
      %v1461 = vshrl.u32 %v1356, 16
      %v1463 = vrot.slane %v1461, 7
      %v1464 = vshll.u32 %v1356, 16
      %v1466 = vor.u32 %v1463, %v1464
      %v1467 = vsel %vm1359, %v1455, %v1466
      %v1469 = vshrl.u32 %v1357, 16
      %v1471 = vrot.slane %v1469, 7
      %v1472 = vshll.u32 %v1357, 16
      %v1474 = vor.u32 %v1471, %v1472
      %v1475 = vsel %vm1359, %v1463, %v1474
      %v1477 = vshrl.u32 %v1358, 16
      %v1479 = vrot.slane %v1477, 7
      %v1480 = vshll.u32 %v1358, 16
      %v1482 = vor.u32 %v1479, %v1480
      %v1483 = vsel %vm1359, %v1471, %v1482
      %vm1484 = vcmp.ne.s16.totalorder %v1371, 0
      %vm1485 = vcmp.ne.s16.totalorder %v1379, 0
      %vm1486 = vcmp.ne.s16.totalorder %v1387, 0
      %vm1487 = vcmp.ne.s16.totalorder %v1395, 0
      %vm1488 = vcmp.ne.s16.totalorder %v1403, 0
      %vm1489 = vcmp.ne.s16.totalorder %v1411, 0
      %vm1490 = vcmp.ne.s16.totalorder %v1419, 0
      %vm1491 = vcmp.ne.s16.totalorder %v1427, 0
      %vm1492 = vcmp.ne.s16.totalorder %v1435, 0
      %vm1493 = vcmp.ne.s16.totalorder %v1443, 0
      %vm1494 = vcmp.ne.s16.totalorder %v1451, 0
      %vm1495 = vcmp.ne.s16.totalorder %v1459, 0
      %vm1496 = vcmp.ne.s16.totalorder %v1467, 0
      %vm1497 = vcmp.ne.s16.totalorder %v1475, 0
      %vm1498 = vcmp.ne.s16.totalorder %v1483, 0
      %vm1499 = vcmp.ne.s16.totalorder %v1479, 0
      %v1500 = vsel %vm1484, %v479, 0
      %v1501 = vsel %vm1485, %v480, 0
      %v1502 = vsel %vm1486, %v481, 0
      %v1503 = vsel %vm1487, %v482, 0
      %v1504 = vsel %vm1488, %v483, 0
      %v1505 = vsel %vm1489, %v484, 0
      %v1506 = vsel %vm1490, %v485, 0
      %v1507 = vsel %vm1491, %v486, 0
      %v1508 = vsel %vm1492, %v487, 0
      %v1509 = vsel %vm1493, %v488, 0
      %v1510 = vsel %vm1494, %v489, 0
      %v1511 = vsel %vm1495, %v490, 0
      %v1512 = vsel %vm1496, %v491, 0
      %v1513 = vsel %vm1497, %v492, 0
      %v1514 = vsel %vm1498, %v493, 0
      %v1515 = vsel %vm1499, %v494, 0
      %vm1516 = vmpackc.low %vm928, %vm928
      %vm1517 = vmpackc.low %vm929, %vm929
      %v1518 = vsel %vm1516, 65537, 0
      %v1519 = vsel %vm1517, 65537, 0
      %v1520 = vunpack.c.l.b16 %v1518
      %v1521 = vunpack.c.l.b16 %v1519
      %v1522 = vpack.c.b16 %v1521, %v1520
      %v1524 = vshrl.u32 %v1522, 16
      %v1526 = vshll.u32 %v1522, 16
      %v1528 = vrot.slane %v1526, 1
      %v1529 = vor.u32 %v1524, %v1528
      %v1530 = vsel %vm1065, %v1529, %v1071
      %vm1531 = vcmp.ne.s16.totalorder %v1530, 0
      %v1532 = vsel %vm1531, %v479, 0
      %v1533 = vsel %vm1185, %v480, 0
      %v1534 = vsel %vm1186, %v481, 0
      %v1535 = vsel %vm1187, %v482, 0
      %v1536 = vsel %vm1188, %v483, 0
      %v1537 = vsel %vm1189, %v484, 0
      %v1538 = vsel %vm1190, %v485, 0
      %v1539 = vsel %vm1191, %v486, 0
      %v1540 = vsel %vm1192, %v487, 0
      %v1541 = vsel %vm1193, %v488, 0
      %v1542 = vsel %vm1194, %v489, 0
      %v1543 = vsel %vm1195, %v490, 0
      %v1544 = vsel %vm1196, %v491, 0
      %v1545 = vsel %vm1197, %v492, 0
      %v1546 = vsel %vm1198, %v493, 0
      %v1547 = vsel %vm1199, %v494, 0
      %v1548 = vshll.u32 %v1343, 16
      %v1550 = vor.u32 %v1363, %v1548
      %vm1551 = vcmp.ne.s16.totalorder %v1550, 0
      %v1552 = vsel %vm1551, %v479, 0
      %v1553 = vsel %vm1484, %v480, 0
      %v1554 = vsel %vm1485, %v481, 0
      %v1555 = vsel %vm1486, %v482, 0
      %v1556 = vsel %vm1487, %v483, 0
      %v1557 = vsel %vm1488, %v484, 0
      %v1558 = vsel %vm1489, %v485, 0
      %v1559 = vsel %vm1490, %v486, 0
      %v1560 = vsel %vm1491, %v487, 0
      %v1561 = vsel %vm1492, %v488, 0
      %v1562 = vsel %vm1493, %v489, 0
      %v1563 = vsel %vm1494, %v490, 0
      %v1564 = vsel %vm1495, %v491, 0
      %v1565 = vsel %vm1496, %v492, 0
      %v1566 = vsel %vm1497, %v493, 0
      %v1567 = vsel %vm1498, %v494, 0
      %vm1568 = vcmp.ne.s16.totalorder %v1528, 0
      %v1569 = vsel %vm1568, %v479, 0
      %v1570 = vsel %vm1531, %v480, 0
      %v1571 = vsel %vm1185, %v481, 0
      %v1572 = vsel %vm1186, %v482, 0
      %v1573 = vsel %vm1187, %v483, 0
      %v1574 = vsel %vm1188, %v484, 0
      %v1575 = vsel %vm1189, %v485, 0
      %v1576 = vsel %vm1190, %v486, 0
      %v1577 = vsel %vm1191, %v487, 0
      %v1578 = vsel %vm1192, %v488, 0
      %v1579 = vsel %vm1193, %v489, 0
      %v1580 = vsel %vm1194, %v490, 0
      %v1581 = vsel %vm1195, %v491, 0
      %v1582 = vsel %vm1196, %v492, 0
      %v1583 = vsel %vm1197, %v493, 0
      %v1584 = vsel %vm1198, %v494, 0
      %v1585 = vsel %vm1551, %v480, 0
      %v1586 = vsel %vm1484, %v481, 0
      %v1587 = vsel %vm1485, %v482, 0
      %v1588 = vsel %vm1486, %v483, 0
      %v1589 = vsel %vm1487, %v484, 0
      %v1590 = vsel %vm1488, %v485, 0
      %v1591 = vsel %vm1489, %v486, 0
      %v1592 = vsel %vm1490, %v487, 0
      %v1593 = vsel %vm1491, %v488, 0
      %v1594 = vsel %vm1492, %v489, 0
      %v1595 = vsel %vm1493, %v490, 0
      %v1596 = vsel %vm1494, %v491, 0
      %v1597 = vsel %vm1495, %v492, 0
      %v1598 = vsel %vm1496, %v493, 0
      %v1599 = vsel %vm1497, %v494, 0
      %v1600 = vld [vmem:[%s374] sm:$0xf]
      %v1601 = vld [vmem:[%s374 + $0x4] sm:$0xf]
      %v1602 = vld [vmem:[%s374 + $0x8] sm:$0xf]
      %v1603 = vld [vmem:[%s374 + $0xc] sm:$0xf]
      %v1604 = vld [vmem:[%s374 + $0x10] sm:$0xf]
      %v1605 = vld [vmem:[%s374 + $0x14] sm:$0xf]
      %v1606 = vld [vmem:[%s374 + $0x18] sm:$0xf]
      %v1607 = vld [vmem:[%s374 + $0x1c] sm:$0xf]
      %v1608 = vld [vmem:[%s374 + $0x20] sm:$0xf]
      %v1609 = vld [vmem:[%s374 + $0x24] sm:$0xf]
      %v1610 = vld [vmem:[%s374 + $0x28] sm:$0xf]
      %v1611 = vld [vmem:[%s374 + $0x2c] sm:$0xf]
      %v1612 = vld [vmem:[%s374 + $0x30] sm:$0xf]
      %v1613 = vld [vmem:[%s374 + $0x34] sm:$0xf]
      %v1614 = vld [vmem:[%s374 + $0x38] sm:$0xf]
      %v1615 = vld [vmem:[%s374 + $0x3c] sm:$0xf]
      %v1616 = vld [vmem:[%s374 + $0x40] sm:$0xf]
      %v1617 = vld [vmem:[%s374 + $0x44] sm:$0xf]
      %v1618 = vld [vmem:[%s374 + $0x48] sm:$0xf]
      %v1619 = vld [vmem:[%s374 + $0x4c] sm:$0xf]
      %v1620 = vld [vmem:[%s374 + $0x50] sm:$0xf]
      %v1621 = vld [vmem:[%s374 + $0x54] sm:$0xf]
      %v1622 = vld [vmem:[%s374 + $0x58] sm:$0xf]
      %v1623 = vld [vmem:[%s374 + $0x5c] sm:$0xf]
      %v1624 = vld [vmem:[%s374 + $0x60] sm:$0xf]
      %v1625 = vld [vmem:[%s374 + $0x64] sm:$0xf]
      %v1626 = vld [vmem:[%s374 + $0x68] sm:$0xf]
      %v1627 = vld [vmem:[%s374 + $0x6c] sm:$0xf]
      %v1628 = vld [vmem:[%s374 + $0x70] sm:$0xf]
      %v1629 = vld [vmem:[%s374 + $0x74] sm:$0xf]
      %v1630 = vld [vmem:[%s374 + $0x78] sm:$0xf]
      %v1631 = vld [vmem:[%s374 + $0x7c] sm:$0xf]
      %v1664 = vunpack.c.l.b16 %v1600
      %v1665 = vunpack.c.l.b16 %v1601
      %v1666 = vunpack.c.l.b16 %v1602
      %v1667 = vunpack.c.l.b16 %v1603
      %v1668 = vunpack.c.l.b16 %v1604
      %v1669 = vunpack.c.l.b16 %v1605
      %v1670 = vunpack.c.l.b16 %v1606
      %v1671 = vunpack.c.l.b16 %v1607
      %v1672 = vunpack.c.l.b16 %v1608
      %v1673 = vunpack.c.l.b16 %v1609
      %v1674 = vunpack.c.l.b16 %v1610
      %v1675 = vunpack.c.l.b16 %v1611
      %v1676 = vunpack.c.l.b16 %v1612
      %v1677 = vunpack.c.l.b16 %v1613
      %v1678 = vunpack.c.l.b16 %v1614
      %v1679 = vunpack.c.l.b16 %v1615
      %v1680 = vunpack.c.l.b16 %v1616
      %v1681 = vunpack.c.l.b16 %v1617
      %v1682 = vunpack.c.l.b16 %v1618
      %v1683 = vunpack.c.l.b16 %v1619
      %v1684 = vunpack.c.l.b16 %v1620
      %v1685 = vunpack.c.l.b16 %v1621
      %v1686 = vunpack.c.l.b16 %v1622
      %v1687 = vunpack.c.l.b16 %v1623
      %v1688 = vunpack.c.l.b16 %v1624
      %v1689 = vunpack.c.l.b16 %v1625
      %v1690 = vunpack.c.l.b16 %v1626
      %v1691 = vunpack.c.l.b16 %v1627
      %v1692 = vunpack.c.l.b16 %v1628
      %v1693 = vunpack.c.l.b16 %v1629
      %v1694 = vunpack.c.l.b16 %v1630
      %v1695 = vunpack.c.l.b16 %v1631
      %v1696 = vpack.c.b16 %v1665, %v1664
      %v1697 = vpack.c.b16 %v1667, %v1666
      %v1698 = vpack.c.b16 %v1669, %v1668
      %v1699 = vpack.c.b16 %v1671, %v1670
      %v1700 = vpack.c.b16 %v1673, %v1672
      %v1701 = vpack.c.b16 %v1675, %v1674
      %v1702 = vpack.c.b16 %v1677, %v1676
      %v1703 = vpack.c.b16 %v1679, %v1678
      %v1704 = vpack.c.b16 %v1681, %v1680
      %v1705 = vpack.c.b16 %v1683, %v1682
      %v1706 = vpack.c.b16 %v1685, %v1684
      %v1707 = vpack.c.b16 %v1687, %v1686
      %v1708 = vpack.c.b16 %v1689, %v1688
      %v1709 = vpack.c.b16 %v1691, %v1690
      %v1710 = vpack.c.b16 %v1693, %v1692
      %v1711 = vpack.c.b16 %v1695, %v1694
      %v1728 = vsel %vm1185, %v1696, 0
      %v1729 = vsel %vm1186, %v1697, 0
      %v1730 = vsel %vm1187, %v1698, 0
      %v1731 = vsel %vm1188, %v1699, 0
      %v1732 = vsel %vm1189, %v1700, 0
      %v1733 = vsel %vm1190, %v1701, 0
      %v1734 = vsel %vm1191, %v1702, 0
      %v1735 = vsel %vm1192, %v1703, 0
      %v1736 = vsel %vm1193, %v1704, 0
      %v1737 = vsel %vm1194, %v1705, 0
      %v1738 = vsel %vm1195, %v1706, 0
      %v1739 = vsel %vm1196, %v1707, 0
      %v1740 = vsel %vm1197, %v1708, 0
      %v1741 = vsel %vm1198, %v1709, 0
      %v1742 = vsel %vm1199, %v1710, 0
      %v1743 = vsel %vm1484, %v1696, 0
      %v1744 = vsel %vm1485, %v1697, 0
      %v1745 = vsel %vm1486, %v1698, 0
      %v1746 = vsel %vm1487, %v1699, 0
      %v1747 = vsel %vm1488, %v1700, 0
      %v1748 = vsel %vm1489, %v1701, 0
      %v1749 = vsel %vm1490, %v1702, 0
      %v1750 = vsel %vm1491, %v1703, 0
      %v1751 = vsel %vm1492, %v1704, 0
      %v1752 = vsel %vm1493, %v1705, 0
      %v1753 = vsel %vm1494, %v1706, 0
      %v1754 = vsel %vm1495, %v1707, 0
      %v1755 = vsel %vm1496, %v1708, 0
      %v1756 = vsel %vm1497, %v1709, 0
      %v1757 = vsel %vm1498, %v1710, 0
      %v1758 = vsel %vm1499, %v1711, 0
      %v1759 = vsel %vm1531, %v1696, 0
      %v1760 = vsel %vm1185, %v1697, 0
      %v1761 = vsel %vm1186, %v1698, 0
      %v1762 = vsel %vm1187, %v1699, 0
      %v1763 = vsel %vm1188, %v1700, 0
      %v1764 = vsel %vm1189, %v1701, 0
      %v1765 = vsel %vm1190, %v1702, 0
      %v1766 = vsel %vm1191, %v1703, 0
      %v1767 = vsel %vm1192, %v1704, 0
      %v1768 = vsel %vm1193, %v1705, 0
      %v1769 = vsel %vm1194, %v1706, 0
      %v1770 = vsel %vm1195, %v1707, 0
      %v1771 = vsel %vm1196, %v1708, 0
      %v1772 = vsel %vm1197, %v1709, 0
      %v1773 = vsel %vm1198, %v1710, 0
      %v1774 = vsel %vm1199, %v1711, 0
      %v1775 = vsel %vm1551, %v1696, 0
      %v1776 = vsel %vm1484, %v1697, 0
      %v1777 = vsel %vm1485, %v1698, 0
      %v1778 = vsel %vm1486, %v1699, 0
      %v1779 = vsel %vm1487, %v1700, 0
      %v1780 = vsel %vm1488, %v1701, 0
      %v1781 = vsel %vm1489, %v1702, 0
      %v1782 = vsel %vm1490, %v1703, 0
      %v1783 = vsel %vm1491, %v1704, 0
      %v1784 = vsel %vm1492, %v1705, 0
      %v1785 = vsel %vm1493, %v1706, 0
      %v1786 = vsel %vm1494, %v1707, 0
      %v1787 = vsel %vm1495, %v1708, 0
      %v1788 = vsel %vm1496, %v1709, 0
      %v1789 = vsel %vm1497, %v1710, 0
      %v1790 = vsel %vm1498, %v1711, 0
      %v1791 = vsel %vm1568, %v1696, 0
      %v1792 = vsel %vm1531, %v1697, 0
      %v1793 = vsel %vm1185, %v1698, 0
      %v1794 = vsel %vm1186, %v1699, 0
      %v1795 = vsel %vm1187, %v1700, 0
      %v1796 = vsel %vm1188, %v1701, 0
      %v1797 = vsel %vm1189, %v1702, 0
      %v1798 = vsel %vm1190, %v1703, 0
      %v1799 = vsel %vm1191, %v1704, 0
      %v1800 = vsel %vm1192, %v1705, 0
      %v1801 = vsel %vm1193, %v1706, 0
      %v1802 = vsel %vm1194, %v1707, 0
      %v1803 = vsel %vm1195, %v1708, 0
      %v1804 = vsel %vm1196, %v1709, 0
      %v1805 = vsel %vm1197, %v1710, 0
      %v1806 = vsel %vm1198, %v1711, 0
      %v1807 = vsel %vm1551, %v1697, 0
      %v1808 = vsel %vm1484, %v1698, 0
      %v1809 = vsel %vm1485, %v1699, 0
      %v1810 = vsel %vm1486, %v1700, 0
      %v1811 = vsel %vm1487, %v1701, 0
      %v1812 = vsel %vm1488, %v1702, 0
      %v1813 = vsel %vm1489, %v1703, 0
      %v1814 = vsel %vm1490, %v1704, 0
      %v1815 = vsel %vm1491, %v1705, 0
      %v1816 = vsel %vm1492, %v1706, 0
      %v1817 = vsel %vm1493, %v1707, 0
      %v1818 = vsel %vm1494, %v1708, 0
      %v1819 = vsel %vm1495, %v1709, 0
      %v1820 = vsel %vm1496, %v1710, 0
      %v1821 = vsel %vm1497, %v1711, 0
      %v1823 = vshll.u32 0, 16
      %v1825 = vrot.slane %v1823, 1
      %v1826 = vshrl.u32 0, 16
      %v1828 = vor.u32 %v1826, %v1825
      %v1830 = vshll.u32 %v479, 16
      %v1832 = vrot.slane %v1830, 1
      %v1833 = vsel %vm1065, %v1828, %v1832
      %v1834 = vshrl.u32 %v479, 16
      %v1836 = vor.u32 %v1834, %v1832
      %v1838 = vshll.u32 %v480, 16
      %v1840 = vrot.slane %v1838, 1
      %v1841 = vsel %vm1065, %v1836, %v1840
      %v1842 = vshrl.u32 %v480, 16
      %v1844 = vor.u32 %v1842, %v1840
      %v1846 = vshll.u32 %v481, 16
      %v1848 = vrot.slane %v1846, 1
      %v1849 = vsel %vm1065, %v1844, %v1848
      %v1850 = vshrl.u32 %v481, 16
      %v1852 = vor.u32 %v1850, %v1848
      %v1854 = vshll.u32 %v482, 16
      %v1856 = vrot.slane %v1854, 1
      %v1857 = vsel %vm1065, %v1852, %v1856
      %v1858 = vshrl.u32 %v482, 16
      %v1860 = vor.u32 %v1858, %v1856
      %v1862 = vshll.u32 %v483, 16
      %v1864 = vrot.slane %v1862, 1
      %v1865 = vsel %vm1065, %v1860, %v1864
      %v1866 = vshrl.u32 %v483, 16
      %v1868 = vor.u32 %v1866, %v1864
      %v1870 = vshll.u32 %v484, 16
      %v1872 = vrot.slane %v1870, 1
      %v1873 = vsel %vm1065, %v1868, %v1872
      %v1874 = vshrl.u32 %v484, 16
      %v1876 = vor.u32 %v1874, %v1872
      %v1878 = vshll.u32 %v485, 16
      %v1880 = vrot.slane %v1878, 1
      %v1881 = vsel %vm1065, %v1876, %v1880
      %v1882 = vshrl.u32 %v485, 16
      %v1884 = vor.u32 %v1882, %v1880
      %v1886 = vshll.u32 %v486, 16
      %v1888 = vrot.slane %v1886, 1
      %v1889 = vsel %vm1065, %v1884, %v1888
      %v1890 = vshrl.u32 %v486, 16
      %v1892 = vor.u32 %v1890, %v1888
      %v1894 = vshll.u32 %v487, 16
      %v1896 = vrot.slane %v1894, 1
      %v1897 = vsel %vm1065, %v1892, %v1896
      %v1898 = vshrl.u32 %v487, 16
      %v1900 = vor.u32 %v1898, %v1896
      %v1902 = vshll.u32 %v488, 16
      %v1904 = vrot.slane %v1902, 1
      %v1905 = vsel %vm1065, %v1900, %v1904
      %v1906 = vshrl.u32 %v488, 16
      %v1908 = vor.u32 %v1906, %v1904
      %v1910 = vshll.u32 %v489, 16
      %v1912 = vrot.slane %v1910, 1
      %v1913 = vsel %vm1065, %v1908, %v1912
      %v1914 = vshrl.u32 %v489, 16
      %v1916 = vor.u32 %v1914, %v1912
      %v1918 = vshll.u32 %v490, 16
      %v1920 = vrot.slane %v1918, 1
      %v1921 = vsel %vm1065, %v1916, %v1920
      %v1922 = vshrl.u32 %v490, 16
      %v1924 = vor.u32 %v1922, %v1920
      %v1926 = vshll.u32 %v491, 16
      %v1928 = vrot.slane %v1926, 1
      %v1929 = vsel %vm1065, %v1924, %v1928
      %v1930 = vshrl.u32 %v491, 16
      %v1932 = vor.u32 %v1930, %v1928
      %v1934 = vshll.u32 %v492, 16
      %v1936 = vrot.slane %v1934, 1
      %v1937 = vsel %vm1065, %v1932, %v1936
      %v1938 = vshrl.u32 %v492, 16
      %v1940 = vor.u32 %v1938, %v1936
      %v1942 = vshll.u32 %v493, 16
      %v1944 = vrot.slane %v1942, 1
      %v1945 = vsel %vm1065, %v1940, %v1944
      %v1946 = vshrl.u32 %v493, 16
      %v1948 = vor.u32 %v1946, %v1944
      %1949 = vrot.lane.b32.xlu0 %v1825, 4
      %v1950 = vpop.permute.xlu0 %1949
      %1951 = vrot.lane.b32.xlu0 %v1833, 4
      %v1952 = vpop.permute.xlu0 %1951
      %1953 = vrot.lane.b32.xlu0 %v1841, 4
      %v1954 = vpop.permute.xlu0 %1953
      %1955 = vrot.lane.b32.xlu0 %v1849, 4
      %v1956 = vpop.permute.xlu0 %1955
      %1957 = vrot.lane.b32.xlu0 %v1857, 4
      %v1958 = vpop.permute.xlu0 %1957
      %1959 = vrot.lane.b32.xlu0 %v1865, 4
      %v1960 = vpop.permute.xlu0 %1959
      %1961 = vrot.lane.b32.xlu0 %v1873, 4
      %v1962 = vpop.permute.xlu0 %1961
      %1963 = vrot.lane.b32.xlu0 %v1881, 4
      %v1964 = vpop.permute.xlu0 %1963
      %1965 = vrot.lane.b32.xlu0 %v1889, 4
      %v1966 = vpop.permute.xlu0 %1965
      %1967 = vrot.lane.b32.xlu0 %v1897, 4
      %v1968 = vpop.permute.xlu0 %1967
      %1969 = vrot.lane.b32.xlu0 %v1905, 4
      %v1970 = vpop.permute.xlu0 %1969
      %1971 = vrot.lane.b32.xlu0 %v1913, 4
      %v1972 = vpop.permute.xlu0 %1971
      %1973 = vrot.lane.b32.xlu0 %v1921, 4
      %v1974 = vpop.permute.xlu0 %1973
      %1975 = vrot.lane.b32.xlu0 %v1929, 4
      %v1976 = vpop.permute.xlu0 %1975
      %1977 = vrot.lane.b32.xlu0 %v1937, 4
      %v1978 = vpop.permute.xlu0 %1977
      %1979 = vrot.lane.b32.xlu0 %v1945, 4
      %v1980 = vpop.permute.xlu0 %1979
      %1981 = vrot.lane.b32.xlu0 %v1948, 4
      %v1982 = vpop.permute.xlu0 %1981
      %vm2000 = vcmask 1046528
      %v2001 = vrot.slane 0, 1
      %v2002 = vrot.slane %v1500, 1
      %v2003 = vsel %vm2000, %v2001, %v2002
      %v2004 = vrot.slane %v1501, 1
      %v2005 = vsel %vm2000, %v2002, %v2004
      %v2006 = vrot.slane %v1502, 1
      %v2007 = vsel %vm2000, %v2004, %v2006
      %v2008 = vrot.slane %v1503, 1
      %v2009 = vsel %vm2000, %v2006, %v2008
      %v2010 = vrot.slane %v1504, 1
      %v2011 = vsel %vm2000, %v2008, %v2010
      %v2012 = vrot.slane %v1505, 1
      %v2013 = vsel %vm2000, %v2010, %v2012
      %v2014 = vrot.slane %v1506, 1
      %v2015 = vsel %vm2000, %v2012, %v2014
      %v2016 = vrot.slane %v1507, 1
      %v2017 = vsel %vm2000, %v2014, %v2016
      %v2018 = vrot.slane %v1508, 1
      %v2019 = vsel %vm2000, %v2016, %v2018
      %v2020 = vrot.slane %v1509, 1
      %v2021 = vsel %vm2000, %v2018, %v2020
      %v2022 = vrot.slane %v1510, 1
      %v2023 = vsel %vm2000, %v2020, %v2022
      %v2024 = vrot.slane %v1511, 1
      %v2025 = vsel %vm2000, %v2022, %v2024
      %v2026 = vrot.slane %v1512, 1
      %v2027 = vsel %vm2000, %v2024, %v2026
      %v2028 = vrot.slane %v1513, 1
      %v2029 = vsel %vm2000, %v2026, %v2028
      %v2030 = vrot.slane %v1514, 1
      %v2031 = vsel %vm2000, %v2028, %v2030
      %v2032 = vrot.slane %v1515, 1
      %v2033 = vsel %vm2000, %v2030, %v2032
      %2034 = vrot.lane.b32.xlu0 %v2001, 8
      %v2035 = vpop.permute.xlu0 %2034
      %2036 = vrot.lane.b32.xlu0 %v2003, 8
      %v2037 = vpop.permute.xlu0 %2036
      %2038 = vrot.lane.b32.xlu0 %v2005, 8
      %v2039 = vpop.permute.xlu0 %2038
      %2040 = vrot.lane.b32.xlu0 %v2007, 8
      %v2041 = vpop.permute.xlu0 %2040
      %2042 = vrot.lane.b32.xlu0 %v2009, 8
      %v2043 = vpop.permute.xlu0 %2042
      %2044 = vrot.lane.b32.xlu0 %v2011, 8
      %v2045 = vpop.permute.xlu0 %2044
      %2046 = vrot.lane.b32.xlu0 %v2013, 8
      %v2047 = vpop.permute.xlu0 %2046
      %2048 = vrot.lane.b32.xlu0 %v2015, 8
      %v2049 = vpop.permute.xlu0 %2048
      %2050 = vrot.lane.b32.xlu0 %v2017, 8
      %v2051 = vpop.permute.xlu0 %2050
      %2052 = vrot.lane.b32.xlu0 %v2019, 8
      %v2053 = vpop.permute.xlu0 %2052
      %2054 = vrot.lane.b32.xlu0 %v2021, 8
      %v2055 = vpop.permute.xlu0 %2054
      %2056 = vrot.lane.b32.xlu0 %v2023, 8
      %v2057 = vpop.permute.xlu0 %2056
      %2058 = vrot.lane.b32.xlu0 %v2025, 8
      %v2059 = vpop.permute.xlu0 %2058
      %2060 = vrot.lane.b32.xlu0 %v2027, 8
      %v2061 = vpop.permute.xlu0 %2060
      %2062 = vrot.lane.b32.xlu0 %v2029, 8
      %v2063 = vpop.permute.xlu0 %2062
      %2064 = vrot.lane.b32.xlu0 %v2031, 8
      %v2065 = vpop.permute.xlu0 %2064
      %2066 = vrot.lane.b32.xlu0 %v2033, 8
      %v2067 = vpop.permute.xlu0 %2066
      %2084 = vrot.lane.b32.xlu0 0, 12
      %v2085 = vpop.permute.xlu0 %2084
      %2086 = vrot.lane.b32.xlu0 %v1532, 12
      %v2087 = vpop.permute.xlu0 %2086
      %2088 = vrot.lane.b32.xlu0 %v1533, 12
      %v2089 = vpop.permute.xlu0 %2088
      %2090 = vrot.lane.b32.xlu0 %v1534, 12
      %v2091 = vpop.permute.xlu0 %2090
      %2092 = vrot.lane.b32.xlu0 %v1535, 12
      %v2093 = vpop.permute.xlu0 %2092
      %2094 = vrot.lane.b32.xlu0 %v1536, 12
      %v2095 = vpop.permute.xlu0 %2094
      %2096 = vrot.lane.b32.xlu0 %v1537, 12
      %v2097 = vpop.permute.xlu0 %2096
      %2098 = vrot.lane.b32.xlu0 %v1538, 12
      %v2099 = vpop.permute.xlu0 %2098
      %2100 = vrot.lane.b32.xlu0 %v1539, 12
      %v2101 = vpop.permute.xlu0 %2100
      %2102 = vrot.lane.b32.xlu0 %v1540, 12
      %v2103 = vpop.permute.xlu0 %2102
      %2104 = vrot.lane.b32.xlu0 %v1541, 12
      %v2105 = vpop.permute.xlu0 %2104
      %2106 = vrot.lane.b32.xlu0 %v1542, 12
      %v2107 = vpop.permute.xlu0 %2106
      %2108 = vrot.lane.b32.xlu0 %v1543, 12
      %v2109 = vpop.permute.xlu0 %2108
      %2110 = vrot.lane.b32.xlu0 %v1544, 12
      %v2111 = vpop.permute.xlu0 %2110
      %2112 = vrot.lane.b32.xlu0 %v1545, 12
      %v2113 = vpop.permute.xlu0 %2112
      %2114 = vrot.lane.b32.xlu0 %v1546, 12
      %v2115 = vpop.permute.xlu0 %2114
      %2116 = vrot.lane.b32.xlu0 %v1547, 12
      %v2117 = vpop.permute.xlu0 %2116
      %v2119 = vshll.u32 %v494, 16
      %v2121 = vrot.slane %v2119, 1
      %v2122 = vsel %vm1065, %v1948, %v2121
      %v2123 = vshrl.u32 %v494, 16
      %v2125 = vor.u32 %v2123, %v2121
      %2126 = vrot.lane.b32.xlu0 %v1832, 16
      %v2127 = vpop.permute.xlu0 %2126
      %2128 = vrot.lane.b32.xlu0 %v1841, 16
      %v2129 = vpop.permute.xlu0 %2128
      %2130 = vrot.lane.b32.xlu0 %v1849, 16
      %v2131 = vpop.permute.xlu0 %2130
      %2132 = vrot.lane.b32.xlu0 %v1857, 16
      %v2133 = vpop.permute.xlu0 %2132
      %2134 = vrot.lane.b32.xlu0 %v1865, 16
      %v2135 = vpop.permute.xlu0 %2134
      %2136 = vrot.lane.b32.xlu0 %v1873, 16
      %v2137 = vpop.permute.xlu0 %2136
      %2138 = vrot.lane.b32.xlu0 %v1881, 16
      %v2139 = vpop.permute.xlu0 %2138
      %2140 = vrot.lane.b32.xlu0 %v1889, 16
      %v2141 = vpop.permute.xlu0 %2140
      %2142 = vrot.lane.b32.xlu0 %v1897, 16
      %v2143 = vpop.permute.xlu0 %2142
      %2144 = vrot.lane.b32.xlu0 %v1905, 16
      %v2145 = vpop.permute.xlu0 %2144
      %2146 = vrot.lane.b32.xlu0 %v1913, 16
      %v2147 = vpop.permute.xlu0 %2146
      %2148 = vrot.lane.b32.xlu0 %v1921, 16
      %v2149 = vpop.permute.xlu0 %2148
      %2150 = vrot.lane.b32.xlu0 %v1929, 16
      %v2151 = vpop.permute.xlu0 %2150
      %2152 = vrot.lane.b32.xlu0 %v1937, 16
      %v2153 = vpop.permute.xlu0 %2152
      %2154 = vrot.lane.b32.xlu0 %v1945, 16
      %v2155 = vpop.permute.xlu0 %2154
      %2156 = vrot.lane.b32.xlu0 %v2122, 16
      %v2157 = vpop.permute.xlu0 %2156
      %2158 = vrot.lane.b32.xlu0 %v2125, 16
      %v2159 = vpop.permute.xlu0 %2158
      %v2176 = vrot.slane %v1552, 1
      %v2177 = vrot.slane %v1553, 1
      %v2178 = vsel %vm2000, %v2176, %v2177
      %v2179 = vrot.slane %v1554, 1
      %v2180 = vsel %vm2000, %v2177, %v2179
      %v2181 = vrot.slane %v1555, 1
      %v2182 = vsel %vm2000, %v2179, %v2181
      %v2183 = vrot.slane %v1556, 1
      %v2184 = vsel %vm2000, %v2181, %v2183
      %v2185 = vrot.slane %v1557, 1
      %v2186 = vsel %vm2000, %v2183, %v2185
      %v2187 = vrot.slane %v1558, 1
      %v2188 = vsel %vm2000, %v2185, %v2187
      %v2189 = vrot.slane %v1559, 1
      %v2190 = vsel %vm2000, %v2187, %v2189
      %v2191 = vrot.slane %v1560, 1
      %v2192 = vsel %vm2000, %v2189, %v2191
      %v2193 = vrot.slane %v1561, 1
      %v2194 = vsel %vm2000, %v2191, %v2193
      %v2195 = vrot.slane %v1562, 1
      %v2196 = vsel %vm2000, %v2193, %v2195
      %v2197 = vrot.slane %v1563, 1
      %v2198 = vsel %vm2000, %v2195, %v2197
      %v2199 = vrot.slane %v1564, 1
      %v2200 = vsel %vm2000, %v2197, %v2199
      %v2201 = vrot.slane %v1565, 1
      %v2202 = vsel %vm2000, %v2199, %v2201
      %v2203 = vrot.slane %v1566, 1
      %v2204 = vsel %vm2000, %v2201, %v2203
      %v2205 = vrot.slane %v1567, 1
      %v2206 = vsel %vm2000, %v2203, %v2205
      %v2207 = vsel %vm2000, %v2205, %v2001
      %2208 = vrot.lane.b32.xlu0 %v2176, 20
      %v2209 = vpop.permute.xlu0 %2208
      %2210 = vrot.lane.b32.xlu0 %v2178, 20
      %v2211 = vpop.permute.xlu0 %2210
      %2212 = vrot.lane.b32.xlu0 %v2180, 20
      %v2213 = vpop.permute.xlu0 %2212
      %2214 = vrot.lane.b32.xlu0 %v2182, 20
      %v2215 = vpop.permute.xlu0 %2214
      %2216 = vrot.lane.b32.xlu0 %v2184, 20
      %v2217 = vpop.permute.xlu0 %2216
      %2218 = vrot.lane.b32.xlu0 %v2186, 20
      %v2219 = vpop.permute.xlu0 %2218
      %2220 = vrot.lane.b32.xlu0 %v2188, 20
      %v2221 = vpop.permute.xlu0 %2220
      %2222 = vrot.lane.b32.xlu0 %v2190, 20
      %v2223 = vpop.permute.xlu0 %2222
      %2224 = vrot.lane.b32.xlu0 %v2192, 20
      %v2225 = vpop.permute.xlu0 %2224
      %2226 = vrot.lane.b32.xlu0 %v2194, 20
      %v2227 = vpop.permute.xlu0 %2226
      %2228 = vrot.lane.b32.xlu0 %v2196, 20
      %v2229 = vpop.permute.xlu0 %2228
      %2230 = vrot.lane.b32.xlu0 %v2198, 20
      %v2231 = vpop.permute.xlu0 %2230
      %2232 = vrot.lane.b32.xlu0 %v2200, 20
      %v2233 = vpop.permute.xlu0 %2232
      %2234 = vrot.lane.b32.xlu0 %v2202, 20
      %v2235 = vpop.permute.xlu0 %2234
      %2236 = vrot.lane.b32.xlu0 %v2204, 20
      %v2237 = vpop.permute.xlu0 %2236
      %2238 = vrot.lane.b32.xlu0 %v2206, 20
      %v2239 = vpop.permute.xlu0 %2238
      %2240 = vrot.lane.b32.xlu0 %v2207, 20
      %v2241 = vpop.permute.xlu0 %2240
      %2258 = vrot.lane.b32.xlu0 %v1569, 24
      %v2259 = vpop.permute.xlu0 %2258
      %2260 = vrot.lane.b32.xlu0 %v1570, 24
      %v2261 = vpop.permute.xlu0 %2260
      %2262 = vrot.lane.b32.xlu0 %v1571, 24
      %v2263 = vpop.permute.xlu0 %2262
      %2264 = vrot.lane.b32.xlu0 %v1572, 24
      %v2265 = vpop.permute.xlu0 %2264
      %2266 = vrot.lane.b32.xlu0 %v1573, 24
      %v2267 = vpop.permute.xlu0 %2266
      %2268 = vrot.lane.b32.xlu0 %v1574, 24
      %v2269 = vpop.permute.xlu0 %2268
      %2270 = vrot.lane.b32.xlu0 %v1575, 24
      %v2271 = vpop.permute.xlu0 %2270
      %2272 = vrot.lane.b32.xlu0 %v1576, 24
      %v2273 = vpop.permute.xlu0 %2272
      %2274 = vrot.lane.b32.xlu0 %v1577, 24
      %v2275 = vpop.permute.xlu0 %2274
      %2276 = vrot.lane.b32.xlu0 %v1578, 24
      %v2277 = vpop.permute.xlu0 %2276
      %2278 = vrot.lane.b32.xlu0 %v1579, 24
      %v2279 = vpop.permute.xlu0 %2278
      %2280 = vrot.lane.b32.xlu0 %v1580, 24
      %v2281 = vpop.permute.xlu0 %2280
      %2282 = vrot.lane.b32.xlu0 %v1581, 24
      %v2283 = vpop.permute.xlu0 %2282
      %2284 = vrot.lane.b32.xlu0 %v1582, 24
      %v2285 = vpop.permute.xlu0 %2284
      %2286 = vrot.lane.b32.xlu0 %v1583, 24
      %v2287 = vpop.permute.xlu0 %2286
      %2288 = vrot.lane.b32.xlu0 %v1584, 24
      %v2289 = vpop.permute.xlu0 %2288
      %2290 = vrot.lane.b32.xlu0 0, 24
      %v2291 = vpop.permute.xlu0 %2290
      %v2292 = vsel %vm1065, %v2125, %v1825
      %2293 = vrot.lane.b32.xlu0 %v1840, 28
      %v2294 = vpop.permute.xlu0 %2293
      %2295 = vrot.lane.b32.xlu0 %v1849, 28
      %v2296 = vpop.permute.xlu0 %2295
      %2297 = vrot.lane.b32.xlu0 %v1857, 28
      %v2298 = vpop.permute.xlu0 %2297
      %2299 = vrot.lane.b32.xlu0 %v1865, 28
      %v2300 = vpop.permute.xlu0 %2299
      %2301 = vrot.lane.b32.xlu0 %v1873, 28
      %v2302 = vpop.permute.xlu0 %2301
      %2303 = vrot.lane.b32.xlu0 %v1881, 28
      %v2304 = vpop.permute.xlu0 %2303
      %2305 = vrot.lane.b32.xlu0 %v1889, 28
      %v2306 = vpop.permute.xlu0 %2305
      %2307 = vrot.lane.b32.xlu0 %v1897, 28
      %v2308 = vpop.permute.xlu0 %2307
      %2309 = vrot.lane.b32.xlu0 %v1905, 28
      %v2310 = vpop.permute.xlu0 %2309
      %2311 = vrot.lane.b32.xlu0 %v1913, 28
      %v2312 = vpop.permute.xlu0 %2311
      %2313 = vrot.lane.b32.xlu0 %v1921, 28
      %v2314 = vpop.permute.xlu0 %2313
      %2315 = vrot.lane.b32.xlu0 %v1929, 28
      %v2316 = vpop.permute.xlu0 %2315
      %2317 = vrot.lane.b32.xlu0 %v1937, 28
      %v2318 = vpop.permute.xlu0 %2317
      %2319 = vrot.lane.b32.xlu0 %v1945, 28
      %v2320 = vpop.permute.xlu0 %2319
      %2321 = vrot.lane.b32.xlu0 %v2122, 28
      %v2322 = vpop.permute.xlu0 %2321
      %2323 = vrot.lane.b32.xlu0 %v2292, 28
      %v2324 = vpop.permute.xlu0 %2323
      %2325 = vrot.lane.b32.xlu0 %v1828, 28
      %v2326 = vpop.permute.xlu0 %2325
      %v2342 = vrot.slane %v1585, 1
      %v2343 = vrot.slane %v1586, 1
      %v2344 = vsel %vm2000, %v2342, %v2343
      %v2345 = vrot.slane %v1587, 1
      %v2346 = vsel %vm2000, %v2343, %v2345
      %v2347 = vrot.slane %v1588, 1
      %v2348 = vsel %vm2000, %v2345, %v2347
      %v2349 = vrot.slane %v1589, 1
      %v2350 = vsel %vm2000, %v2347, %v2349
      %v2351 = vrot.slane %v1590, 1
      %v2352 = vsel %vm2000, %v2349, %v2351
      %v2353 = vrot.slane %v1591, 1
      %v2354 = vsel %vm2000, %v2351, %v2353
      %v2355 = vrot.slane %v1592, 1
      %v2356 = vsel %vm2000, %v2353, %v2355
      %v2357 = vrot.slane %v1593, 1
      %v2358 = vsel %vm2000, %v2355, %v2357
      %v2359 = vrot.slane %v1594, 1
      %v2360 = vsel %vm2000, %v2357, %v2359
      %v2361 = vrot.slane %v1595, 1
      %v2362 = vsel %vm2000, %v2359, %v2361
      %v2363 = vrot.slane %v1596, 1
      %v2364 = vsel %vm2000, %v2361, %v2363
      %v2365 = vrot.slane %v1597, 1
      %v2366 = vsel %vm2000, %v2363, %v2365
      %v2367 = vrot.slane %v1598, 1
      %v2368 = vsel %vm2000, %v2365, %v2367
      %v2369 = vrot.slane %v1599, 1
      %v2370 = vsel %vm2000, %v2367, %v2369
      %v2371 = vsel %vm2000, %v2369, %v2001
      %v2372 = vsel %vm2000, %v2001, %v2001
      %2373 = vrot.lane.b32.xlu0 %v2342, 32
      %v2374 = vpop.permute.xlu0 %2373
      %2375 = vrot.lane.b32.xlu0 %v2344, 32
      %v2376 = vpop.permute.xlu0 %2375
      %2377 = vrot.lane.b32.xlu0 %v2346, 32
      %v2378 = vpop.permute.xlu0 %2377
      %2379 = vrot.lane.b32.xlu0 %v2348, 32
      %v2380 = vpop.permute.xlu0 %2379
      %2381 = vrot.lane.b32.xlu0 %v2350, 32
      %v2382 = vpop.permute.xlu0 %2381
      %2383 = vrot.lane.b32.xlu0 %v2352, 32
      %v2384 = vpop.permute.xlu0 %2383
      %2385 = vrot.lane.b32.xlu0 %v2354, 32
      %v2386 = vpop.permute.xlu0 %2385
      %2387 = vrot.lane.b32.xlu0 %v2356, 32
      %v2388 = vpop.permute.xlu0 %2387
      %2389 = vrot.lane.b32.xlu0 %v2358, 32
      %v2390 = vpop.permute.xlu0 %2389
      %2391 = vrot.lane.b32.xlu0 %v2360, 32
      %v2392 = vpop.permute.xlu0 %2391
      %2393 = vrot.lane.b32.xlu0 %v2362, 32
      %v2394 = vpop.permute.xlu0 %2393
      %2395 = vrot.lane.b32.xlu0 %v2364, 32
      %v2396 = vpop.permute.xlu0 %2395
      %2397 = vrot.lane.b32.xlu0 %v2366, 32
      %v2398 = vpop.permute.xlu0 %2397
      %2399 = vrot.lane.b32.xlu0 %v2368, 32
      %v2400 = vpop.permute.xlu0 %2399
      %2401 = vrot.lane.b32.xlu0 %v2370, 32
      %v2402 = vpop.permute.xlu0 %2401
      %2403 = vrot.lane.b32.xlu0 %v2371, 32
      %v2404 = vpop.permute.xlu0 %2403
      %2405 = vrot.lane.b32.xlu0 %v2372, 32
      %v2406 = vpop.permute.xlu0 %2405
      %2422 = vrot.lane.b32.xlu0 0, 36
      %v2423 = vpop.permute.xlu0 %2422
      %2424 = vrot.lane.b32.xlu0 %v1728, 36
      %v2425 = vpop.permute.xlu0 %2424
      %2426 = vrot.lane.b32.xlu0 %v1729, 36
      %v2427 = vpop.permute.xlu0 %2426
      %2428 = vrot.lane.b32.xlu0 %v1730, 36
      %v2429 = vpop.permute.xlu0 %2428
      %2430 = vrot.lane.b32.xlu0 %v1731, 36
      %v2431 = vpop.permute.xlu0 %2430
      %2432 = vrot.lane.b32.xlu0 %v1732, 36
      %v2433 = vpop.permute.xlu0 %2432
      %2434 = vrot.lane.b32.xlu0 %v1733, 36
      %v2435 = vpop.permute.xlu0 %2434
      %2436 = vrot.lane.b32.xlu0 %v1734, 36
      %v2437 = vpop.permute.xlu0 %2436
      %2438 = vrot.lane.b32.xlu0 %v1735, 36
      %v2439 = vpop.permute.xlu0 %2438
      %2440 = vrot.lane.b32.xlu0 %v1736, 36
      %v2441 = vpop.permute.xlu0 %2440
      %2442 = vrot.lane.b32.xlu0 %v1737, 36
      %v2443 = vpop.permute.xlu0 %2442
      %2444 = vrot.lane.b32.xlu0 %v1738, 36
      %v2445 = vpop.permute.xlu0 %2444
      %2446 = vrot.lane.b32.xlu0 %v1739, 36
      %v2447 = vpop.permute.xlu0 %2446
      %2448 = vrot.lane.b32.xlu0 %v1740, 36
      %v2449 = vpop.permute.xlu0 %2448
      %2450 = vrot.lane.b32.xlu0 %v1741, 36
      %v2451 = vpop.permute.xlu0 %2450
      %2452 = vrot.lane.b32.xlu0 %v1742, 36
      %v2453 = vpop.permute.xlu0 %2452
      %v2455 = vshll.u32 %v1696, 16
      %v2457 = vrot.slane %v2455, 1
      %v2458 = vsel %vm1065, %v1828, %v2457
      %v2459 = vshrl.u32 %v1696, 16
      %v2461 = vor.u32 %v2459, %v2457
      %v2463 = vshll.u32 %v1697, 16
      %v2465 = vrot.slane %v2463, 1
      %v2466 = vsel %vm1065, %v2461, %v2465
      %v2467 = vshrl.u32 %v1697, 16
      %v2469 = vor.u32 %v2467, %v2465
      %v2471 = vshll.u32 %v1698, 16
      %v2473 = vrot.slane %v2471, 1
      %v2474 = vsel %vm1065, %v2469, %v2473
      %v2475 = vshrl.u32 %v1698, 16
      %v2477 = vor.u32 %v2475, %v2473
      %v2479 = vshll.u32 %v1699, 16
      %v2481 = vrot.slane %v2479, 1
      %v2482 = vsel %vm1065, %v2477, %v2481
      %v2483 = vshrl.u32 %v1699, 16
      %v2485 = vor.u32 %v2483, %v2481
      %v2487 = vshll.u32 %v1700, 16
      %v2489 = vrot.slane %v2487, 1
      %v2490 = vsel %vm1065, %v2485, %v2489
      %v2491 = vshrl.u32 %v1700, 16
      %v2493 = vor.u32 %v2491, %v2489
      %v2495 = vshll.u32 %v1701, 16
      %v2497 = vrot.slane %v2495, 1
      %v2498 = vsel %vm1065, %v2493, %v2497
      %v2499 = vshrl.u32 %v1701, 16
      %v2501 = vor.u32 %v2499, %v2497
      %v2503 = vshll.u32 %v1702, 16
      %v2505 = vrot.slane %v2503, 1
      %v2506 = vsel %vm1065, %v2501, %v2505
      %v2507 = vshrl.u32 %v1702, 16
      %v2509 = vor.u32 %v2507, %v2505
      %v2511 = vshll.u32 %v1703, 16
      %v2513 = vrot.slane %v2511, 1
      %v2514 = vsel %vm1065, %v2509, %v2513
      %v2515 = vshrl.u32 %v1703, 16
      %v2517 = vor.u32 %v2515, %v2513
      %v2519 = vshll.u32 %v1704, 16
      %v2521 = vrot.slane %v2519, 1
      %v2522 = vsel %vm1065, %v2517, %v2521
      %v2523 = vshrl.u32 %v1704, 16
      %v2525 = vor.u32 %v2523, %v2521
      %v2527 = vshll.u32 %v1705, 16
      %v2529 = vrot.slane %v2527, 1
      %v2530 = vsel %vm1065, %v2525, %v2529
      %v2531 = vshrl.u32 %v1705, 16
      %v2533 = vor.u32 %v2531, %v2529
      %v2535 = vshll.u32 %v1706, 16
      %v2537 = vrot.slane %v2535, 1
      %v2538 = vsel %vm1065, %v2533, %v2537
      %v2539 = vshrl.u32 %v1706, 16
      %v2541 = vor.u32 %v2539, %v2537
      %v2543 = vshll.u32 %v1707, 16
      %v2545 = vrot.slane %v2543, 1
      %v2546 = vsel %vm1065, %v2541, %v2545
      %v2547 = vshrl.u32 %v1707, 16
      %v2549 = vor.u32 %v2547, %v2545
      %v2551 = vshll.u32 %v1708, 16
      %v2553 = vrot.slane %v2551, 1
      %v2554 = vsel %vm1065, %v2549, %v2553
      %v2555 = vshrl.u32 %v1708, 16
      %v2557 = vor.u32 %v2555, %v2553
      %v2559 = vshll.u32 %v1709, 16
      %v2561 = vrot.slane %v2559, 1
      %v2562 = vsel %vm1065, %v2557, %v2561
      %v2563 = vshrl.u32 %v1709, 16
      %v2565 = vor.u32 %v2563, %v2561
      %v2567 = vshll.u32 %v1710, 16
      %v2569 = vrot.slane %v2567, 1
      %v2570 = vsel %vm1065, %v2565, %v2569
      %v2571 = vshrl.u32 %v1710, 16
      %v2573 = vor.u32 %v2571, %v2569
      %2574 = vrot.lane.b32.xlu0 %v1825, 40
      %v2575 = vpop.permute.xlu0 %2574
      %2576 = vrot.lane.b32.xlu0 %v2458, 40
      %v2577 = vpop.permute.xlu0 %2576
      %2578 = vrot.lane.b32.xlu0 %v2466, 40
      %v2579 = vpop.permute.xlu0 %2578
      %2580 = vrot.lane.b32.xlu0 %v2474, 40
      %v2581 = vpop.permute.xlu0 %2580
      %2582 = vrot.lane.b32.xlu0 %v2482, 40
      %v2583 = vpop.permute.xlu0 %2582
      %2584 = vrot.lane.b32.xlu0 %v2490, 40
      %v2585 = vpop.permute.xlu0 %2584
      %2586 = vrot.lane.b32.xlu0 %v2498, 40
      %v2587 = vpop.permute.xlu0 %2586
      %2588 = vrot.lane.b32.xlu0 %v2506, 40
      %v2589 = vpop.permute.xlu0 %2588
      %2590 = vrot.lane.b32.xlu0 %v2514, 40
      %v2591 = vpop.permute.xlu0 %2590
      %2592 = vrot.lane.b32.xlu0 %v2522, 40
      %v2593 = vpop.permute.xlu0 %2592
      %2594 = vrot.lane.b32.xlu0 %v2530, 40
      %v2595 = vpop.permute.xlu0 %2594
      %2596 = vrot.lane.b32.xlu0 %v2538, 40
      %v2597 = vpop.permute.xlu0 %2596
      %2598 = vrot.lane.b32.xlu0 %v2546, 40
      %v2599 = vpop.permute.xlu0 %2598
      %2600 = vrot.lane.b32.xlu0 %v2554, 40
      %v2601 = vpop.permute.xlu0 %2600
      %2602 = vrot.lane.b32.xlu0 %v2562, 40
      %v2603 = vpop.permute.xlu0 %2602
      %2604 = vrot.lane.b32.xlu0 %v2570, 40
      %v2605 = vpop.permute.xlu0 %2604
      %2606 = vrot.lane.b32.xlu0 %v2573, 40
      %v2607 = vpop.permute.xlu0 %2606
      %v2624 = vrot.slane %v1743, 1
      %v2625 = vsel %vm2000, %v2001, %v2624
      %v2626 = vrot.slane %v1744, 1
      %v2627 = vsel %vm2000, %v2624, %v2626
      %v2628 = vrot.slane %v1745, 1
      %v2629 = vsel %vm2000, %v2626, %v2628
      %v2630 = vrot.slane %v1746, 1
      %v2631 = vsel %vm2000, %v2628, %v2630
      %v2632 = vrot.slane %v1747, 1
      %v2633 = vsel %vm2000, %v2630, %v2632
      %v2634 = vrot.slane %v1748, 1
      %v2635 = vsel %vm2000, %v2632, %v2634
      %v2636 = vrot.slane %v1749, 1
      %v2637 = vsel %vm2000, %v2634, %v2636
      %v2638 = vrot.slane %v1750, 1
      %v2639 = vsel %vm2000, %v2636, %v2638
      %v2640 = vrot.slane %v1751, 1
      %v2641 = vsel %vm2000, %v2638, %v2640
      %v2642 = vrot.slane %v1752, 1
      %v2643 = vsel %vm2000, %v2640, %v2642
      %v2644 = vrot.slane %v1753, 1
      %v2645 = vsel %vm2000, %v2642, %v2644
      %v2646 = vrot.slane %v1754, 1
      %v2647 = vsel %vm2000, %v2644, %v2646
      %v2648 = vrot.slane %v1755, 1
      %v2649 = vsel %vm2000, %v2646, %v2648
      %v2650 = vrot.slane %v1756, 1
      %v2651 = vsel %vm2000, %v2648, %v2650
      %v2652 = vrot.slane %v1757, 1
      %v2653 = vsel %vm2000, %v2650, %v2652
      %v2654 = vrot.slane %v1758, 1
      %v2655 = vsel %vm2000, %v2652, %v2654
      %2656 = vrot.lane.b32.xlu0 %v2001, 44
      %v2657 = vpop.permute.xlu0 %2656
      %2658 = vrot.lane.b32.xlu0 %v2625, 44
      %v2659 = vpop.permute.xlu0 %2658
      %2660 = vrot.lane.b32.xlu0 %v2627, 44
      %v2661 = vpop.permute.xlu0 %2660
      %2662 = vrot.lane.b32.xlu0 %v2629, 44
      %v2663 = vpop.permute.xlu0 %2662
      %2664 = vrot.lane.b32.xlu0 %v2631, 44
      %v2665 = vpop.permute.xlu0 %2664
      %2666 = vrot.lane.b32.xlu0 %v2633, 44
      %v2667 = vpop.permute.xlu0 %2666
      %2668 = vrot.lane.b32.xlu0 %v2635, 44
      %v2669 = vpop.permute.xlu0 %2668
      %2670 = vrot.lane.b32.xlu0 %v2637, 44
      %v2671 = vpop.permute.xlu0 %2670
      %2672 = vrot.lane.b32.xlu0 %v2639, 44
      %v2673 = vpop.permute.xlu0 %2672
      %2674 = vrot.lane.b32.xlu0 %v2641, 44
      %v2675 = vpop.permute.xlu0 %2674
      %2676 = vrot.lane.b32.xlu0 %v2643, 44
      %v2677 = vpop.permute.xlu0 %2676
      %2678 = vrot.lane.b32.xlu0 %v2645, 44
      %v2679 = vpop.permute.xlu0 %2678
      %2680 = vrot.lane.b32.xlu0 %v2647, 44
      %v2681 = vpop.permute.xlu0 %2680
      %2682 = vrot.lane.b32.xlu0 %v2649, 44
      %v2683 = vpop.permute.xlu0 %2682
      %2684 = vrot.lane.b32.xlu0 %v2651, 44
      %v2685 = vpop.permute.xlu0 %2684
      %2686 = vrot.lane.b32.xlu0 %v2653, 44
      %v2687 = vpop.permute.xlu0 %2686
      %2688 = vrot.lane.b32.xlu0 %v2655, 44
      %v2689 = vpop.permute.xlu0 %2688
      %2706 = vrot.lane.b32.xlu0 0, 48
      %v2707 = vpop.permute.xlu0 %2706
      %2708 = vrot.lane.b32.xlu0 %v1759, 48
      %v2709 = vpop.permute.xlu0 %2708
      %2710 = vrot.lane.b32.xlu0 %v1760, 48
      %v2711 = vpop.permute.xlu0 %2710
      %2712 = vrot.lane.b32.xlu0 %v1761, 48
      %v2713 = vpop.permute.xlu0 %2712
      %2714 = vrot.lane.b32.xlu0 %v1762, 48
      %v2715 = vpop.permute.xlu0 %2714
      %2716 = vrot.lane.b32.xlu0 %v1763, 48
      %v2717 = vpop.permute.xlu0 %2716
      %2718 = vrot.lane.b32.xlu0 %v1764, 48
      %v2719 = vpop.permute.xlu0 %2718
      %2720 = vrot.lane.b32.xlu0 %v1765, 48
      %v2721 = vpop.permute.xlu0 %2720
      %2722 = vrot.lane.b32.xlu0 %v1766, 48
      %v2723 = vpop.permute.xlu0 %2722
      %2724 = vrot.lane.b32.xlu0 %v1767, 48
      %v2725 = vpop.permute.xlu0 %2724
      %2726 = vrot.lane.b32.xlu0 %v1768, 48
      %v2727 = vpop.permute.xlu0 %2726
      %2728 = vrot.lane.b32.xlu0 %v1769, 48
      %v2729 = vpop.permute.xlu0 %2728
      %2730 = vrot.lane.b32.xlu0 %v1770, 48
      %v2731 = vpop.permute.xlu0 %2730
      %2732 = vrot.lane.b32.xlu0 %v1771, 48
      %v2733 = vpop.permute.xlu0 %2732
      %2734 = vrot.lane.b32.xlu0 %v1772, 48
      %v2735 = vpop.permute.xlu0 %2734
      %2736 = vrot.lane.b32.xlu0 %v1773, 48
      %v2737 = vpop.permute.xlu0 %2736
      %2738 = vrot.lane.b32.xlu0 %v1774, 48
      %v2739 = vpop.permute.xlu0 %2738
      %v2741 = vshll.u32 %v1711, 16
      %v2743 = vrot.slane %v2741, 1
      %v2744 = vsel %vm1065, %v2573, %v2743
      %v2745 = vshrl.u32 %v1711, 16
      %v2747 = vor.u32 %v2745, %v2743
      %2748 = vrot.lane.b32.xlu0 %v2457, 52
      %v2749 = vpop.permute.xlu0 %2748
      %2750 = vrot.lane.b32.xlu0 %v2466, 52
      %v2751 = vpop.permute.xlu0 %2750
      %2752 = vrot.lane.b32.xlu0 %v2474, 52
      %v2753 = vpop.permute.xlu0 %2752
      %2754 = vrot.lane.b32.xlu0 %v2482, 52
      %v2755 = vpop.permute.xlu0 %2754
      %2756 = vrot.lane.b32.xlu0 %v2490, 52
      %v2757 = vpop.permute.xlu0 %2756
      %2758 = vrot.lane.b32.xlu0 %v2498, 52
      %v2759 = vpop.permute.xlu0 %2758
      %2760 = vrot.lane.b32.xlu0 %v2506, 52
      %v2761 = vpop.permute.xlu0 %2760
      %2762 = vrot.lane.b32.xlu0 %v2514, 52
      %v2763 = vpop.permute.xlu0 %2762
      %2764 = vrot.lane.b32.xlu0 %v2522, 52
      %v2765 = vpop.permute.xlu0 %2764
      %2766 = vrot.lane.b32.xlu0 %v2530, 52
      %v2767 = vpop.permute.xlu0 %2766
      %2768 = vrot.lane.b32.xlu0 %v2538, 52
      %v2769 = vpop.permute.xlu0 %2768
      %2770 = vrot.lane.b32.xlu0 %v2546, 52
      %v2771 = vpop.permute.xlu0 %2770
      %2772 = vrot.lane.b32.xlu0 %v2554, 52
      %v2773 = vpop.permute.xlu0 %2772
      %2774 = vrot.lane.b32.xlu0 %v2562, 52
      %v2775 = vpop.permute.xlu0 %2774
      %2776 = vrot.lane.b32.xlu0 %v2570, 52
      %v2777 = vpop.permute.xlu0 %2776
      %2778 = vrot.lane.b32.xlu0 %v2744, 52
      %v2779 = vpop.permute.xlu0 %2778
      %2780 = vrot.lane.b32.xlu0 %v2747, 52
      %v2781 = vpop.permute.xlu0 %2780
      %v2798 = vrot.slane %v1775, 1
      %v2799 = vrot.slane %v1776, 1
      %v2800 = vsel %vm2000, %v2798, %v2799
      %v2801 = vrot.slane %v1777, 1
      %v2802 = vsel %vm2000, %v2799, %v2801
      %v2803 = vrot.slane %v1778, 1
      %v2804 = vsel %vm2000, %v2801, %v2803
      %v2805 = vrot.slane %v1779, 1
      %v2806 = vsel %vm2000, %v2803, %v2805
      %v2807 = vrot.slane %v1780, 1
      %v2808 = vsel %vm2000, %v2805, %v2807
      %v2809 = vrot.slane %v1781, 1
      %v2810 = vsel %vm2000, %v2807, %v2809
      %v2811 = vrot.slane %v1782, 1
      %v2812 = vsel %vm2000, %v2809, %v2811
      %v2813 = vrot.slane %v1783, 1
      %v2814 = vsel %vm2000, %v2811, %v2813
      %v2815 = vrot.slane %v1784, 1
      %v2816 = vsel %vm2000, %v2813, %v2815
      %v2817 = vrot.slane %v1785, 1
      %v2818 = vsel %vm2000, %v2815, %v2817
      %v2819 = vrot.slane %v1786, 1
      %v2820 = vsel %vm2000, %v2817, %v2819
      %v2821 = vrot.slane %v1787, 1
      %v2822 = vsel %vm2000, %v2819, %v2821
      %v2823 = vrot.slane %v1788, 1
      %v2824 = vsel %vm2000, %v2821, %v2823
      %v2825 = vrot.slane %v1789, 1
      %v2826 = vsel %vm2000, %v2823, %v2825
      %v2827 = vrot.slane %v1790, 1
      %v2828 = vsel %vm2000, %v2825, %v2827
      %v2829 = vsel %vm2000, %v2827, %v2001
      %2830 = vrot.lane.b32.xlu0 %v2798, 56
      %v2831 = vpop.permute.xlu0 %2830
      %2832 = vrot.lane.b32.xlu0 %v2800, 56
      %v2833 = vpop.permute.xlu0 %2832
      %2834 = vrot.lane.b32.xlu0 %v2802, 56
      %v2835 = vpop.permute.xlu0 %2834
      %2836 = vrot.lane.b32.xlu0 %v2804, 56
      %v2837 = vpop.permute.xlu0 %2836
      %2838 = vrot.lane.b32.xlu0 %v2806, 56
      %v2839 = vpop.permute.xlu0 %2838
      %2840 = vrot.lane.b32.xlu0 %v2808, 56
      %v2841 = vpop.permute.xlu0 %2840
      %2842 = vrot.lane.b32.xlu0 %v2810, 56
      %v2843 = vpop.permute.xlu0 %2842
      %2844 = vrot.lane.b32.xlu0 %v2812, 56
      %v2845 = vpop.permute.xlu0 %2844
      %2846 = vrot.lane.b32.xlu0 %v2814, 56
      %v2847 = vpop.permute.xlu0 %2846
      %2848 = vrot.lane.b32.xlu0 %v2816, 56
      %v2849 = vpop.permute.xlu0 %2848
      %2850 = vrot.lane.b32.xlu0 %v2818, 56
      %v2851 = vpop.permute.xlu0 %2850
      %2852 = vrot.lane.b32.xlu0 %v2820, 56
      %v2853 = vpop.permute.xlu0 %2852
      %2854 = vrot.lane.b32.xlu0 %v2822, 56
      %v2855 = vpop.permute.xlu0 %2854
      %2856 = vrot.lane.b32.xlu0 %v2824, 56
      %v2857 = vpop.permute.xlu0 %2856
      %2858 = vrot.lane.b32.xlu0 %v2826, 56
      %v2859 = vpop.permute.xlu0 %2858
      %2860 = vrot.lane.b32.xlu0 %v2828, 56
      %v2861 = vpop.permute.xlu0 %2860
      %2862 = vrot.lane.b32.xlu0 %v2829, 56
      %v2863 = vpop.permute.xlu0 %2862
      %2880 = vrot.lane.b32.xlu0 %v1791, 60
      %v2881 = vpop.permute.xlu0 %2880
      %2882 = vrot.lane.b32.xlu0 %v1792, 60
      %v2883 = vpop.permute.xlu0 %2882
      %2884 = vrot.lane.b32.xlu0 %v1793, 60
      %v2885 = vpop.permute.xlu0 %2884
      %2886 = vrot.lane.b32.xlu0 %v1794, 60
      %v2887 = vpop.permute.xlu0 %2886
      %2888 = vrot.lane.b32.xlu0 %v1795, 60
      %v2889 = vpop.permute.xlu0 %2888
      %2890 = vrot.lane.b32.xlu0 %v1796, 60
      %v2891 = vpop.permute.xlu0 %2890
      %2892 = vrot.lane.b32.xlu0 %v1797, 60
      %v2893 = vpop.permute.xlu0 %2892
      %2894 = vrot.lane.b32.xlu0 %v1798, 60
      %v2895 = vpop.permute.xlu0 %2894
      %2896 = vrot.lane.b32.xlu0 %v1799, 60
      %v2897 = vpop.permute.xlu0 %2896
      %2898 = vrot.lane.b32.xlu0 %v1800, 60
      %v2899 = vpop.permute.xlu0 %2898
      %2900 = vrot.lane.b32.xlu0 %v1801, 60
      %v2901 = vpop.permute.xlu0 %2900
      %2902 = vrot.lane.b32.xlu0 %v1802, 60
      %v2903 = vpop.permute.xlu0 %2902
      %2904 = vrot.lane.b32.xlu0 %v1803, 60
      %v2905 = vpop.permute.xlu0 %2904
      %2906 = vrot.lane.b32.xlu0 %v1804, 60
      %v2907 = vpop.permute.xlu0 %2906
      %2908 = vrot.lane.b32.xlu0 %v1805, 60
      %v2909 = vpop.permute.xlu0 %2908
      %2910 = vrot.lane.b32.xlu0 %v1806, 60
      %v2911 = vpop.permute.xlu0 %2910
      %2912 = vrot.lane.b32.xlu0 0, 60
      %v2913 = vpop.permute.xlu0 %2912
      %vm2914 = vcmask 31744
      %v2916 = vsel %vm2914, 0, %v1950
      %v2918 = vsel %vm2914, 0, %v1952
      %v2921 = vsel %vm2914, %v1200, %v1954
      %v2924 = vsel %vm2914, %v1201, %v1956
      %v2927 = vsel %vm2914, %v1202, %v1958
      %v2930 = vsel %vm2914, %v1203, %v1960
      %v2933 = vsel %vm2914, %v1204, %v1962
      %v2936 = vsel %vm2914, %v1205, %v1964
      %v2939 = vsel %vm2914, %v1206, %v1966
      %v2942 = vsel %vm2914, %v1207, %v1968
      %v2945 = vsel %vm2914, %v1208, %v1970
      %v2948 = vsel %vm2914, %v1209, %v1972
      %v2951 = vsel %vm2914, %v1210, %v1974
      %v2954 = vsel %vm2914, %v1211, %v1976
      %v2957 = vsel %vm2914, %v1212, %v1978
      %v2960 = vsel %vm2914, %v1213, %v1980
      %v2963 = vsel %vm2914, %v1214, %v1982
      %vm2964 = vcmask 64512
      %v2966 = vsel %vm2964, %v2916, %v2035
      %v2968 = vsel %vm2964, %v2918, %v2037
      %v2970 = vsel %vm2964, %v2921, %v2039
      %v2972 = vsel %vm2964, %v2924, %v2041
      %v2974 = vsel %vm2964, %v2927, %v2043
      %v2976 = vsel %vm2964, %v2930, %v2045
      %v2978 = vsel %vm2964, %v2933, %v2047
      %v2980 = vsel %vm2964, %v2936, %v2049
      %v2982 = vsel %vm2964, %v2939, %v2051
      %v2984 = vsel %vm2964, %v2942, %v2053
      %v2986 = vsel %vm2964, %v2945, %v2055
      %v2988 = vsel %vm2964, %v2948, %v2057
      %v2990 = vsel %vm2964, %v2951, %v2059
      %v2992 = vsel %vm2964, %v2954, %v2061
      %v2994 = vsel %vm2964, %v2957, %v2063
      %v2996 = vsel %vm2964, %v2960, %v2065
      %v2998 = vsel %vm2964, %v2963, %v2067
      %vm2999 = vcmask 97280
      %v3001 = vsel %vm2999, %v2966, %v2085
      %v3003 = vsel %vm2999, %v2968, %v2087
      %v3005 = vsel %vm2999, %v2970, %v2089
      %v3007 = vsel %vm2999, %v2972, %v2091
      %v3009 = vsel %vm2999, %v2974, %v2093
      %v3011 = vsel %vm2999, %v2976, %v2095
      %v3013 = vsel %vm2999, %v2978, %v2097
      %v3015 = vsel %vm2999, %v2980, %v2099
      %v3017 = vsel %vm2999, %v2982, %v2101
      %v3019 = vsel %vm2999, %v2984, %v2103
      %v3021 = vsel %vm2999, %v2986, %v2105
      %v3023 = vsel %vm2999, %v2988, %v2107
      %v3025 = vsel %vm2999, %v2990, %v2109
      %v3027 = vsel %vm2999, %v2992, %v2111
      %v3029 = vsel %vm2999, %v2994, %v2113
      %v3031 = vsel %vm2999, %v2996, %v2115
      %v3033 = vsel %vm2999, %v2998, %v2117
      %vm3034 = vcmask 130048
      %v3036 = vsel %vm3034, %v3001, %v2127
      %v3038 = vsel %vm3034, %v3003, %v2129
      %v3040 = vsel %vm3034, %v3005, %v2131
      %v3042 = vsel %vm3034, %v3007, %v2133
      %v3044 = vsel %vm3034, %v3009, %v2135
      %v3046 = vsel %vm3034, %v3011, %v2137
      %v3048 = vsel %vm3034, %v3013, %v2139
      %v3050 = vsel %vm3034, %v3015, %v2141
      %v3052 = vsel %vm3034, %v3017, %v2143
      %v3054 = vsel %vm3034, %v3019, %v2145
      %v3056 = vsel %vm3034, %v3021, %v2147
      %v3058 = vsel %vm3034, %v3023, %v2149
      %v3060 = vsel %vm3034, %v3025, %v2151
      %v3062 = vsel %vm3034, %v3027, %v2153
      %v3064 = vsel %vm3034, %v3029, %v2155
      %v3066 = vsel %vm3034, %v3031, %v2157
      %v3068 = vsel %vm3034, %v3033, %v2159
      %vm3069 = vcmask 162816
      %v3071 = vsel %vm3069, %v3036, %v2209
      %v3073 = vsel %vm3069, %v3038, %v2211
      %v3075 = vsel %vm3069, %v3040, %v2213
      %v3077 = vsel %vm3069, %v3042, %v2215
      %v3079 = vsel %vm3069, %v3044, %v2217
      %v3081 = vsel %vm3069, %v3046, %v2219
      %v3083 = vsel %vm3069, %v3048, %v2221
      %v3085 = vsel %vm3069, %v3050, %v2223
      %v3087 = vsel %vm3069, %v3052, %v2225
      %v3089 = vsel %vm3069, %v3054, %v2227
      %v3091 = vsel %vm3069, %v3056, %v2229
      %v3093 = vsel %vm3069, %v3058, %v2231
      %v3095 = vsel %vm3069, %v3060, %v2233
      %v3097 = vsel %vm3069, %v3062, %v2235
      %v3099 = vsel %vm3069, %v3064, %v2237
      %v3101 = vsel %vm3069, %v3066, %v2239
      %v3103 = vsel %vm3069, %v3068, %v2241
      %vm3104 = vcmask 195584
      %v3106 = vsel %vm3104, %v3071, %v2259
      %v3108 = vsel %vm3104, %v3073, %v2261
      %v3110 = vsel %vm3104, %v3075, %v2263
      %v3112 = vsel %vm3104, %v3077, %v2265
      %v3114 = vsel %vm3104, %v3079, %v2267
      %v3116 = vsel %vm3104, %v3081, %v2269
      %v3118 = vsel %vm3104, %v3083, %v2271
      %v3120 = vsel %vm3104, %v3085, %v2273
      %v3122 = vsel %vm3104, %v3087, %v2275
      %v3124 = vsel %vm3104, %v3089, %v2277
      %v3126 = vsel %vm3104, %v3091, %v2279
      %v3128 = vsel %vm3104, %v3093, %v2281
      %v3130 = vsel %vm3104, %v3095, %v2283
      %v3132 = vsel %vm3104, %v3097, %v2285
      %v3134 = vsel %vm3104, %v3099, %v2287
      %v3136 = vsel %vm3104, %v3101, %v2289
      %v3138 = vsel %vm3104, %v3103, %v2291
      %vm3139 = vcmask 228352
      %v3141 = vsel %vm3139, %v3106, %v2294
      %v3143 = vsel %vm3139, %v3108, %v2296
      %v3145 = vsel %vm3139, %v3110, %v2298
      %v3147 = vsel %vm3139, %v3112, %v2300
      %v3149 = vsel %vm3139, %v3114, %v2302
      %v3151 = vsel %vm3139, %v3116, %v2304
      %v3153 = vsel %vm3139, %v3118, %v2306
      %v3155 = vsel %vm3139, %v3120, %v2308
      %v3157 = vsel %vm3139, %v3122, %v2310
      %v3159 = vsel %vm3139, %v3124, %v2312
      %v3161 = vsel %vm3139, %v3126, %v2314
      %v3163 = vsel %vm3139, %v3128, %v2316
      %v3165 = vsel %vm3139, %v3130, %v2318
      %v3167 = vsel %vm3139, %v3132, %v2320
      %v3169 = vsel %vm3139, %v3134, %v2322
      %v3171 = vsel %vm3139, %v3136, %v2324
      %v3173 = vsel %vm3139, %v3138, %v2326
      %vm3174 = vcmask 261120
      %v3176 = vsel %vm3174, %v3141, %v2374
      %v3178 = vsel %vm3174, %v3143, %v2376
      %v3180 = vsel %vm3174, %v3145, %v2378
      %v3182 = vsel %vm3174, %v3147, %v2380
      %v3184 = vsel %vm3174, %v3149, %v2382
      %v3186 = vsel %vm3174, %v3151, %v2384
      %v3188 = vsel %vm3174, %v3153, %v2386
      %v3190 = vsel %vm3174, %v3155, %v2388
      %v3192 = vsel %vm3174, %v3157, %v2390
      %v3194 = vsel %vm3174, %v3159, %v2392
      %v3196 = vsel %vm3174, %v3161, %v2394
      %v3198 = vsel %vm3174, %v3163, %v2396
      %v3200 = vsel %vm3174, %v3165, %v2398
      %v3202 = vsel %vm3174, %v3167, %v2400
      %v3204 = vsel %vm3174, %v3169, %v2402
      %v3206 = vsel %vm3174, %v3171, %v2404
      %v3208 = vsel %vm3174, %v3173, %v2406
      %vm3209 = vcmask 293888
      %v3211 = vsel %vm3209, %v3176, %v2423
      %v3212 = vsel %vm3209, %v3178, %v2423
      %v3214 = vsel %vm3209, %v3180, %v2425
      %v3216 = vsel %vm3209, %v3182, %v2427
      %v3218 = vsel %vm3209, %v3184, %v2429
      %v3220 = vsel %vm3209, %v3186, %v2431
      %v3222 = vsel %vm3209, %v3188, %v2433
      %v3224 = vsel %vm3209, %v3190, %v2435
      %v3226 = vsel %vm3209, %v3192, %v2437
      %v3228 = vsel %vm3209, %v3194, %v2439
      %v3230 = vsel %vm3209, %v3196, %v2441
      %v3232 = vsel %vm3209, %v3198, %v2443
      %v3234 = vsel %vm3209, %v3200, %v2445
      %v3236 = vsel %vm3209, %v3202, %v2447
      %v3238 = vsel %vm3209, %v3204, %v2449
      %v3240 = vsel %vm3209, %v3206, %v2451
      %v3242 = vsel %vm3209, %v3208, %v2453
      %vm3243 = vcmask 326656
      %v3245 = vsel %vm3243, %v3211, %v2575
      %v3247 = vsel %vm3243, %v3212, %v2577
      %v3249 = vsel %vm3243, %v3214, %v2579
      %v3251 = vsel %vm3243, %v3216, %v2581
      %v3253 = vsel %vm3243, %v3218, %v2583
      %v3255 = vsel %vm3243, %v3220, %v2585
      %v3257 = vsel %vm3243, %v3222, %v2587
      %v3259 = vsel %vm3243, %v3224, %v2589
      %v3261 = vsel %vm3243, %v3226, %v2591
      %v3263 = vsel %vm3243, %v3228, %v2593
      %v3265 = vsel %vm3243, %v3230, %v2595
      %v3267 = vsel %vm3243, %v3232, %v2597
      %v3269 = vsel %vm3243, %v3234, %v2599
      %v3271 = vsel %vm3243, %v3236, %v2601
      %v3273 = vsel %vm3243, %v3238, %v2603
      %v3275 = vsel %vm3243, %v3240, %v2605
      %v3277 = vsel %vm3243, %v3242, %v2607
      %vm3278 = vcmask 359424
      %v3280 = vsel %vm3278, %v3245, %v2657
      %v3282 = vsel %vm3278, %v3247, %v2659
      %v3284 = vsel %vm3278, %v3249, %v2661
      %v3286 = vsel %vm3278, %v3251, %v2663
      %v3288 = vsel %vm3278, %v3253, %v2665
      %v3290 = vsel %vm3278, %v3255, %v2667
      %v3292 = vsel %vm3278, %v3257, %v2669
      %v3294 = vsel %vm3278, %v3259, %v2671
      %v3296 = vsel %vm3278, %v3261, %v2673
      %v3298 = vsel %vm3278, %v3263, %v2675
      %v3300 = vsel %vm3278, %v3265, %v2677
      %v3302 = vsel %vm3278, %v3267, %v2679
      %v3304 = vsel %vm3278, %v3269, %v2681
      %v3306 = vsel %vm3278, %v3271, %v2683
      %v3308 = vsel %vm3278, %v3273, %v2685
      %v3310 = vsel %vm3278, %v3275, %v2687
      %v3312 = vsel %vm3278, %v3277, %v2689
      %vm3313 = vcmask 392192
      %v3315 = vsel %vm3313, %v3280, %v2707
      %v3317 = vsel %vm3313, %v3282, %v2709
      %v3319 = vsel %vm3313, %v3284, %v2711
      %v3321 = vsel %vm3313, %v3286, %v2713
      %v3323 = vsel %vm3313, %v3288, %v2715
      %v3325 = vsel %vm3313, %v3290, %v2717
      %v3327 = vsel %vm3313, %v3292, %v2719
      %v3329 = vsel %vm3313, %v3294, %v2721
      %v3331 = vsel %vm3313, %v3296, %v2723
      %v3333 = vsel %vm3313, %v3298, %v2725
      %v3335 = vsel %vm3313, %v3300, %v2727
      %v3337 = vsel %vm3313, %v3302, %v2729
      %v3339 = vsel %vm3313, %v3304, %v2731
      %v3341 = vsel %vm3313, %v3306, %v2733
      %v3343 = vsel %vm3313, %v3308, %v2735
      %v3345 = vsel %vm3313, %v3310, %v2737
      %v3347 = vsel %vm3313, %v3312, %v2739
      %vm3348 = vcmask 424960
      %v3350 = vsel %vm3348, %v3315, %v2749
      %v3352 = vsel %vm3348, %v3317, %v2751
      %v3354 = vsel %vm3348, %v3319, %v2753
      %v3356 = vsel %vm3348, %v3321, %v2755
      %v3358 = vsel %vm3348, %v3323, %v2757
      %v3360 = vsel %vm3348, %v3325, %v2759
      %v3362 = vsel %vm3348, %v3327, %v2761
      %v3364 = vsel %vm3348, %v3329, %v2763
      %v3366 = vsel %vm3348, %v3331, %v2765
      %v3368 = vsel %vm3348, %v3333, %v2767
      %v3370 = vsel %vm3348, %v3335, %v2769
      %v3372 = vsel %vm3348, %v3337, %v2771
      %v3374 = vsel %vm3348, %v3339, %v2773
      %v3376 = vsel %vm3348, %v3341, %v2775
      %v3378 = vsel %vm3348, %v3343, %v2777
      %v3380 = vsel %vm3348, %v3345, %v2779
      %v3382 = vsel %vm3348, %v3347, %v2781
      %vm3383 = vcmask 457728
      %v3385 = vsel %vm3383, %v3350, %v2831
      %v3387 = vsel %vm3383, %v3352, %v2833
      %v3389 = vsel %vm3383, %v3354, %v2835
      %v3391 = vsel %vm3383, %v3356, %v2837
      %v3393 = vsel %vm3383, %v3358, %v2839
      %v3395 = vsel %vm3383, %v3360, %v2841
      %v3397 = vsel %vm3383, %v3362, %v2843
      %v3399 = vsel %vm3383, %v3364, %v2845
      %v3401 = vsel %vm3383, %v3366, %v2847
      %v3403 = vsel %vm3383, %v3368, %v2849
      %v3405 = vsel %vm3383, %v3370, %v2851
      %v3407 = vsel %vm3383, %v3372, %v2853
      %v3409 = vsel %vm3383, %v3374, %v2855
      %v3411 = vsel %vm3383, %v3376, %v2857
      %v3413 = vsel %vm3383, %v3378, %v2859
      %v3415 = vsel %vm3383, %v3380, %v2861
      %v3417 = vsel %vm3383, %v3382, %v2863
      %vm3418 = vcmask 490496
      %v3420 = vsel %vm3418, %v3385, %v2881
      %v3422 = vsel %vm3418, %v3387, %v2883
      %v3424 = vsel %vm3418, %v3389, %v2885
      %v3426 = vsel %vm3418, %v3391, %v2887
      %v3428 = vsel %vm3418, %v3393, %v2889
      %v3430 = vsel %vm3418, %v3395, %v2891
      %v3432 = vsel %vm3418, %v3397, %v2893
      %v3434 = vsel %vm3418, %v3399, %v2895
      %v3436 = vsel %vm3418, %v3401, %v2897
      %v3438 = vsel %vm3418, %v3403, %v2899
      %v3440 = vsel %vm3418, %v3405, %v2901
      %v3442 = vsel %vm3418, %v3407, %v2903
      %v3444 = vsel %vm3418, %v3409, %v2905
      %v3446 = vsel %vm3418, %v3411, %v2907
      %v3448 = vsel %vm3418, %v3413, %v2909
      %v3450 = vsel %vm3418, %v3415, %v2911
      %v3452 = vsel %vm3418, %v3417, %v2913
      %v3454 = vshrl.u32 %v1807, 16
      %v3456 = vshll.u32 %v1807, 16
      %v3458 = vrot.slane %v3456, 1
      %v3459 = vor.u32 %v3454, %v3458
      %v3461 = vshll.u32 %v1808, 16
      %v3463 = vrot.slane %v3461, 1
      %v3464 = vsel %vm1065, %v3459, %v3463
      %v3465 = vshrl.u32 %v1808, 16
      %v3467 = vor.u32 %v3465, %v3463
      %v3469 = vshll.u32 %v1809, 16
      %v3471 = vrot.slane %v3469, 1
      %v3472 = vsel %vm1065, %v3467, %v3471
      %v3473 = vshrl.u32 %v1809, 16
      %v3475 = vor.u32 %v3473, %v3471
      %v3477 = vshll.u32 %v1810, 16
      %v3479 = vrot.slane %v3477, 1
      %v3480 = vsel %vm1065, %v3475, %v3479
      %v3481 = vshrl.u32 %v1810, 16
      %v3483 = vor.u32 %v3481, %v3479
      %v3485 = vshll.u32 %v1811, 16
      %v3487 = vrot.slane %v3485, 1
      %v3488 = vsel %vm1065, %v3483, %v3487
      %v3489 = vshrl.u32 %v1811, 16
      %v3491 = vor.u32 %v3489, %v3487
      %v3493 = vshll.u32 %v1812, 16
      %v3495 = vrot.slane %v3493, 1
      %v3496 = vsel %vm1065, %v3491, %v3495
      %v3497 = vshrl.u32 %v1812, 16
      %v3499 = vor.u32 %v3497, %v3495
      %v3501 = vshll.u32 %v1813, 16
      %v3503 = vrot.slane %v3501, 1
      %v3504 = vsel %vm1065, %v3499, %v3503
      %v3505 = vshrl.u32 %v1813, 16
      %v3507 = vor.u32 %v3505, %v3503
      %v3509 = vshll.u32 %v1814, 16
      %v3511 = vrot.slane %v3509, 1
      %v3512 = vsel %vm1065, %v3507, %v3511
      %v3513 = vshrl.u32 %v1814, 16
      %v3515 = vor.u32 %v3513, %v3511
      %v3517 = vshll.u32 %v1815, 16
      %v3519 = vrot.slane %v3517, 1
      %v3520 = vsel %vm1065, %v3515, %v3519
      %v3521 = vshrl.u32 %v1815, 16
      %v3523 = vor.u32 %v3521, %v3519
      %v3525 = vshll.u32 %v1816, 16
      %v3527 = vrot.slane %v3525, 1
      %v3528 = vsel %vm1065, %v3523, %v3527
      %v3529 = vshrl.u32 %v1816, 16
      %v3531 = vor.u32 %v3529, %v3527
      %v3533 = vshll.u32 %v1817, 16
      %v3535 = vrot.slane %v3533, 1
      %v3536 = vsel %vm1065, %v3531, %v3535
      %v3537 = vshrl.u32 %v1817, 16
      %v3539 = vor.u32 %v3537, %v3535
      %v3541 = vshll.u32 %v1818, 16
      %v3543 = vrot.slane %v3541, 1
      %v3544 = vsel %vm1065, %v3539, %v3543
      %v3545 = vshrl.u32 %v1818, 16
      %v3547 = vor.u32 %v3545, %v3543
      %v3549 = vshll.u32 %v1819, 16
      %v3551 = vrot.slane %v3549, 1
      %v3552 = vsel %vm1065, %v3547, %v3551
      %v3553 = vshrl.u32 %v1819, 16
      %v3555 = vor.u32 %v3553, %v3551
      %v3557 = vshll.u32 %v1820, 16
      %v3559 = vrot.slane %v3557, 1
      %v3560 = vsel %vm1065, %v3555, %v3559
      %v3561 = vshrl.u32 %v1820, 16
      %v3563 = vor.u32 %v3561, %v3559
      %v3565 = vshll.u32 %v1821, 16
      %v3567 = vrot.slane %v3565, 1
      %v3568 = vsel %vm1065, %v3563, %v3567
      %v3569 = vshrl.u32 %v1821, 16
      %v3571 = vor.u32 %v3569, %v3567
      %v3572 = vsel %vm1065, %v3571, %v1825
      %v3573 = vsel %vm1065, %v1828, %v1825
      %3574 = vrot.lane.b32.xlu0 %v3464, 4
      %v3575 = vpop.permute.xlu0 %3574
      %3576 = vrot.lane.b32.xlu0 %v3472, 4
      %v3577 = vpop.permute.xlu0 %3576
      %3578 = vrot.lane.b32.xlu0 %v3480, 4
      %v3579 = vpop.permute.xlu0 %3578
      %3580 = vrot.lane.b32.xlu0 %v3488, 4
      %v3581 = vpop.permute.xlu0 %3580
      %3582 = vrot.lane.b32.xlu0 %v3496, 4
      %v3583 = vpop.permute.xlu0 %3582
      %3584 = vrot.lane.b32.xlu0 %v3504, 4
      %v3585 = vpop.permute.xlu0 %3584
      %3586 = vrot.lane.b32.xlu0 %v3512, 4
      %v3587 = vpop.permute.xlu0 %3586
      %3588 = vrot.lane.b32.xlu0 %v3520, 4
      %v3589 = vpop.permute.xlu0 %3588
      %3590 = vrot.lane.b32.xlu0 %v3528, 4
      %v3591 = vpop.permute.xlu0 %3590
      %3592 = vrot.lane.b32.xlu0 %v3536, 4
      %v3593 = vpop.permute.xlu0 %3592
      %3594 = vrot.lane.b32.xlu0 %v3544, 4
      %v3595 = vpop.permute.xlu0 %3594
      %3596 = vrot.lane.b32.xlu0 %v3552, 4
      %v3597 = vpop.permute.xlu0 %3596
      %3598 = vrot.lane.b32.xlu0 %v3560, 4
      %v3599 = vpop.permute.xlu0 %3598
      %3600 = vrot.lane.b32.xlu0 %v3568, 4
      %v3601 = vpop.permute.xlu0 %3600
      %3602 = vrot.lane.b32.xlu0 %v3572, 4
      %v3603 = vpop.permute.xlu0 %3602
      %3604 = vrot.lane.b32.xlu0 %v3573, 4
      %v3605 = vpop.permute.xlu0 %3604
      %v3607 = vsel %vm2914, %v1697, %v3575
      %v3609 = vsel %vm2914, %v1698, %v3577
      %v3611 = vsel %vm2914, %v1699, %v3579
      %v3613 = vsel %vm2914, %v1700, %v3581
      %v3615 = vsel %vm2914, %v1701, %v3583
      %v3617 = vsel %vm2914, %v1702, %v3585
      %v3619 = vsel %vm2914, %v1703, %v3587
      %v3621 = vsel %vm2914, %v1704, %v3589
      %v3623 = vsel %vm2914, %v1705, %v3591
      %v3625 = vsel %vm2914, %v1706, %v3593
      %v3627 = vsel %vm2914, %v1707, %v3595
      %v3629 = vsel %vm2914, %v1708, %v3597
      %v3631 = vsel %vm2914, %v1709, %v3599
      %v3633 = vsel %vm2914, %v1710, %v3601
      %v3635 = vsel %vm2914, %v1711, %v3603
      %v3637 = vsel %vm2914, 0, %v3605
      %v3638 = vshll.u32 %v3607, 16
      %v3640 = vrot.slane %v3638, 1
      %v3641 = vshrl.u32 %v3607, 16
      %v3643 = vor.u32 %v3641, %v3640
      %v3644 = vshll.u32 %v3609, 16
      %v3646 = vrot.slane %v3644, 1
      %v3647 = vsel %vm1065, %v3643, %v3646
      %v3648 = vshrl.u32 %v3609, 16
      %v3650 = vor.u32 %v3648, %v3646
      %v3651 = vshll.u32 %v3611, 16
      %v3653 = vrot.slane %v3651, 1
      %v3654 = vsel %vm1065, %v3650, %v3653
      %v3655 = vshrl.u32 %v3611, 16
      %v3657 = vor.u32 %v3655, %v3653
      %v3658 = vshll.u32 %v3613, 16
      %v3660 = vrot.slane %v3658, 1
      %v3661 = vsel %vm1065, %v3657, %v3660
      %v3662 = vshrl.u32 %v3613, 16
      %v3664 = vor.u32 %v3662, %v3660
      %v3665 = vshll.u32 %v3615, 16
      %v3667 = vrot.slane %v3665, 1
      %v3668 = vsel %vm1065, %v3664, %v3667
      %v3669 = vshrl.u32 %v3615, 16
      %v3671 = vor.u32 %v3669, %v3667
      %v3672 = vshll.u32 %v3617, 16
      %v3674 = vrot.slane %v3672, 1
      %v3675 = vsel %vm1065, %v3671, %v3674
      %v3676 = vshrl.u32 %v3617, 16
      %v3678 = vor.u32 %v3676, %v3674
      %v3679 = vshll.u32 %v3619, 16
      %v3681 = vrot.slane %v3679, 1
      %v3682 = vsel %vm1065, %v3678, %v3681
      %v3683 = vshrl.u32 %v3619, 16
      %v3685 = vor.u32 %v3683, %v3681
      %v3686 = vshll.u32 %v3621, 16
      %v3688 = vrot.slane %v3686, 1
      %v3689 = vsel %vm1065, %v3685, %v3688
      %v3690 = vshrl.u32 %v3621, 16
      %v3692 = vor.u32 %v3690, %v3688
      %v3693 = vshll.u32 %v3623, 16
      %v3695 = vrot.slane %v3693, 1
      %v3696 = vsel %vm1065, %v3692, %v3695
      %v3697 = vshrl.u32 %v3623, 16
      %v3699 = vor.u32 %v3697, %v3695
      %v3700 = vshll.u32 %v3625, 16
      %v3702 = vrot.slane %v3700, 1
      %v3703 = vsel %vm1065, %v3699, %v3702
      %v3704 = vshrl.u32 %v3625, 16
      %v3706 = vor.u32 %v3704, %v3702
      %v3707 = vshll.u32 %v3627, 16
      %v3709 = vrot.slane %v3707, 1
      %v3710 = vsel %vm1065, %v3706, %v3709
      %v3711 = vshrl.u32 %v3627, 16
      %v3713 = vor.u32 %v3711, %v3709
      %v3714 = vshll.u32 %v3629, 16
      %v3716 = vrot.slane %v3714, 1
      %v3717 = vsel %vm1065, %v3713, %v3716
      %v3718 = vshrl.u32 %v3629, 16
      %v3720 = vor.u32 %v3718, %v3716
      %v3721 = vshll.u32 %v3631, 16
      %v3723 = vrot.slane %v3721, 1
      %v3724 = vsel %vm1065, %v3720, %v3723
      %v3725 = vshrl.u32 %v3631, 16
      %v3727 = vor.u32 %v3725, %v3723
      %v3728 = vshll.u32 %v3633, 16
      %v3730 = vrot.slane %v3728, 1
      %v3731 = vsel %vm1065, %v3727, %v3730
      %v3732 = vshrl.u32 %v3633, 16
      %v3734 = vor.u32 %v3732, %v3730
      %v3735 = vshll.u32 %v3635, 16
      %v3737 = vrot.slane %v3735, 1
      %v3738 = vsel %vm1065, %v3734, %v3737
      %v3739 = vshrl.u32 %v3635, 16
      %v3741 = vor.u32 %v3739, %v3737
      %v3742 = vshll.u32 %v3637, 16
      %v3744 = vrot.slane %v3742, 1
      %v3745 = vsel %vm1065, %v3741, %v3744
      %v3746 = vshrl.u32 %v3637, 16
      %v3748 = vor.u32 %v3746, %v3744
      %3749 = vrot.lane.b32.xlu0 %v3640, 64
      %v3750 = vpop.permute.xlu0 %3749
      %3751 = vrot.lane.b32.xlu0 %v3647, 64
      %v3752 = vpop.permute.xlu0 %3751
      %3753 = vrot.lane.b32.xlu0 %v3654, 64
      %v3754 = vpop.permute.xlu0 %3753
      %3755 = vrot.lane.b32.xlu0 %v3661, 64
      %v3756 = vpop.permute.xlu0 %3755
      %3757 = vrot.lane.b32.xlu0 %v3668, 64
      %v3758 = vpop.permute.xlu0 %3757
      %3759 = vrot.lane.b32.xlu0 %v3675, 64
      %v3760 = vpop.permute.xlu0 %3759
      %3761 = vrot.lane.b32.xlu0 %v3682, 64
      %v3762 = vpop.permute.xlu0 %3761
      %3763 = vrot.lane.b32.xlu0 %v3689, 64
      %v3764 = vpop.permute.xlu0 %3763
      %3765 = vrot.lane.b32.xlu0 %v3696, 64
      %v3766 = vpop.permute.xlu0 %3765
      %3767 = vrot.lane.b32.xlu0 %v3703, 64
      %v3768 = vpop.permute.xlu0 %3767
      %3769 = vrot.lane.b32.xlu0 %v3710, 64
      %v3770 = vpop.permute.xlu0 %3769
      %3771 = vrot.lane.b32.xlu0 %v3717, 64
      %v3772 = vpop.permute.xlu0 %3771
      %3773 = vrot.lane.b32.xlu0 %v3724, 64
      %v3774 = vpop.permute.xlu0 %3773
      %3775 = vrot.lane.b32.xlu0 %v3731, 64
      %v3776 = vpop.permute.xlu0 %3775
      %3777 = vrot.lane.b32.xlu0 %v3738, 64
      %v3778 = vpop.permute.xlu0 %3777
      %3779 = vrot.lane.b32.xlu0 %v3745, 64
      %v3780 = vpop.permute.xlu0 %3779
      %3781 = vrot.lane.b32.xlu0 %v3748, 64
      %v3782 = vpop.permute.xlu0 %3781
      %vm3783 = vcmask 523264
      %v3785 = vsel %vm3783, %v3420, %v3750
      %v3787 = vsel %vm3783, %v3422, %v3752
      %v3789 = vsel %vm3783, %v3424, %v3754
      %v3791 = vsel %vm3783, %v3426, %v3756
      %v3793 = vsel %vm3783, %v3428, %v3758
      %v3795 = vsel %vm3783, %v3430, %v3760
      %v3797 = vsel %vm3783, %v3432, %v3762
      %v3799 = vsel %vm3783, %v3434, %v3764
      %v3801 = vsel %vm3783, %v3436, %v3766
      %v3803 = vsel %vm3783, %v3438, %v3768
      %v3805 = vsel %vm3783, %v3440, %v3770
      %v3807 = vsel %vm3783, %v3442, %v3772
      %v3809 = vsel %vm3783, %v3444, %v3774
      %v3811 = vsel %vm3783, %v3446, %v3776
      %v3813 = vsel %vm3783, %v3448, %v3778
      %v3815 = vsel %vm3783, %v3450, %v3780
      %v3817 = vsel %vm3783, %v3452, %v3782
      %v3818 = vld [vmem:[%s2] sm:$0xf]
      %v3819 = vld [vmem:[%s2 + $0x4] sm:$0xf]
      %v3820 = vld [vmem:[%s2 + $0x8] sm:$0xf]
      %v3821 = vld [vmem:[%s2 + $0xc] sm:$0xf]
      %v3822 = vld [vmem:[%s2 + $0x10] sm:$0xf]
      %v3823 = vld [vmem:[%s2 + $0x14] sm:$0xf]
      %v3824 = vld [vmem:[%s2 + $0x18] sm:$0xf]
      %v3825 = vld [vmem:[%s2 + $0x1c] sm:$0xf]
      %v3826 = vld [vmem:[%s2 + $0x20] sm:$0xf]
      %v3827 = vld [vmem:[%s3] sm:$0x1]
      %v3828 = vld [vmem:[%s4] sm:$0x1]
      %v3829 = vld [vmem:[%s5] sm:$0x1]
      %v3831 = vlaneseq
      %v3832 = vshrl.u32 %v3831, 7
      %v3833 = vsub.s32 0, %v3832
      %v3834 = vrot.slane %v3827, %v3833
      %v3836 = vshrl.u32 %v3785, 16
      %v3838 = vrot.slane %v3836, 7
      %v3839 = vshrl.u32 %v3787, 16
      %v3841 = vrot.slane %v3839, 7
      %v3842 = vshll.u32 %v3787, 16
      %v3844 = vor.u32 %v3841, %v3842
      %v3845 = vsel %vm1359, %v3838, %v3844
      %v3846 = vshrl.u32 %v3789, 16
      %v3848 = vrot.slane %v3846, 7
      %v3849 = vshll.u32 %v3789, 16
      %v3851 = vor.u32 %v3848, %v3849
      %v3852 = vsel %vm1359, %v3841, %v3851
      %v3853 = vshrl.u32 %v3791, 16
      %v3855 = vrot.slane %v3853, 7
      %v3856 = vshll.u32 %v3791, 16
      %v3858 = vor.u32 %v3855, %v3856
      %v3859 = vsel %vm1359, %v3848, %v3858
      %v3860 = vshrl.u32 %v3793, 16
      %v3862 = vrot.slane %v3860, 7
      %v3863 = vshll.u32 %v3793, 16
      %v3865 = vor.u32 %v3862, %v3863
      %v3866 = vsel %vm1359, %v3855, %v3865
      %v3867 = vshrl.u32 %v3795, 16
      %v3869 = vrot.slane %v3867, 7
      %v3870 = vshll.u32 %v3795, 16
      %v3872 = vor.u32 %v3869, %v3870
      %v3873 = vsel %vm1359, %v3862, %v3872
      %v3874 = vshrl.u32 %v3797, 16
      %v3876 = vrot.slane %v3874, 7
      %v3877 = vshll.u32 %v3797, 16
      %v3879 = vor.u32 %v3876, %v3877
      %v3880 = vsel %vm1359, %v3869, %v3879
      %v3881 = vshrl.u32 %v3799, 16
      %v3883 = vrot.slane %v3881, 7
      %v3884 = vshll.u32 %v3799, 16
      %v3886 = vor.u32 %v3883, %v3884
      %v3887 = vsel %vm1359, %v3876, %v3886
      %v3888 = vshrl.u32 %v3801, 16
      %v3890 = vrot.slane %v3888, 7
      %v3891 = vshll.u32 %v3801, 16
      %v3893 = vor.u32 %v3890, %v3891
      %v3894 = vsel %vm1359, %v3883, %v3893
      %v3895 = vshrl.u32 %v3803, 16
      %v3897 = vrot.slane %v3895, 7
      %v3898 = vshll.u32 %v3803, 16
      %v3900 = vor.u32 %v3897, %v3898
      %v3901 = vsel %vm1359, %v3890, %v3900
      %v3902 = vshrl.u32 %v3805, 16
      %v3904 = vrot.slane %v3902, 7
      %v3905 = vshll.u32 %v3805, 16
      %v3907 = vor.u32 %v3904, %v3905
      %v3908 = vsel %vm1359, %v3897, %v3907
      %v3909 = vshrl.u32 %v3807, 16
      %v3911 = vrot.slane %v3909, 7
      %v3912 = vshll.u32 %v3807, 16
      %v3914 = vor.u32 %v3911, %v3912
      %v3915 = vsel %vm1359, %v3904, %v3914
      %v3916 = vshrl.u32 %v3809, 16
      %v3918 = vrot.slane %v3916, 7
      %v3919 = vshll.u32 %v3809, 16
      %v3921 = vor.u32 %v3918, %v3919
      %v3922 = vsel %vm1359, %v3911, %v3921
      %v3923 = vshrl.u32 %v3811, 16
      %v3925 = vrot.slane %v3923, 7
      %v3926 = vshll.u32 %v3811, 16
      %v3928 = vor.u32 %v3925, %v3926
      %v3929 = vsel %vm1359, %v3918, %v3928
      %v3930 = vshrl.u32 %v3813, 16
      %v3932 = vrot.slane %v3930, 7
      %v3933 = vshll.u32 %v3813, 16
      %v3935 = vor.u32 %v3932, %v3933
      %v3936 = vsel %vm1359, %v3925, %v3935
      %v3937 = vshrl.u32 %v3815, 16
      %v3939 = vrot.slane %v3937, 7
      %v3940 = vshll.u32 %v3815, 16
      %v3942 = vor.u32 %v3939, %v3940
      %v3943 = vsel %vm1359, %v3932, %v3942
      %v3944 = vshrl.u32 %v3817, 16
      %v3946 = vrot.slane %v3944, 7
      %v3947 = vshll.u32 %v3817, 16
      %v3949 = vor.u32 %v3946, %v3947
      %v3950 = vsel %vm1359, %v3939, %v3949
      %v3960 = vunpack.c.l.b16 %v3818
      %v3961 = vunpack.c.l.b16 %v3819
      %v3962 = vunpack.c.l.b16 %v3820
      %v3963 = vunpack.c.l.b16 %v3821
      %v3964 = vunpack.c.l.b16 %v3822
      %v3965 = vunpack.c.l.b16 %v3823
      %v3966 = vunpack.c.l.b16 %v3824
      %v3967 = vunpack.c.l.b16 %v3825
      %v3968 = vunpack.c.l.b16 %v3826
      %v3969 = vpack.c.b16 %v3961, %v3960
      %v3970 = vpack.c.b16 %v3963, %v3962
      %v3971 = vpack.c.b16 %v3965, %v3964
      %v3972 = vpack.c.b16 %v3967, %v3966
      %v3973 = vpack.c.b16 %v3968, %v3968
      %vm3978 = vcmask 588800
      %v3980 = vsel %vm3978, %v3845, 0
      %v3983 = vsel %vm3978, %v3852, 0
      %v3986 = vsel %vm3978, %v3859, 0
      %v3989 = vsel %vm3978, %v3866, 0
      %v3992 = vsel %vm3978, %v3873, 0
      %v3995 = vsel %vm3978, %v3880, 0
      %v3998 = vsel %vm3978, %v3887, 0
      %v4001 = vsel %vm3978, %v3894, 0
      %v4004 = vsel %vm3978, %v3901, 0
      %v4007 = vsel %vm3978, %v3908, 0
      %v4010 = vsel %vm3978, %v3915, 0
      %v4013 = vsel %vm3978, %v3922, 0
      %v4016 = vsel %vm3978, %v3929, 0
      %v4019 = vsel %vm3978, %v3936, 0
      %v4022 = vsel %vm3978, %v3943, 0
      %v4025 = vsel %vm3978, %v3950, 0
      %vm4027 = vcmask 1043456
      %v4029 = vsel %vm4027, %v3973, 0
      %4031 = vmatprep.subr.bf16.mxu0 0
      %4032 = vmatpush1.bf16.msra.mxu0 %v3969
      %4033 = vmatprep.subr.bf16.mxu0 0
      %4034 = vmatpush1.bf16.msra.mxu0 %v3970
      %4035 = vmatprep.subr.bf16.mxu0 0
      %4036 = vmatpush1.bf16.msra.mxu0 %v3971
      %4037 = vmatprep.subr.bf16.mxu0 0
      %4038 = vmatpush1.bf16.msra.mxu0 %v3972
      %4039 = vmatprep.subr.bf16.mxu0 0
      %4040 = vmatpush1.bf16.msra.mxu0 %v4029
      %4041 = vmatprep.subr.bf16.mxu0 0
      %4042 = vmatpush1.bf16.msra.mxu0 0
      %4043 = vmatprep.subr.bf16.mxu0 0
      %4044 = vmatpush1.bf16.msra.mxu0 0
      %4045 = vmatprep.subr.bf16.mxu0 0
      %4046 = vmatpush1.bf16.msra.mxu0 0
      %4047 = vmatprep.subr.bf16.mxu0 0
      %4048 = vmatpush1.bf16.msra.mxu0 0
      %4049 = vmatprep.subr.bf16.mxu0 0
      %4050 = vmatpush1.bf16.msra.mxu0 0
      %4051 = vmatprep.subr.bf16.mxu0 0
      %4052 = vmatpush1.bf16.msra.mxu0 0
      %4053 = vmatprep.subr.bf16.mxu0 0
      %4054 = vmatpush1.bf16.msra.mxu0 0
      %4055 = vmatprep.subr.bf16.mxu0 0
      %4056 = vmatpush1.bf16.msra.mxu0 0
      %4057 = vmatprep.subr.bf16.mxu0 0
      %4058 = vmatpush1.bf16.msra.mxu0 0
      %4059 = vmatprep.subr.bf16.mxu0 0
      %4060 = vmatpush1.bf16.msra.mxu0 0
      %4061 = vmatprep.subr.bf16.mxu0 0
      %4062 = vmatpush1.bf16.msra.mxu0 0
      %4063 = vmatprep.mubr.bf16.mxu0 0
      %4064 = vmatmul.mubr.bf16.gmra.mrb[0].mxu0 %v3980
      %v4065 = vpop.f32.mrb[0].mxu0
      %v4066 = vadd.f32 %v3834, %v4065
      %v4067 = vpop.f32.mrb[0].mxu0
      %v4068 = vpop.f32.mrb[0].mxu0
      %v4069 = vadd.f32 %v3834, %v4068
      %v4070 = vpop.f32.mrb[0].mxu0
      %4071 = vmatprep.mubr.bf16.mxu0 0
      %4072 = vmatmul.mubr.bf16.gmra.mrb[0].mxu0 %v3983
      %v4073 = vpop.f32.mrb[0].mxu0
      %v4074 = vadd.f32 %v3834, %v4073
      %v4075 = vpop.f32.mrb[0].mxu0
      %v4076 = vpop.f32.mrb[0].mxu0
      %v4077 = vadd.f32 %v3834, %v4076
      %v4078 = vpop.f32.mrb[0].mxu0
      %4079 = vmatprep.mubr.bf16.mxu0 0
      %4080 = vmatmul.mubr.bf16.gmra.mrb[0].mxu0 %v3986
      %v4081 = vpop.f32.mrb[0].mxu0
      %v4082 = vadd.f32 %v3834, %v4081
      %v4083 = vpop.f32.mrb[0].mxu0
      %v4084 = vpop.f32.mrb[0].mxu0
      %v4085 = vadd.f32 %v3834, %v4084
      %v4086 = vpop.f32.mrb[0].mxu0
      %4087 = vmatprep.mubr.bf16.mxu0 0
      %4088 = vmatmul.mubr.bf16.gmra.mrb[0].mxu0 %v3989
      %v4089 = vpop.f32.mrb[0].mxu0
      %v4090 = vadd.f32 %v3834, %v4089
      %v4091 = vpop.f32.mrb[0].mxu0
      %v4092 = vpop.f32.mrb[0].mxu0
      %v4093 = vadd.f32 %v3834, %v4092
      %v4094 = vpop.f32.mrb[0].mxu0
      %4095 = vmatprep.mubr.bf16.mxu0 0
      %4096 = vmatmul.mubr.bf16.gmra.mrb[0].mxu0 %v3992
      %v4097 = vpop.f32.mrb[0].mxu0
      %v4098 = vadd.f32 %v3834, %v4097
      %v4099 = vpop.f32.mrb[0].mxu0
      %v4100 = vpop.f32.mrb[0].mxu0
      %v4101 = vadd.f32 %v3834, %v4100
      %v4102 = vpop.f32.mrb[0].mxu0
      %4103 = vmatprep.mubr.bf16.mxu0 0
      %4104 = vmatmul.mubr.bf16.gmra.mrb[0].mxu0 %v3995
      %v4105 = vpop.f32.mrb[0].mxu0
      %v4106 = vadd.f32 %v3834, %v4105
      %v4107 = vpop.f32.mrb[0].mxu0
      %v4108 = vpop.f32.mrb[0].mxu0
      %v4109 = vadd.f32 %v3834, %v4108
      %v4110 = vpop.f32.mrb[0].mxu0
      %4111 = vmatprep.mubr.bf16.mxu0 0
      %4112 = vmatmul.mubr.bf16.gmra.mrb[0].mxu0 %v3998
      %v4113 = vpop.f32.mrb[0].mxu0
      %v4114 = vadd.f32 %v3834, %v4113
      %v4115 = vpop.f32.mrb[0].mxu0
      %v4116 = vpop.f32.mrb[0].mxu0
      %v4117 = vadd.f32 %v3834, %v4116
      %v4118 = vpop.f32.mrb[0].mxu0
      %4119 = vmatprep.mubr.bf16.mxu0 0
      %4120 = vmatmul.mubr.bf16.gmra.mrb[0].mxu0 %v4001
      %v4121 = vpop.f32.mrb[0].mxu0
      %v4122 = vadd.f32 %v3834, %v4121
      %v4123 = vpop.f32.mrb[0].mxu0
      %v4124 = vpop.f32.mrb[0].mxu0
      %v4125 = vadd.f32 %v3834, %v4124
      %v4126 = vpop.f32.mrb[0].mxu0
      %4127 = vmatprep.mubr.bf16.mxu0 0
      %4128 = vmatmul.mubr.bf16.gmra.mrb[0].mxu0 %v4004
      %v4129 = vpop.f32.mrb[0].mxu0
      %v4130 = vadd.f32 %v3834, %v4129
      %v4131 = vpop.f32.mrb[0].mxu0
      %v4132 = vpop.f32.mrb[0].mxu0
      %v4133 = vadd.f32 %v3834, %v4132
      %v4134 = vpop.f32.mrb[0].mxu0
      %4135 = vmatprep.mubr.bf16.mxu0 0
      %4136 = vmatmul.mubr.bf16.gmra.mrb[0].mxu0 %v4007
      %v4137 = vpop.f32.mrb[0].mxu0
      %v4138 = vadd.f32 %v3834, %v4137
      %v4139 = vpop.f32.mrb[0].mxu0
      %v4140 = vpop.f32.mrb[0].mxu0
      %v4141 = vadd.f32 %v3834, %v4140
      %v4142 = vpop.f32.mrb[0].mxu0
      %4143 = vmatprep.mubr.bf16.mxu0 0
      %4144 = vmatmul.mubr.bf16.gmra.mrb[0].mxu0 %v4010
      %v4145 = vpop.f32.mrb[0].mxu0
      %v4146 = vadd.f32 %v3834, %v4145
      %v4147 = vpop.f32.mrb[0].mxu0
      %v4148 = vpop.f32.mrb[0].mxu0
      %v4149 = vadd.f32 %v3834, %v4148
      %v4150 = vpop.f32.mrb[0].mxu0
      %4151 = vmatprep.mubr.bf16.mxu0 0
      %4152 = vmatmul.mubr.bf16.gmra.mrb[0].mxu0 %v4013
      %v4153 = vpop.f32.mrb[0].mxu0
      %v4154 = vadd.f32 %v3834, %v4153
      %v4155 = vpop.f32.mrb[0].mxu0
      %v4156 = vpop.f32.mrb[0].mxu0
      %v4157 = vadd.f32 %v3834, %v4156
      %v4158 = vpop.f32.mrb[0].mxu0
      %4159 = vmatprep.mubr.bf16.mxu0 0
      %4160 = vmatmul.mubr.bf16.gmra.mrb[0].mxu0 %v4016
      %v4161 = vpop.f32.mrb[0].mxu0
      %v4162 = vadd.f32 %v3834, %v4161
      %v4163 = vpop.f32.mrb[0].mxu0
      %v4164 = vpop.f32.mrb[0].mxu0
      %v4165 = vadd.f32 %v3834, %v4164
      %v4166 = vpop.f32.mrb[0].mxu0
      %4167 = vmatprep.mubr.bf16.mxu0 0
      %4168 = vmatmul.mubr.bf16.gmra.mrb[0].mxu0 %v4019
      %v4169 = vpop.f32.mrb[0].mxu0
      %v4170 = vadd.f32 %v3834, %v4169
      %v4171 = vpop.f32.mrb[0].mxu0
      %v4172 = vpop.f32.mrb[0].mxu0
      %v4173 = vadd.f32 %v3834, %v4172
      %v4174 = vpop.f32.mrb[0].mxu0
      %4175 = vmatprep.mubr.bf16.mxu0 0
      %4176 = vmatmul.mubr.bf16.gmra.mrb[0].mxu0 %v4022
      %v4177 = vpop.f32.mrb[0].mxu0
      %v4178 = vadd.f32 %v3834, %v4177
      %v4179 = vpop.f32.mrb[0].mxu0
      %v4180 = vpop.f32.mrb[0].mxu0
      %v4181 = vadd.f32 %v3834, %v4180
      %v4182 = vpop.f32.mrb[0].mxu0
      %4183 = vmatprep.mubr.bf16.mxu0 0
      %4184 = vmatmul.mubr.bf16.gmra.mrb[0].mxu0 %v4025
      %v4185 = vpop.f32.mrb[0].mxu0
      %v4186 = vadd.f32 %v3834, %v4185
      %v4187 = vpop.f32.mrb[0].mxu0
      %v4188 = vpop.f32.mrb[0].mxu0
      %v4189 = vadd.f32 %v3834, %v4188
      %v4190 = vpop.f32.mrb[0].mxu0
      %4191 = vdwg.mxu0
      %v4192 = vsel %vm2964, %v4066, 0.0
      %v4193 = vsel %vm2964, %v4069, 0.0
      %v4194 = vadd.f32 %v4192, %v4193
      %v4195 = vsel %vm2964, %v4074, 0.0
      %v4196 = vadd.f32 %v4194, %v4195
      %v4197 = vsel %vm2964, %v4077, 0.0
      %v4198 = vadd.f32 %v4196, %v4197
      %v4199 = vsel %vm2964, %v4082, 0.0
      %v4200 = vadd.f32 %v4198, %v4199
      %v4201 = vsel %vm2964, %v4085, 0.0
      %v4202 = vadd.f32 %v4200, %v4201
      %v4203 = vsel %vm2964, %v4090, 0.0
      %v4204 = vadd.f32 %v4202, %v4203
      %v4205 = vsel %vm2964, %v4093, 0.0
      %v4206 = vadd.f32 %v4204, %v4205
      %v4207 = vsel %vm2964, %v4098, 0.0
      %v4208 = vadd.f32 %v4206, %v4207
      %v4209 = vsel %vm2964, %v4101, 0.0
      %v4210 = vadd.f32 %v4208, %v4209
      %v4211 = vsel %vm2964, %v4106, 0.0
      %v4212 = vadd.f32 %v4210, %v4211
      %v4213 = vsel %vm2964, %v4109, 0.0
      %v4214 = vadd.f32 %v4212, %v4213
      %v4215 = vsel %vm2964, %v4114, 0.0
      %v4216 = vadd.f32 %v4214, %v4215
      %v4217 = vsel %vm2964, %v4117, 0.0
      %v4218 = vadd.f32 %v4216, %v4217
      %v4219 = vsel %vm2964, %v4122, 0.0
      %v4220 = vadd.f32 %v4218, %v4219
      %v4221 = vsel %vm2964, %v4125, 0.0
      %v4222 = vadd.f32 %v4220, %v4221
      %v4223 = vsel %vm2964, %v4130, 0.0
      %v4224 = vadd.f32 %v4222, %v4223
      %v4225 = vsel %vm2964, %v4133, 0.0
      %v4226 = vadd.f32 %v4224, %v4225
      %v4227 = vsel %vm2964, %v4138, 0.0
      %v4228 = vadd.f32 %v4226, %v4227
      %v4229 = vsel %vm2964, %v4141, 0.0
      %v4230 = vadd.f32 %v4228, %v4229
      %v4231 = vsel %vm2964, %v4146, 0.0
      %v4232 = vadd.f32 %v4230, %v4231
      %v4233 = vsel %vm2964, %v4149, 0.0
      %v4234 = vadd.f32 %v4232, %v4233
      %v4235 = vsel %vm2964, %v4154, 0.0
      %v4236 = vadd.f32 %v4234, %v4235
      %v4237 = vsel %vm2964, %v4157, 0.0
      %v4238 = vadd.f32 %v4236, %v4237
      %v4239 = vsel %vm2964, %v4162, 0.0
      %v4240 = vadd.f32 %v4238, %v4239
      %v4241 = vsel %vm2964, %v4165, 0.0
      %v4242 = vadd.f32 %v4240, %v4241
      %v4243 = vsel %vm2964, %v4170, 0.0
      %v4244 = vadd.f32 %v4242, %v4243
      %v4245 = vsel %vm2964, %v4173, 0.0
      %v4246 = vadd.f32 %v4244, %v4245
      %v4247 = vsel %vm2964, %v4178, 0.0
      %v4248 = vadd.f32 %v4246, %v4247
      %v4249 = vsel %vm2964, %v4181, 0.0
      %v4250 = vadd.f32 %v4248, %v4249
      %v4251 = vsel %vm2964, %v4186, 0.0
      %v4252 = vadd.f32 %v4250, %v4251
      %v4253 = vsel %vm2964, %v4189, 0.0
      %v4254 = vadd.f32 %v4252, %v4253
      %4255 = vadd.xlane.f32.xlu0 %v4254
      %v4256 = vpop.xlane.xlu0 %4255
      %v4257 = vrot.slane %v4256, 4
      %v4258 = vadd.f32 %v4256, %v4257
      %v4259 = vrot.slane %v4258, 2
      %v4260 = vadd.f32 %v4258, %v4259
      %v4261 = vrot.slane %v4260, 1
      %v4262 = vadd.f32 %v4260, %v4261
      %s4263 = vtos %v4262
      %s4264 = smul.f32 %s4263, 0.00048828125
      %v4265 = vstv %s4264
      %v4266 = vsub.f32 %v4066, %v4265
      %v4267 = vsub.f32 %v4069, %v4265
      %v4268 = vsub.f32 %v4074, %v4265
      %v4269 = vsub.f32 %v4077, %v4265
      %v4270 = vsub.f32 %v4082, %v4265
      %v4271 = vsub.f32 %v4085, %v4265
      %v4272 = vsub.f32 %v4090, %v4265
      %v4273 = vsub.f32 %v4093, %v4265
      %v4274 = vsub.f32 %v4098, %v4265
      %v4275 = vsub.f32 %v4101, %v4265
      %v4276 = vsub.f32 %v4106, %v4265
      %v4277 = vsub.f32 %v4109, %v4265
      %v4278 = vsub.f32 %v4114, %v4265
      %v4279 = vsub.f32 %v4117, %v4265
      %v4280 = vsub.f32 %v4122, %v4265
      %v4281 = vsub.f32 %v4125, %v4265
      %v4282 = vsub.f32 %v4130, %v4265
      %v4283 = vsub.f32 %v4133, %v4265
      %v4284 = vsub.f32 %v4138, %v4265
      %v4285 = vsub.f32 %v4141, %v4265
      %v4286 = vsub.f32 %v4146, %v4265
      %v4287 = vsub.f32 %v4149, %v4265
      %v4288 = vsub.f32 %v4154, %v4265
      %v4289 = vsub.f32 %v4157, %v4265
      %v4290 = vsub.f32 %v4162, %v4265
      %v4291 = vsub.f32 %v4165, %v4265
      %v4292 = vsub.f32 %v4170, %v4265
      %v4293 = vsub.f32 %v4173, %v4265
      %v4294 = vsub.f32 %v4178, %v4265
      %v4295 = vsub.f32 %v4181, %v4265
      %v4296 = vsub.f32 %v4186, %v4265
      %v4297 = vsub.f32 %v4189, %v4265
      %v4298 = vmul.f32 %v4266, %v4266
      %v4299 = vmul.f32 %v4267, %v4267
      %v4300 = vmul.f32 %v4268, %v4268
      %v4301 = vmul.f32 %v4269, %v4269
      %v4302 = vmul.f32 %v4270, %v4270
      %v4303 = vmul.f32 %v4271, %v4271
      %v4304 = vmul.f32 %v4272, %v4272
      %v4305 = vmul.f32 %v4273, %v4273
      %v4306 = vmul.f32 %v4274, %v4274
      %v4307 = vmul.f32 %v4275, %v4275
      %v4308 = vmul.f32 %v4276, %v4276
      %v4309 = vmul.f32 %v4277, %v4277
      %v4310 = vmul.f32 %v4278, %v4278
      %v4311 = vmul.f32 %v4279, %v4279
      %v4312 = vmul.f32 %v4280, %v4280
      %v4313 = vmul.f32 %v4281, %v4281
      %v4314 = vmul.f32 %v4282, %v4282
      %v4315 = vmul.f32 %v4283, %v4283
      %v4316 = vmul.f32 %v4284, %v4284
      %v4317 = vmul.f32 %v4285, %v4285
      %v4318 = vmul.f32 %v4286, %v4286
      %v4319 = vmul.f32 %v4287, %v4287
      %v4320 = vmul.f32 %v4288, %v4288
      %v4321 = vmul.f32 %v4289, %v4289
      %v4322 = vmul.f32 %v4290, %v4290
      %v4323 = vmul.f32 %v4291, %v4291
      %v4324 = vmul.f32 %v4292, %v4292
      %v4325 = vmul.f32 %v4293, %v4293
      %v4326 = vmul.f32 %v4294, %v4294
      %v4327 = vmul.f32 %v4295, %v4295
      %v4328 = vmul.f32 %v4296, %v4296
      %v4329 = vmul.f32 %v4297, %v4297
      %v4330 = vsel %vm2964, %v4298, 0.0
      %v4331 = vsel %vm2964, %v4299, 0.0
      %v4332 = vadd.f32 %v4330, %v4331
      %v4333 = vsel %vm2964, %v4300, 0.0
      %v4334 = vadd.f32 %v4332, %v4333
      %v4335 = vsel %vm2964, %v4301, 0.0
      %v4336 = vadd.f32 %v4334, %v4335
      %v4337 = vsel %vm2964, %v4302, 0.0
      %v4338 = vadd.f32 %v4336, %v4337
      %v4339 = vsel %vm2964, %v4303, 0.0
      %v4340 = vadd.f32 %v4338, %v4339
      %v4341 = vsel %vm2964, %v4304, 0.0
      %v4342 = vadd.f32 %v4340, %v4341
      %v4343 = vsel %vm2964, %v4305, 0.0
      %v4344 = vadd.f32 %v4342, %v4343
      %v4345 = vsel %vm2964, %v4306, 0.0
      %v4346 = vadd.f32 %v4344, %v4345
      %v4347 = vsel %vm2964, %v4307, 0.0
      %v4348 = vadd.f32 %v4346, %v4347
      %v4349 = vsel %vm2964, %v4308, 0.0
      %v4350 = vadd.f32 %v4348, %v4349
      %v4351 = vsel %vm2964, %v4309, 0.0
      %v4352 = vadd.f32 %v4350, %v4351
      %v4353 = vsel %vm2964, %v4310, 0.0
      %v4354 = vadd.f32 %v4352, %v4353
      %v4355 = vsel %vm2964, %v4311, 0.0
      %v4356 = vadd.f32 %v4354, %v4355
      %v4357 = vsel %vm2964, %v4312, 0.0
      %v4358 = vadd.f32 %v4356, %v4357
      %v4359 = vsel %vm2964, %v4313, 0.0
      %v4360 = vadd.f32 %v4358, %v4359
      %v4361 = vsel %vm2964, %v4314, 0.0
      %v4362 = vadd.f32 %v4360, %v4361
      %v4363 = vsel %vm2964, %v4315, 0.0
      %v4364 = vadd.f32 %v4362, %v4363
      %v4365 = vsel %vm2964, %v4316, 0.0
      %v4366 = vadd.f32 %v4364, %v4365
      %v4367 = vsel %vm2964, %v4317, 0.0
      %v4368 = vadd.f32 %v4366, %v4367
      %v4369 = vsel %vm2964, %v4318, 0.0
      %v4370 = vadd.f32 %v4368, %v4369
      %v4371 = vsel %vm2964, %v4319, 0.0
      %v4372 = vadd.f32 %v4370, %v4371
      %v4373 = vsel %vm2964, %v4320, 0.0
      %v4374 = vadd.f32 %v4372, %v4373
      %v4375 = vsel %vm2964, %v4321, 0.0
      %v4376 = vadd.f32 %v4374, %v4375
      %v4377 = vsel %vm2964, %v4322, 0.0
      %v4378 = vadd.f32 %v4376, %v4377
      %v4379 = vsel %vm2964, %v4323, 0.0
      %v4380 = vadd.f32 %v4378, %v4379
      %v4381 = vsel %vm2964, %v4324, 0.0
      %v4382 = vadd.f32 %v4380, %v4381
      %v4383 = vsel %vm2964, %v4325, 0.0
      %v4384 = vadd.f32 %v4382, %v4383
      %v4385 = vsel %vm2964, %v4326, 0.0
      %v4386 = vadd.f32 %v4384, %v4385
      %v4387 = vsel %vm2964, %v4327, 0.0
      %v4388 = vadd.f32 %v4386, %v4387
      %v4389 = vsel %vm2964, %v4328, 0.0
      %v4390 = vadd.f32 %v4388, %v4389
      %v4391 = vsel %vm2964, %v4329, 0.0
      %v4392 = vadd.f32 %v4390, %v4391
      %4393 = vadd.xlane.f32.xlu0 %v4392
      %v4394 = vpop.xlane.xlu0 %4393
      %v4395 = vrot.slane %v4394, 4
      %v4396 = vadd.f32 %v4394, %v4395
      %v4397 = vrot.slane %v4396, 2
      %v4398 = vadd.f32 %v4396, %v4397
      %v4399 = vrot.slane %v4398, 1
      %v4400 = vadd.f32 %v4398, %v4399
      %s4401 = vtos %v4400
      %s4402 = smul.f32 %s4401, 0.00048828125
      %s4403 = sadd.f32 %s4402, 1e-05
      %v4404 = vstv %s4403
      %v4405 = vrsqrt.pop %v4404
      %s4406 = vtos %v4405
      %v4407 = vstv %s4406
      %v4408 = vmul.f32 %v4266, %v4407
      %v4409 = vmul.f32 %v4267, %v4407
      %v4410 = vmul.f32 %v4268, %v4407
      %v4411 = vmul.f32 %v4269, %v4407
      %v4412 = vmul.f32 %v4270, %v4407
      %v4413 = vmul.f32 %v4271, %v4407
      %v4414 = vmul.f32 %v4272, %v4407
      %v4415 = vmul.f32 %v4273, %v4407
      %v4416 = vmul.f32 %v4274, %v4407
      %v4417 = vmul.f32 %v4275, %v4407
      %v4418 = vmul.f32 %v4276, %v4407
      %v4419 = vmul.f32 %v4277, %v4407
      %v4420 = vmul.f32 %v4278, %v4407
      %v4421 = vmul.f32 %v4279, %v4407
      %v4422 = vmul.f32 %v4280, %v4407
      %v4423 = vmul.f32 %v4281, %v4407
      %v4424 = vmul.f32 %v4282, %v4407
      %v4425 = vmul.f32 %v4283, %v4407
      %v4426 = vmul.f32 %v4284, %v4407
      %v4427 = vmul.f32 %v4285, %v4407
      %v4428 = vmul.f32 %v4286, %v4407
      %v4429 = vmul.f32 %v4287, %v4407
      %v4430 = vmul.f32 %v4288, %v4407
      %v4431 = vmul.f32 %v4289, %v4407
      %v4432 = vmul.f32 %v4290, %v4407
      %v4433 = vmul.f32 %v4291, %v4407
      %v4434 = vmul.f32 %v4292, %v4407
      %v4435 = vmul.f32 %v4293, %v4407
      %v4436 = vmul.f32 %v4294, %v4407
      %v4437 = vmul.f32 %v4295, %v4407
      %v4438 = vmul.f32 %v4296, %v4407
      %v4439 = vmul.f32 %v4297, %v4407
      %v4441 = vlaneseq
      %v4442 = vshrl.u32 %v4441, 7
      %v4443 = vsub.s32 0, %v4442
      %v4444 = vrot.slane %v3828, %v4443
      %v4446 = vmul.f32 %v4408, %v4444
      %v4447 = vmul.f32 %v4409, %v4444
      %v4448 = vmul.f32 %v4410, %v4444
      %v4449 = vmul.f32 %v4411, %v4444
      %v4450 = vmul.f32 %v4412, %v4444
      %v4451 = vmul.f32 %v4413, %v4444
      %v4452 = vmul.f32 %v4414, %v4444
      %v4453 = vmul.f32 %v4415, %v4444
      %v4454 = vmul.f32 %v4416, %v4444
      %v4455 = vmul.f32 %v4417, %v4444
      %v4456 = vmul.f32 %v4418, %v4444
      %v4457 = vmul.f32 %v4419, %v4444
      %v4458 = vmul.f32 %v4420, %v4444
      %v4459 = vmul.f32 %v4421, %v4444
      %v4460 = vmul.f32 %v4422, %v4444
      %v4461 = vmul.f32 %v4423, %v4444
      %v4462 = vmul.f32 %v4424, %v4444
      %v4463 = vmul.f32 %v4425, %v4444
      %v4464 = vmul.f32 %v4426, %v4444
      %v4465 = vmul.f32 %v4427, %v4444
      %v4466 = vmul.f32 %v4428, %v4444
      %v4467 = vmul.f32 %v4429, %v4444
      %v4468 = vmul.f32 %v4430, %v4444
      %v4469 = vmul.f32 %v4431, %v4444
      %v4470 = vmul.f32 %v4432, %v4444
      %v4471 = vmul.f32 %v4433, %v4444
      %v4472 = vmul.f32 %v4434, %v4444
      %v4473 = vmul.f32 %v4435, %v4444
      %v4474 = vmul.f32 %v4436, %v4444
      %v4475 = vmul.f32 %v4437, %v4444
      %v4476 = vmul.f32 %v4438, %v4444
      %v4477 = vmul.f32 %v4439, %v4444
      %v4479 = vlaneseq
      %v4480 = vshrl.u32 %v4479, 7
      %v4481 = vsub.s32 0, %v4480
      %v4482 = vrot.slane %v3829, %v4481
      %v4484 = vadd.f32 %v4446, %v4482
      %v4485 = vadd.f32 %v4447, %v4482
      %v4486 = vadd.f32 %v4448, %v4482
      %v4487 = vadd.f32 %v4449, %v4482
      %v4488 = vadd.f32 %v4450, %v4482
      %v4489 = vadd.f32 %v4451, %v4482
      %v4490 = vadd.f32 %v4452, %v4482
      %v4491 = vadd.f32 %v4453, %v4482
      %v4492 = vadd.f32 %v4454, %v4482
      %v4493 = vadd.f32 %v4455, %v4482
      %v4494 = vadd.f32 %v4456, %v4482
      %v4495 = vadd.f32 %v4457, %v4482
      %v4496 = vadd.f32 %v4458, %v4482
      %v4497 = vadd.f32 %v4459, %v4482
      %v4498 = vadd.f32 %v4460, %v4482
      %v4499 = vadd.f32 %v4461, %v4482
      %v4500 = vadd.f32 %v4462, %v4482
      %v4501 = vadd.f32 %v4463, %v4482
      %v4502 = vadd.f32 %v4464, %v4482
      %v4503 = vadd.f32 %v4465, %v4482
      %v4504 = vadd.f32 %v4466, %v4482
      %v4505 = vadd.f32 %v4467, %v4482
      %v4506 = vadd.f32 %v4468, %v4482
      %v4507 = vadd.f32 %v4469, %v4482
      %v4508 = vadd.f32 %v4470, %v4482
      %v4509 = vadd.f32 %v4471, %v4482
      %v4510 = vadd.f32 %v4472, %v4482
      %v4511 = vadd.f32 %v4473, %v4482
      %v4512 = vadd.f32 %v4474, %v4482
      %v4513 = vadd.f32 %v4475, %v4482
      %v4514 = vadd.f32 %v4476, %v4482
      %v4515 = vadd.f32 %v4477, %v4482
      %v4516 = vmax.f32 %v4484, 0.0
      %v4517 = vmax.f32 %v4485, 0.0
      %v4518 = vmax.f32 %v4486, 0.0
      %v4519 = vmax.f32 %v4487, 0.0
      %v4520 = vmax.f32 %v4488, 0.0
      %v4521 = vmax.f32 %v4489, 0.0
      %v4522 = vmax.f32 %v4490, 0.0
      %v4523 = vmax.f32 %v4491, 0.0
      %v4524 = vmax.f32 %v4492, 0.0
      %v4525 = vmax.f32 %v4493, 0.0
      %v4526 = vmax.f32 %v4494, 0.0
      %v4527 = vmax.f32 %v4495, 0.0
      %v4528 = vmax.f32 %v4496, 0.0
      %v4529 = vmax.f32 %v4497, 0.0
      %v4530 = vmax.f32 %v4498, 0.0
      %v4531 = vmax.f32 %v4499, 0.0
      %v4532 = vmax.f32 %v4500, 0.0
      %v4533 = vmax.f32 %v4501, 0.0
      %v4534 = vmax.f32 %v4502, 0.0
      %v4535 = vmax.f32 %v4503, 0.0
      %v4536 = vmax.f32 %v4504, 0.0
      %v4537 = vmax.f32 %v4505, 0.0
      %v4538 = vmax.f32 %v4506, 0.0
      %v4539 = vmax.f32 %v4507, 0.0
      %v4540 = vmax.f32 %v4508, 0.0
      %v4541 = vmax.f32 %v4509, 0.0
      %v4542 = vmax.f32 %v4510, 0.0
      %v4543 = vmax.f32 %v4511, 0.0
      %v4544 = vmax.f32 %v4512, 0.0
      %v4545 = vmax.f32 %v4513, 0.0
      %v4546 = vmax.f32 %v4514, 0.0
      %v4547 = vmax.f32 %v4515, 0.0
      %v4548 = vpack.c.bf16 %v4517, %v4516
      %v4549 = vpack.c.bf16 %v4519, %v4518
      %v4550 = vpack.c.bf16 %v4521, %v4520
      %v4551 = vpack.c.bf16 %v4523, %v4522
      %v4552 = vpack.c.bf16 %v4525, %v4524
      %v4553 = vpack.c.bf16 %v4527, %v4526
      %v4554 = vpack.c.bf16 %v4529, %v4528
      %v4555 = vpack.c.bf16 %v4531, %v4530
      %v4556 = vpack.c.bf16 %v4533, %v4532
      %v4557 = vpack.c.bf16 %v4535, %v4534
      %v4558 = vpack.c.bf16 %v4537, %v4536
      %v4559 = vpack.c.bf16 %v4539, %v4538
      %v4560 = vpack.c.bf16 %v4541, %v4540
      %v4561 = vpack.c.bf16 %v4543, %v4542
      %v4562 = vpack.c.bf16 %v4545, %v4544
      %v4563 = vpack.c.bf16 %v4547, %v4546
      %v4564 = vsel %vm1185, %v4548, 0
      %v4565 = vsel %vm1186, %v4549, 0
      %v4566 = vsel %vm1187, %v4550, 0
      %v4567 = vsel %vm1188, %v4551, 0
      %v4568 = vsel %vm1189, %v4552, 0
      %v4569 = vsel %vm1190, %v4553, 0
      %v4570 = vsel %vm1191, %v4554, 0
      %v4571 = vsel %vm1192, %v4555, 0
      %v4572 = vsel %vm1193, %v4556, 0
      %v4573 = vsel %vm1194, %v4557, 0
      %v4574 = vsel %vm1195, %v4558, 0
      %v4575 = vsel %vm1196, %v4559, 0
      %v4576 = vsel %vm1197, %v4560, 0
      %v4577 = vsel %vm1198, %v4561, 0
      %v4578 = vsel %vm1199, %v4562, 0
      %v4579 = vsel %vm1484, %v4548, 0
      %v4580 = vsel %vm1485, %v4549, 0
      %v4581 = vsel %vm1486, %v4550, 0
      %v4582 = vsel %vm1487, %v4551, 0
      %v4583 = vsel %vm1488, %v4552, 0
      %v4584 = vsel %vm1489, %v4553, 0
      %v4585 = vsel %vm1490, %v4554, 0
      %v4586 = vsel %vm1491, %v4555, 0
      %v4587 = vsel %vm1492, %v4556, 0
      %v4588 = vsel %vm1493, %v4557, 0
      %v4589 = vsel %vm1494, %v4558, 0
      %v4590 = vsel %vm1495, %v4559, 0
      %v4591 = vsel %vm1496, %v4560, 0
      %v4592 = vsel %vm1497, %v4561, 0
      %v4593 = vsel %vm1498, %v4562, 0
      %v4594 = vsel %vm1499, %v4563, 0
      %v4595 = vsel %vm1531, %v4548, 0
      %v4596 = vsel %vm1185, %v4549, 0
      %v4597 = vsel %vm1186, %v4550, 0
      %v4598 = vsel %vm1187, %v4551, 0
      %v4599 = vsel %vm1188, %v4552, 0
      %v4600 = vsel %vm1189, %v4553, 0
      %v4601 = vsel %vm1190, %v4554, 0
      %v4602 = vsel %vm1191, %v4555, 0
      %v4603 = vsel %vm1192, %v4556, 0
      %v4604 = vsel %vm1193, %v4557, 0
      %v4605 = vsel %vm1194, %v4558, 0
      %v4606 = vsel %vm1195, %v4559, 0
      %v4607 = vsel %vm1196, %v4560, 0
      %v4608 = vsel %vm1197, %v4561, 0
      %v4609 = vsel %vm1198, %v4562, 0
      %v4610 = vsel %vm1199, %v4563, 0
      %v4611 = vsel %vm1551, %v4548, 0
      %v4612 = vsel %vm1484, %v4549, 0
      %v4613 = vsel %vm1485, %v4550, 0
      %v4614 = vsel %vm1486, %v4551, 0
      %v4615 = vsel %vm1487, %v4552, 0
      %v4616 = vsel %vm1488, %v4553, 0
      %v4617 = vsel %vm1489, %v4554, 0
      %v4618 = vsel %vm1490, %v4555, 0
      %v4619 = vsel %vm1491, %v4556, 0
      %v4620 = vsel %vm1492, %v4557, 0
      %v4621 = vsel %vm1493, %v4558, 0
      %v4622 = vsel %vm1494, %v4559, 0
      %v4623 = vsel %vm1495, %v4560, 0
      %v4624 = vsel %vm1496, %v4561, 0
      %v4625 = vsel %vm1497, %v4562, 0
      %v4626 = vsel %vm1498, %v4563, 0
      %v4627 = vsel %vm1568, %v4548, 0
      %v4628 = vsel %vm1531, %v4549, 0
      %v4629 = vsel %vm1185, %v4550, 0
      %v4630 = vsel %vm1186, %v4551, 0
      %v4631 = vsel %vm1187, %v4552, 0
      %v4632 = vsel %vm1188, %v4553, 0
      %v4633 = vsel %vm1189, %v4554, 0
      %v4634 = vsel %vm1190, %v4555, 0
      %v4635 = vsel %vm1191, %v4556, 0
      %v4636 = vsel %vm1192, %v4557, 0
      %v4637 = vsel %vm1193, %v4558, 0
      %v4638 = vsel %vm1194, %v4559, 0
      %v4639 = vsel %vm1195, %v4560, 0
      %v4640 = vsel %vm1196, %v4561, 0
      %v4641 = vsel %vm1197, %v4562, 0
      %v4642 = vsel %vm1198, %v4563, 0
      %v4643 = vsel %vm1551, %v4549, 0
      %v4644 = vsel %vm1484, %v4550, 0
      %v4645 = vsel %vm1485, %v4551, 0
      %v4646 = vsel %vm1486, %v4552, 0
      %v4647 = vsel %vm1487, %v4553, 0
      %v4648 = vsel %vm1488, %v4554, 0
      %v4649 = vsel %vm1489, %v4555, 0
      %v4650 = vsel %vm1490, %v4556, 0
      %v4651 = vsel %vm1491, %v4557, 0
      %v4652 = vsel %vm1492, %v4558, 0
      %v4653 = vsel %vm1493, %v4559, 0
      %v4654 = vsel %vm1494, %v4560, 0
      %v4655 = vsel %vm1495, %v4561, 0
      %v4656 = vsel %vm1496, %v4562, 0
      %v4657 = vsel %vm1497, %v4563, 0
      %v4659 = vshll.u32 %v4548, 16
      %v4661 = vrot.slane %v4659, 1
      %v4662 = vsel %vm1065, %v1828, %v4661
      %v4663 = vshrl.u32 %v4548, 16
      %v4665 = vor.u32 %v4663, %v4661
      %v4667 = vshll.u32 %v4549, 16
      %v4669 = vrot.slane %v4667, 1
      %v4670 = vsel %vm1065, %v4665, %v4669
      %v4671 = vshrl.u32 %v4549, 16
      %v4673 = vor.u32 %v4671, %v4669
      %v4675 = vshll.u32 %v4550, 16
      %v4677 = vrot.slane %v4675, 1
      %v4678 = vsel %vm1065, %v4673, %v4677
      %v4679 = vshrl.u32 %v4550, 16
      %v4681 = vor.u32 %v4679, %v4677
      %v4683 = vshll.u32 %v4551, 16
      %v4685 = vrot.slane %v4683, 1
      %v4686 = vsel %vm1065, %v4681, %v4685
      %v4687 = vshrl.u32 %v4551, 16
      %v4689 = vor.u32 %v4687, %v4685
      %v4691 = vshll.u32 %v4552, 16
      %v4693 = vrot.slane %v4691, 1
      %v4694 = vsel %vm1065, %v4689, %v4693
      %v4695 = vshrl.u32 %v4552, 16
      %v4697 = vor.u32 %v4695, %v4693
      %v4699 = vshll.u32 %v4553, 16
      %v4701 = vrot.slane %v4699, 1
      %v4702 = vsel %vm1065, %v4697, %v4701
      %v4703 = vshrl.u32 %v4553, 16
      %v4705 = vor.u32 %v4703, %v4701
      %v4707 = vshll.u32 %v4554, 16
      %v4709 = vrot.slane %v4707, 1
      %v4710 = vsel %vm1065, %v4705, %v4709
      %v4711 = vshrl.u32 %v4554, 16
      %v4713 = vor.u32 %v4711, %v4709
      %v4715 = vshll.u32 %v4555, 16
      %v4717 = vrot.slane %v4715, 1
      %v4718 = vsel %vm1065, %v4713, %v4717
      %v4719 = vshrl.u32 %v4555, 16
      %v4721 = vor.u32 %v4719, %v4717
      %v4723 = vshll.u32 %v4556, 16
      %v4725 = vrot.slane %v4723, 1
      %v4726 = vsel %vm1065, %v4721, %v4725
      %v4727 = vshrl.u32 %v4556, 16
      %v4729 = vor.u32 %v4727, %v4725
      %v4731 = vshll.u32 %v4557, 16
      %v4733 = vrot.slane %v4731, 1
      %v4734 = vsel %vm1065, %v4729, %v4733
      %v4735 = vshrl.u32 %v4557, 16
      %v4737 = vor.u32 %v4735, %v4733
      %v4739 = vshll.u32 %v4558, 16
      %v4741 = vrot.slane %v4739, 1
      %v4742 = vsel %vm1065, %v4737, %v4741
      %v4743 = vshrl.u32 %v4558, 16
      %v4745 = vor.u32 %v4743, %v4741
      %v4747 = vshll.u32 %v4559, 16
      %v4749 = vrot.slane %v4747, 1
      %v4750 = vsel %vm1065, %v4745, %v4749
      %v4751 = vshrl.u32 %v4559, 16
      %v4753 = vor.u32 %v4751, %v4749
      %v4755 = vshll.u32 %v4560, 16
      %v4757 = vrot.slane %v4755, 1
      %v4758 = vsel %vm1065, %v4753, %v4757
      %v4759 = vshrl.u32 %v4560, 16
      %v4761 = vor.u32 %v4759, %v4757
      %v4763 = vshll.u32 %v4561, 16
      %v4765 = vrot.slane %v4763, 1
      %v4766 = vsel %vm1065, %v4761, %v4765
      %v4767 = vshrl.u32 %v4561, 16
      %v4769 = vor.u32 %v4767, %v4765
      %v4771 = vshll.u32 %v4562, 16
      %v4773 = vrot.slane %v4771, 1
      %v4774 = vsel %vm1065, %v4769, %v4773
      %v4775 = vshrl.u32 %v4562, 16
      %v4777 = vor.u32 %v4775, %v4773
      %4778 = vrot.lane.b32.xlu0 %v1825, 8
      %v4779 = vpop.permute.xlu0 %4778
      %4780 = vrot.lane.b32.xlu0 %v4662, 8
      %v4781 = vpop.permute.xlu0 %4780
      %4782 = vrot.lane.b32.xlu0 %v4670, 8
      %v4783 = vpop.permute.xlu0 %4782
      %4784 = vrot.lane.b32.xlu0 %v4678, 8
      %v4785 = vpop.permute.xlu0 %4784
      %4786 = vrot.lane.b32.xlu0 %v4686, 8
      %v4787 = vpop.permute.xlu0 %4786
      %4788 = vrot.lane.b32.xlu0 %v4694, 8
      %v4789 = vpop.permute.xlu0 %4788
      %4790 = vrot.lane.b32.xlu0 %v4702, 8
      %v4791 = vpop.permute.xlu0 %4790
      %4792 = vrot.lane.b32.xlu0 %v4710, 8
      %v4793 = vpop.permute.xlu0 %4792
      %4794 = vrot.lane.b32.xlu0 %v4718, 8
      %v4795 = vpop.permute.xlu0 %4794
      %4796 = vrot.lane.b32.xlu0 %v4726, 8
      %v4797 = vpop.permute.xlu0 %4796
      %4798 = vrot.lane.b32.xlu0 %v4734, 8
      %v4799 = vpop.permute.xlu0 %4798
      %4800 = vrot.lane.b32.xlu0 %v4742, 8
      %v4801 = vpop.permute.xlu0 %4800
      %4802 = vrot.lane.b32.xlu0 %v4750, 8
      %v4803 = vpop.permute.xlu0 %4802
      %4804 = vrot.lane.b32.xlu0 %v4758, 8
      %v4805 = vpop.permute.xlu0 %4804
      %4806 = vrot.lane.b32.xlu0 %v4766, 8
      %v4807 = vpop.permute.xlu0 %4806
      %4808 = vrot.lane.b32.xlu0 %v4774, 8
      %v4809 = vpop.permute.xlu0 %4808
      %4810 = vrot.lane.b32.xlu0 %v4777, 8
      %v4811 = vpop.permute.xlu0 %4810
      %v4828 = vrot.slane %v4579, 1
      %v4829 = vsel %vm2000, %v2001, %v4828
      %v4830 = vrot.slane %v4580, 1
      %v4831 = vsel %vm2000, %v4828, %v4830
      %v4832 = vrot.slane %v4581, 1
      %v4833 = vsel %vm2000, %v4830, %v4832
      %v4834 = vrot.slane %v4582, 1
      %v4835 = vsel %vm2000, %v4832, %v4834
      %v4836 = vrot.slane %v4583, 1
      %v4837 = vsel %vm2000, %v4834, %v4836
      %v4838 = vrot.slane %v4584, 1
      %v4839 = vsel %vm2000, %v4836, %v4838
      %v4840 = vrot.slane %v4585, 1
      %v4841 = vsel %vm2000, %v4838, %v4840
      %v4842 = vrot.slane %v4586, 1
      %v4843 = vsel %vm2000, %v4840, %v4842
      %v4844 = vrot.slane %v4587, 1
      %v4845 = vsel %vm2000, %v4842, %v4844
      %v4846 = vrot.slane %v4588, 1
      %v4847 = vsel %vm2000, %v4844, %v4846
      %v4848 = vrot.slane %v4589, 1
      %v4849 = vsel %vm2000, %v4846, %v4848
      %v4850 = vrot.slane %v4590, 1
      %v4851 = vsel %vm2000, %v4848, %v4850
      %v4852 = vrot.slane %v4591, 1
      %v4853 = vsel %vm2000, %v4850, %v4852
      %v4854 = vrot.slane %v4592, 1
      %v4855 = vsel %vm2000, %v4852, %v4854
      %v4856 = vrot.slane %v4593, 1
      %v4857 = vsel %vm2000, %v4854, %v4856
      %v4858 = vrot.slane %v4594, 1
      %v4859 = vsel %vm2000, %v4856, %v4858
      %4860 = vrot.lane.b32.xlu0 %v2001, 16
      %v4861 = vpop.permute.xlu0 %4860
      %4862 = vrot.lane.b32.xlu0 %v4829, 16
      %v4863 = vpop.permute.xlu0 %4862
      %4864 = vrot.lane.b32.xlu0 %v4831, 16
      %v4865 = vpop.permute.xlu0 %4864
      %4866 = vrot.lane.b32.xlu0 %v4833, 16
      %v4867 = vpop.permute.xlu0 %4866
      %4868 = vrot.lane.b32.xlu0 %v4835, 16
      %v4869 = vpop.permute.xlu0 %4868
      %4870 = vrot.lane.b32.xlu0 %v4837, 16
      %v4871 = vpop.permute.xlu0 %4870
      %4872 = vrot.lane.b32.xlu0 %v4839, 16
      %v4873 = vpop.permute.xlu0 %4872
      %4874 = vrot.lane.b32.xlu0 %v4841, 16
      %v4875 = vpop.permute.xlu0 %4874
      %4876 = vrot.lane.b32.xlu0 %v4843, 16
      %v4877 = vpop.permute.xlu0 %4876
      %4878 = vrot.lane.b32.xlu0 %v4845, 16
      %v4879 = vpop.permute.xlu0 %4878
      %4880 = vrot.lane.b32.xlu0 %v4847, 16
      %v4881 = vpop.permute.xlu0 %4880
      %4882 = vrot.lane.b32.xlu0 %v4849, 16
      %v4883 = vpop.permute.xlu0 %4882
      %4884 = vrot.lane.b32.xlu0 %v4851, 16
      %v4885 = vpop.permute.xlu0 %4884
      %4886 = vrot.lane.b32.xlu0 %v4853, 16
      %v4887 = vpop.permute.xlu0 %4886
      %4888 = vrot.lane.b32.xlu0 %v4855, 16
      %v4889 = vpop.permute.xlu0 %4888
      %4890 = vrot.lane.b32.xlu0 %v4857, 16
      %v4891 = vpop.permute.xlu0 %4890
      %4892 = vrot.lane.b32.xlu0 %v4859, 16
      %v4893 = vpop.permute.xlu0 %4892
      %4910 = vrot.lane.b32.xlu0 %v4595, 24
      %v4911 = vpop.permute.xlu0 %4910
      %4912 = vrot.lane.b32.xlu0 %v4596, 24
      %v4913 = vpop.permute.xlu0 %4912
      %4914 = vrot.lane.b32.xlu0 %v4597, 24
      %v4915 = vpop.permute.xlu0 %4914
      %4916 = vrot.lane.b32.xlu0 %v4598, 24
      %v4917 = vpop.permute.xlu0 %4916
      %4918 = vrot.lane.b32.xlu0 %v4599, 24
      %v4919 = vpop.permute.xlu0 %4918
      %4920 = vrot.lane.b32.xlu0 %v4600, 24
      %v4921 = vpop.permute.xlu0 %4920
      %4922 = vrot.lane.b32.xlu0 %v4601, 24
      %v4923 = vpop.permute.xlu0 %4922
      %4924 = vrot.lane.b32.xlu0 %v4602, 24
      %v4925 = vpop.permute.xlu0 %4924
      %4926 = vrot.lane.b32.xlu0 %v4603, 24
      %v4927 = vpop.permute.xlu0 %4926
      %4928 = vrot.lane.b32.xlu0 %v4604, 24
      %v4929 = vpop.permute.xlu0 %4928
      %4930 = vrot.lane.b32.xlu0 %v4605, 24
      %v4931 = vpop.permute.xlu0 %4930
      %4932 = vrot.lane.b32.xlu0 %v4606, 24
      %v4933 = vpop.permute.xlu0 %4932
      %4934 = vrot.lane.b32.xlu0 %v4607, 24
      %v4935 = vpop.permute.xlu0 %4934
      %4936 = vrot.lane.b32.xlu0 %v4608, 24
      %v4937 = vpop.permute.xlu0 %4936
      %4938 = vrot.lane.b32.xlu0 %v4609, 24
      %v4939 = vpop.permute.xlu0 %4938
      %4940 = vrot.lane.b32.xlu0 %v4610, 24
      %v4941 = vpop.permute.xlu0 %4940
      %v4943 = vshll.u32 %v4563, 16
      %v4945 = vrot.slane %v4943, 1
      %v4946 = vsel %vm1065, %v4777, %v4945
      %v4947 = vshrl.u32 %v4563, 16
      %v4949 = vor.u32 %v4947, %v4945
      %4950 = vrot.lane.b32.xlu0 %v4661, 32
      %v4951 = vpop.permute.xlu0 %4950
      %4952 = vrot.lane.b32.xlu0 %v4670, 32
      %v4953 = vpop.permute.xlu0 %4952
      %4954 = vrot.lane.b32.xlu0 %v4678, 32
      %v4955 = vpop.permute.xlu0 %4954
      %4956 = vrot.lane.b32.xlu0 %v4686, 32
      %v4957 = vpop.permute.xlu0 %4956
      %4958 = vrot.lane.b32.xlu0 %v4694, 32
      %v4959 = vpop.permute.xlu0 %4958
      %4960 = vrot.lane.b32.xlu0 %v4702, 32
      %v4961 = vpop.permute.xlu0 %4960
      %4962 = vrot.lane.b32.xlu0 %v4710, 32
      %v4963 = vpop.permute.xlu0 %4962
      %4964 = vrot.lane.b32.xlu0 %v4718, 32
      %v4965 = vpop.permute.xlu0 %4964
      %4966 = vrot.lane.b32.xlu0 %v4726, 32
      %v4967 = vpop.permute.xlu0 %4966
      %4968 = vrot.lane.b32.xlu0 %v4734, 32
      %v4969 = vpop.permute.xlu0 %4968
      %4970 = vrot.lane.b32.xlu0 %v4742, 32
      %v4971 = vpop.permute.xlu0 %4970
      %4972 = vrot.lane.b32.xlu0 %v4750, 32
      %v4973 = vpop.permute.xlu0 %4972
      %4974 = vrot.lane.b32.xlu0 %v4758, 32
      %v4975 = vpop.permute.xlu0 %4974
      %4976 = vrot.lane.b32.xlu0 %v4766, 32
      %v4977 = vpop.permute.xlu0 %4976
      %4978 = vrot.lane.b32.xlu0 %v4774, 32
      %v4979 = vpop.permute.xlu0 %4978
      %4980 = vrot.lane.b32.xlu0 %v4946, 32
      %v4981 = vpop.permute.xlu0 %4980
      %4982 = vrot.lane.b32.xlu0 %v4949, 32
      %v4983 = vpop.permute.xlu0 %4982
      %v5000 = vrot.slane %v4611, 1
      %v5001 = vrot.slane %v4612, 1
      %v5002 = vsel %vm2000, %v5000, %v5001
      %v5003 = vrot.slane %v4613, 1
      %v5004 = vsel %vm2000, %v5001, %v5003
      %v5005 = vrot.slane %v4614, 1
      %v5006 = vsel %vm2000, %v5003, %v5005
      %v5007 = vrot.slane %v4615, 1
      %v5008 = vsel %vm2000, %v5005, %v5007
      %v5009 = vrot.slane %v4616, 1
      %v5010 = vsel %vm2000, %v5007, %v5009
      %v5011 = vrot.slane %v4617, 1
      %v5012 = vsel %vm2000, %v5009, %v5011
      %v5013 = vrot.slane %v4618, 1
      %v5014 = vsel %vm2000, %v5011, %v5013
      %v5015 = vrot.slane %v4619, 1
      %v5016 = vsel %vm2000, %v5013, %v5015
      %v5017 = vrot.slane %v4620, 1
      %v5018 = vsel %vm2000, %v5015, %v5017
      %v5019 = vrot.slane %v4621, 1
      %v5020 = vsel %vm2000, %v5017, %v5019
      %v5021 = vrot.slane %v4622, 1
      %v5022 = vsel %vm2000, %v5019, %v5021
      %v5023 = vrot.slane %v4623, 1
      %v5024 = vsel %vm2000, %v5021, %v5023
      %v5025 = vrot.slane %v4624, 1
      %v5026 = vsel %vm2000, %v5023, %v5025
      %v5027 = vrot.slane %v4625, 1
      %v5028 = vsel %vm2000, %v5025, %v5027
      %v5029 = vrot.slane %v4626, 1
      %v5030 = vsel %vm2000, %v5027, %v5029
      %v5031 = vsel %vm2000, %v5029, %v2001
      %5032 = vrot.lane.b32.xlu0 %v5000, 40
      %v5033 = vpop.permute.xlu0 %5032
      %5034 = vrot.lane.b32.xlu0 %v5002, 40
      %v5035 = vpop.permute.xlu0 %5034
      %5036 = vrot.lane.b32.xlu0 %v5004, 40
      %v5037 = vpop.permute.xlu0 %5036
      %5038 = vrot.lane.b32.xlu0 %v5006, 40
      %v5039 = vpop.permute.xlu0 %5038
      %5040 = vrot.lane.b32.xlu0 %v5008, 40
      %v5041 = vpop.permute.xlu0 %5040
      %5042 = vrot.lane.b32.xlu0 %v5010, 40
      %v5043 = vpop.permute.xlu0 %5042
      %5044 = vrot.lane.b32.xlu0 %v5012, 40
      %v5045 = vpop.permute.xlu0 %5044
      %5046 = vrot.lane.b32.xlu0 %v5014, 40
      %v5047 = vpop.permute.xlu0 %5046
      %5048 = vrot.lane.b32.xlu0 %v5016, 40
      %v5049 = vpop.permute.xlu0 %5048
      %5050 = vrot.lane.b32.xlu0 %v5018, 40
      %v5051 = vpop.permute.xlu0 %5050
      %5052 = vrot.lane.b32.xlu0 %v5020, 40
      %v5053 = vpop.permute.xlu0 %5052
      %5054 = vrot.lane.b32.xlu0 %v5022, 40
      %v5055 = vpop.permute.xlu0 %5054
      %5056 = vrot.lane.b32.xlu0 %v5024, 40
      %v5057 = vpop.permute.xlu0 %5056
      %5058 = vrot.lane.b32.xlu0 %v5026, 40
      %v5059 = vpop.permute.xlu0 %5058
      %5060 = vrot.lane.b32.xlu0 %v5028, 40
      %v5061 = vpop.permute.xlu0 %5060
      %5062 = vrot.lane.b32.xlu0 %v5030, 40
      %v5063 = vpop.permute.xlu0 %5062
      %5064 = vrot.lane.b32.xlu0 %v5031, 40
      %v5065 = vpop.permute.xlu0 %5064
      %5082 = vrot.lane.b32.xlu0 %v4627, 48
      %v5083 = vpop.permute.xlu0 %5082
      %5084 = vrot.lane.b32.xlu0 %v4628, 48
      %v5085 = vpop.permute.xlu0 %5084
      %5086 = vrot.lane.b32.xlu0 %v4629, 48
      %v5087 = vpop.permute.xlu0 %5086
      %5088 = vrot.lane.b32.xlu0 %v4630, 48
      %v5089 = vpop.permute.xlu0 %5088
      %5090 = vrot.lane.b32.xlu0 %v4631, 48
      %v5091 = vpop.permute.xlu0 %5090
      %5092 = vrot.lane.b32.xlu0 %v4632, 48
      %v5093 = vpop.permute.xlu0 %5092
      %5094 = vrot.lane.b32.xlu0 %v4633, 48
      %v5095 = vpop.permute.xlu0 %5094
      %5096 = vrot.lane.b32.xlu0 %v4634, 48
      %v5097 = vpop.permute.xlu0 %5096
      %5098 = vrot.lane.b32.xlu0 %v4635, 48
      %v5099 = vpop.permute.xlu0 %5098
      %5100 = vrot.lane.b32.xlu0 %v4636, 48
      %v5101 = vpop.permute.xlu0 %5100
      %5102 = vrot.lane.b32.xlu0 %v4637, 48
      %v5103 = vpop.permute.xlu0 %5102
      %5104 = vrot.lane.b32.xlu0 %v4638, 48
      %v5105 = vpop.permute.xlu0 %5104
      %5106 = vrot.lane.b32.xlu0 %v4639, 48
      %v5107 = vpop.permute.xlu0 %5106
      %5108 = vrot.lane.b32.xlu0 %v4640, 48
      %v5109 = vpop.permute.xlu0 %5108
      %5110 = vrot.lane.b32.xlu0 %v4641, 48
      %v5111 = vpop.permute.xlu0 %5110
      %5112 = vrot.lane.b32.xlu0 %v4642, 48
      %v5113 = vpop.permute.xlu0 %5112
      %v5114 = vsel %vm1065, %v4949, %v1825
      %5115 = vrot.lane.b32.xlu0 %v4669, 56
      %v5116 = vpop.permute.xlu0 %5115
      %5117 = vrot.lane.b32.xlu0 %v4678, 56
      %v5118 = vpop.permute.xlu0 %5117
      %5119 = vrot.lane.b32.xlu0 %v4686, 56
      %v5120 = vpop.permute.xlu0 %5119
      %5121 = vrot.lane.b32.xlu0 %v4694, 56
      %v5122 = vpop.permute.xlu0 %5121
      %5123 = vrot.lane.b32.xlu0 %v4702, 56
      %v5124 = vpop.permute.xlu0 %5123
      %5125 = vrot.lane.b32.xlu0 %v4710, 56
      %v5126 = vpop.permute.xlu0 %5125
      %5127 = vrot.lane.b32.xlu0 %v4718, 56
      %v5128 = vpop.permute.xlu0 %5127
      %5129 = vrot.lane.b32.xlu0 %v4726, 56
      %v5130 = vpop.permute.xlu0 %5129
      %5131 = vrot.lane.b32.xlu0 %v4734, 56
      %v5132 = vpop.permute.xlu0 %5131
      %5133 = vrot.lane.b32.xlu0 %v4742, 56
      %v5134 = vpop.permute.xlu0 %5133
      %5135 = vrot.lane.b32.xlu0 %v4750, 56
      %v5136 = vpop.permute.xlu0 %5135
      %5137 = vrot.lane.b32.xlu0 %v4758, 56
      %v5138 = vpop.permute.xlu0 %5137
      %5139 = vrot.lane.b32.xlu0 %v4766, 56
      %v5140 = vpop.permute.xlu0 %5139
      %5141 = vrot.lane.b32.xlu0 %v4774, 56
      %v5142 = vpop.permute.xlu0 %5141
      %5143 = vrot.lane.b32.xlu0 %v4946, 56
      %v5144 = vpop.permute.xlu0 %5143
      %5145 = vrot.lane.b32.xlu0 %v5114, 56
      %v5146 = vpop.permute.xlu0 %5145
      %5147 = vrot.lane.b32.xlu0 %v1828, 56
      %v5148 = vpop.permute.xlu0 %5147
      %v5164 = vrot.slane %v4643, 1
      %v5165 = vrot.slane %v4644, 1
      %v5166 = vsel %vm2000, %v5164, %v5165
      %v5167 = vrot.slane %v4645, 1
      %v5168 = vsel %vm2000, %v5165, %v5167
      %v5169 = vrot.slane %v4646, 1
      %v5170 = vsel %vm2000, %v5167, %v5169
      %v5171 = vrot.slane %v4647, 1
      %v5172 = vsel %vm2000, %v5169, %v5171
      %v5173 = vrot.slane %v4648, 1
      %v5174 = vsel %vm2000, %v5171, %v5173
      %v5175 = vrot.slane %v4649, 1
      %v5176 = vsel %vm2000, %v5173, %v5175
      %v5177 = vrot.slane %v4650, 1
      %v5178 = vsel %vm2000, %v5175, %v5177
      %v5179 = vrot.slane %v4651, 1
      %v5180 = vsel %vm2000, %v5177, %v5179
      %v5181 = vrot.slane %v4652, 1
      %v5182 = vsel %vm2000, %v5179, %v5181
      %v5183 = vrot.slane %v4653, 1
      %v5184 = vsel %vm2000, %v5181, %v5183
      %v5185 = vrot.slane %v4654, 1
      %v5186 = vsel %vm2000, %v5183, %v5185
      %v5187 = vrot.slane %v4655, 1
      %v5188 = vsel %vm2000, %v5185, %v5187
      %v5189 = vrot.slane %v4656, 1
      %v5190 = vsel %vm2000, %v5187, %v5189
      %v5191 = vrot.slane %v4657, 1
      %v5192 = vsel %vm2000, %v5189, %v5191
      %v5193 = vsel %vm2000, %v5191, %v2001
      %5194 = vrot.lane.b32.xlu0 %v5164, 64
      %v5195 = vpop.permute.xlu0 %5194
      %5196 = vrot.lane.b32.xlu0 %v5166, 64
      %v5197 = vpop.permute.xlu0 %5196
      %5198 = vrot.lane.b32.xlu0 %v5168, 64
      %v5199 = vpop.permute.xlu0 %5198
      %5200 = vrot.lane.b32.xlu0 %v5170, 64
      %v5201 = vpop.permute.xlu0 %5200
      %5202 = vrot.lane.b32.xlu0 %v5172, 64
      %v5203 = vpop.permute.xlu0 %5202
      %5204 = vrot.lane.b32.xlu0 %v5174, 64
      %v5205 = vpop.permute.xlu0 %5204
      %5206 = vrot.lane.b32.xlu0 %v5176, 64
      %v5207 = vpop.permute.xlu0 %5206
      %5208 = vrot.lane.b32.xlu0 %v5178, 64
      %v5209 = vpop.permute.xlu0 %5208
      %5210 = vrot.lane.b32.xlu0 %v5180, 64
      %v5211 = vpop.permute.xlu0 %5210
      %5212 = vrot.lane.b32.xlu0 %v5182, 64
      %v5213 = vpop.permute.xlu0 %5212
      %5214 = vrot.lane.b32.xlu0 %v5184, 64
      %v5215 = vpop.permute.xlu0 %5214
      %5216 = vrot.lane.b32.xlu0 %v5186, 64
      %v5217 = vpop.permute.xlu0 %5216
      %5218 = vrot.lane.b32.xlu0 %v5188, 64
      %v5219 = vpop.permute.xlu0 %5218
      %5220 = vrot.lane.b32.xlu0 %v5190, 64
      %v5221 = vpop.permute.xlu0 %5220
      %5222 = vrot.lane.b32.xlu0 %v5192, 64
      %v5223 = vpop.permute.xlu0 %5222
      %5224 = vrot.lane.b32.xlu0 %v5193, 64
      %v5225 = vpop.permute.xlu0 %5224
      %5226 = vrot.lane.b32.xlu0 %v2372, 64
      %v5227 = vpop.permute.xlu0 %5226
      %v5229 = vsel %vm2964, 0, %v4779
      %v5231 = vsel %vm2964, 0, %v4781
      %v5234 = vsel %vm2964, %v4564, %v4783
      %v5237 = vsel %vm2964, %v4565, %v4785
      %v5240 = vsel %vm2964, %v4566, %v4787
      %v5243 = vsel %vm2964, %v4567, %v4789
      %v5246 = vsel %vm2964, %v4568, %v4791
      %v5249 = vsel %vm2964, %v4569, %v4793
      %v5252 = vsel %vm2964, %v4570, %v4795
      %v5255 = vsel %vm2964, %v4571, %v4797
      %v5258 = vsel %vm2964, %v4572, %v4799
      %v5261 = vsel %vm2964, %v4573, %v4801
      %v5264 = vsel %vm2964, %v4574, %v4803
      %v5267 = vsel %vm2964, %v4575, %v4805
      %v5270 = vsel %vm2964, %v4576, %v4807
      %v5273 = vsel %vm2964, %v4577, %v4809
      %v5276 = vsel %vm2964, %v4578, %v4811
      %v5278 = vsel %vm3034, %v5229, %v4861
      %v5280 = vsel %vm3034, %v5231, %v4863
      %v5282 = vsel %vm3034, %v5234, %v4865
      %v5284 = vsel %vm3034, %v5237, %v4867
      %v5286 = vsel %vm3034, %v5240, %v4869
      %v5288 = vsel %vm3034, %v5243, %v4871
      %v5290 = vsel %vm3034, %v5246, %v4873
      %v5292 = vsel %vm3034, %v5249, %v4875
      %v5294 = vsel %vm3034, %v5252, %v4877
      %v5296 = vsel %vm3034, %v5255, %v4879
      %v5298 = vsel %vm3034, %v5258, %v4881
      %v5300 = vsel %vm3034, %v5261, %v4883
      %v5302 = vsel %vm3034, %v5264, %v4885
      %v5304 = vsel %vm3034, %v5267, %v4887
      %v5306 = vsel %vm3034, %v5270, %v4889
      %v5308 = vsel %vm3034, %v5273, %v4891
      %v5310 = vsel %vm3034, %v5276, %v4893
      %v5311 = vsel %vm3104, %v5278, %v2291
      %v5313 = vsel %vm3104, %v5280, %v4911
      %v5315 = vsel %vm3104, %v5282, %v4913
      %v5317 = vsel %vm3104, %v5284, %v4915
      %v5319 = vsel %vm3104, %v5286, %v4917
      %v5321 = vsel %vm3104, %v5288, %v4919
      %v5323 = vsel %vm3104, %v5290, %v4921
      %v5325 = vsel %vm3104, %v5292, %v4923
      %v5327 = vsel %vm3104, %v5294, %v4925
      %v5329 = vsel %vm3104, %v5296, %v4927
      %v5331 = vsel %vm3104, %v5298, %v4929
      %v5333 = vsel %vm3104, %v5300, %v4931
      %v5335 = vsel %vm3104, %v5302, %v4933
      %v5337 = vsel %vm3104, %v5304, %v4935
      %v5339 = vsel %vm3104, %v5306, %v4937
      %v5341 = vsel %vm3104, %v5308, %v4939
      %v5343 = vsel %vm3104, %v5310, %v4941
      %v5345 = vsel %vm3174, %v5311, %v4951
      %v5347 = vsel %vm3174, %v5313, %v4953
      %v5349 = vsel %vm3174, %v5315, %v4955
      %v5351 = vsel %vm3174, %v5317, %v4957
      %v5353 = vsel %vm3174, %v5319, %v4959
      %v5355 = vsel %vm3174, %v5321, %v4961
      %v5357 = vsel %vm3174, %v5323, %v4963
      %v5359 = vsel %vm3174, %v5325, %v4965
      %v5361 = vsel %vm3174, %v5327, %v4967
      %v5363 = vsel %vm3174, %v5329, %v4969
      %v5365 = vsel %vm3174, %v5331, %v4971
      %v5367 = vsel %vm3174, %v5333, %v4973
      %v5369 = vsel %vm3174, %v5335, %v4975
      %v5371 = vsel %vm3174, %v5337, %v4977
      %v5373 = vsel %vm3174, %v5339, %v4979
      %v5375 = vsel %vm3174, %v5341, %v4981
      %v5377 = vsel %vm3174, %v5343, %v4983
      %v5379 = vsel %vm3243, %v5345, %v5033
      %v5381 = vsel %vm3243, %v5347, %v5035
      %v5383 = vsel %vm3243, %v5349, %v5037
      %v5385 = vsel %vm3243, %v5351, %v5039
      %v5387 = vsel %vm3243, %v5353, %v5041
      %v5389 = vsel %vm3243, %v5355, %v5043
      %v5391 = vsel %vm3243, %v5357, %v5045
      %v5393 = vsel %vm3243, %v5359, %v5047
      %v5395 = vsel %vm3243, %v5361, %v5049
      %v5397 = vsel %vm3243, %v5363, %v5051
      %v5399 = vsel %vm3243, %v5365, %v5053
      %v5401 = vsel %vm3243, %v5367, %v5055
      %v5403 = vsel %vm3243, %v5369, %v5057
      %v5405 = vsel %vm3243, %v5371, %v5059
      %v5407 = vsel %vm3243, %v5373, %v5061
      %v5409 = vsel %vm3243, %v5375, %v5063
      %v5411 = vsel %vm3243, %v5377, %v5065
      %v5413 = vsel %vm3313, %v5379, %v5083
      %v5415 = vsel %vm3313, %v5381, %v5085
      %v5417 = vsel %vm3313, %v5383, %v5087
      %v5419 = vsel %vm3313, %v5385, %v5089
      %v5421 = vsel %vm3313, %v5387, %v5091
      %v5423 = vsel %vm3313, %v5389, %v5093
      %v5425 = vsel %vm3313, %v5391, %v5095
      %v5427 = vsel %vm3313, %v5393, %v5097
      %v5429 = vsel %vm3313, %v5395, %v5099
      %v5431 = vsel %vm3313, %v5397, %v5101
      %v5433 = vsel %vm3313, %v5399, %v5103
      %v5435 = vsel %vm3313, %v5401, %v5105
      %v5437 = vsel %vm3313, %v5403, %v5107
      %v5439 = vsel %vm3313, %v5405, %v5109
      %v5441 = vsel %vm3313, %v5407, %v5111
      %v5443 = vsel %vm3313, %v5409, %v5113
      %v5444 = vsel %vm3313, %v5411, %v2707
      %v5446 = vsel %vm3383, %v5413, %v5116
      %v5448 = vsel %vm3383, %v5415, %v5118
      %v5450 = vsel %vm3383, %v5417, %v5120
      %v5452 = vsel %vm3383, %v5419, %v5122
      %v5454 = vsel %vm3383, %v5421, %v5124
      %v5456 = vsel %vm3383, %v5423, %v5126
      %v5458 = vsel %vm3383, %v5425, %v5128
      %v5460 = vsel %vm3383, %v5427, %v5130
      %v5462 = vsel %vm3383, %v5429, %v5132
      %v5464 = vsel %vm3383, %v5431, %v5134
      %v5466 = vsel %vm3383, %v5433, %v5136
      %v5468 = vsel %vm3383, %v5435, %v5138
      %v5470 = vsel %vm3383, %v5437, %v5140
      %v5472 = vsel %vm3383, %v5439, %v5142
      %v5474 = vsel %vm3383, %v5441, %v5144
      %v5476 = vsel %vm3383, %v5443, %v5146
      %v5478 = vsel %vm3383, %v5444, %v5148
      %v5480 = vsel %vm3783, %v5446, %v5195
      %v5482 = vsel %vm3783, %v5448, %v5197
      %v5484 = vsel %vm3783, %v5450, %v5199
      %v5486 = vsel %vm3783, %v5452, %v5201
      %v5488 = vsel %vm3783, %v5454, %v5203
      %v5490 = vsel %vm3783, %v5456, %v5205
      %v5492 = vsel %vm3783, %v5458, %v5207
      %v5494 = vsel %vm3783, %v5460, %v5209
      %v5496 = vsel %vm3783, %v5462, %v5211
      %v5498 = vsel %vm3783, %v5464, %v5213
      %v5500 = vsel %vm3783, %v5466, %v5215
      %v5502 = vsel %vm3783, %v5468, %v5217
      %v5504 = vsel %vm3783, %v5470, %v5219
      %v5506 = vsel %vm3783, %v5472, %v5221
      %v5508 = vsel %vm3783, %v5474, %v5223
      %v5510 = vsel %vm3783, %v5476, %v5225
      %v5512 = vsel %vm3783, %v5478, %v5227
      %v5513 = vld [vmem:[%s6] sm:$0xf]
      %v5514 = vld [vmem:[%s6 + $0x4] sm:$0xf]
      %v5515 = vld [vmem:[%s6 + $0x8] sm:$0xf]
      %v5516 = vld [vmem:[%s6 + $0xc] sm:$0xf]
      %v5517 = vld [vmem:[%s6 + $0x10] sm:$0xf]
      %v5518 = vld [vmem:[%s6 + $0x14] sm:$0xf]
      %v5519 = vld [vmem:[%s6 + $0x18] sm:$0xf]
      %v5520 = vld [vmem:[%s6 + $0x1c] sm:$0xf]
      %v5521 = vld [vmem:[%s6 + $0x20] sm:$0xf]
      %v5522 = vld [vmem:[%s7] sm:$0x1]
      %v5523 = vld [vmem:[%s8] sm:$0x1]
      %v5524 = vld [vmem:[%s9] sm:$0x1]
      %v5526 = vlaneseq
      %v5527 = vshrl.u32 %v5526, 7
      %v5528 = vsub.s32 0, %v5527
      %v5529 = vrot.slane %v5522, %v5528
      %v5531 = vshrl.u32 %v5480, 16
      %v5533 = vrot.slane %v5531, 7
      %v5534 = vshrl.u32 %v5482, 16
      %v5536 = vrot.slane %v5534, 7
      %v5537 = vshll.u32 %v5482, 16
      %v5539 = vor.u32 %v5536, %v5537
      %v5540 = vsel %vm1359, %v5533, %v5539
      %v5541 = vshrl.u32 %v5484, 16
      %v5543 = vrot.slane %v5541, 7
      %v5544 = vshll.u32 %v5484, 16
      %v5546 = vor.u32 %v5543, %v5544
      %v5547 = vsel %vm1359, %v5536, %v5546
      %v5548 = vshrl.u32 %v5486, 16
      %v5550 = vrot.slane %v5548, 7
      %v5551 = vshll.u32 %v5486, 16
      %v5553 = vor.u32 %v5550, %v5551
      %v5554 = vsel %vm1359, %v5543, %v5553
      %v5555 = vshrl.u32 %v5488, 16
      %v5557 = vrot.slane %v5555, 7
      %v5558 = vshll.u32 %v5488, 16
      %v5560 = vor.u32 %v5557, %v5558
      %v5561 = vsel %vm1359, %v5550, %v5560
      %v5562 = vshrl.u32 %v5490, 16
      %v5564 = vrot.slane %v5562, 7
      %v5565 = vshll.u32 %v5490, 16
      %v5567 = vor.u32 %v5564, %v5565
      %v5568 = vsel %vm1359, %v5557, %v5567
      %v5569 = vshrl.u32 %v5492, 16
      %v5571 = vrot.slane %v5569, 7
      %v5572 = vshll.u32 %v5492, 16
      %v5574 = vor.u32 %v5571, %v5572
      %v5575 = vsel %vm1359, %v5564, %v5574
      %v5576 = vshrl.u32 %v5494, 16
      %v5578 = vrot.slane %v5576, 7
      %v5579 = vshll.u32 %v5494, 16
      %v5581 = vor.u32 %v5578, %v5579
      %v5582 = vsel %vm1359, %v5571, %v5581
      %v5583 = vshrl.u32 %v5496, 16
      %v5585 = vrot.slane %v5583, 7
      %v5586 = vshll.u32 %v5496, 16
      %v5588 = vor.u32 %v5585, %v5586
      %v5589 = vsel %vm1359, %v5578, %v5588
      %v5590 = vshrl.u32 %v5498, 16
      %v5592 = vrot.slane %v5590, 7
      %v5593 = vshll.u32 %v5498, 16
      %v5595 = vor.u32 %v5592, %v5593
      %v5596 = vsel %vm1359, %v5585, %v5595
      %v5597 = vshrl.u32 %v5500, 16
      %v5599 = vrot.slane %v5597, 7
      %v5600 = vshll.u32 %v5500, 16
      %v5602 = vor.u32 %v5599, %v5600
      %v5603 = vsel %vm1359, %v5592, %v5602
      %v5604 = vshrl.u32 %v5502, 16
      %v5606 = vrot.slane %v5604, 7
      %v5607 = vshll.u32 %v5502, 16
      %v5609 = vor.u32 %v5606, %v5607
      %v5610 = vsel %vm1359, %v5599, %v5609
      %v5611 = vshrl.u32 %v5504, 16
      %v5613 = vrot.slane %v5611, 7
      %v5614 = vshll.u32 %v5504, 16
      %v5616 = vor.u32 %v5613, %v5614
      %v5617 = vsel %vm1359, %v5606, %v5616
      %v5618 = vshrl.u32 %v5506, 16
      %v5620 = vrot.slane %v5618, 7
      %v5621 = vshll.u32 %v5506, 16
      %v5623 = vor.u32 %v5620, %v5621
      %v5624 = vsel %vm1359, %v5613, %v5623
      %v5625 = vshrl.u32 %v5508, 16
      %v5627 = vrot.slane %v5625, 7
      %v5628 = vshll.u32 %v5508, 16
      %v5630 = vor.u32 %v5627, %v5628
      %v5631 = vsel %vm1359, %v5620, %v5630
      %v5632 = vshrl.u32 %v5510, 16
      %v5634 = vrot.slane %v5632, 7
      %v5635 = vshll.u32 %v5510, 16
      %v5637 = vor.u32 %v5634, %v5635
      %v5638 = vsel %vm1359, %v5627, %v5637
      %v5639 = vshrl.u32 %v5512, 16
      %v5641 = vrot.slane %v5639, 7
      %v5642 = vshll.u32 %v5512, 16
      %v5644 = vor.u32 %v5641, %v5642
      %v5645 = vsel %vm1359, %v5634, %v5644
      %v5655 = vunpack.c.l.b16 %v5513
      %v5656 = vunpack.c.l.b16 %v5514
      %v5657 = vunpack.c.l.b16 %v5515
      %v5658 = vunpack.c.l.b16 %v5516
      %v5659 = vunpack.c.l.b16 %v5517
      %v5660 = vunpack.c.l.b16 %v5518
      %v5661 = vunpack.c.l.b16 %v5519
      %v5662 = vunpack.c.l.b16 %v5520
      %v5663 = vunpack.c.l.b16 %v5521
      %v5664 = vpack.c.b16 %v5656, %v5655
      %v5665 = vpack.c.b16 %v5658, %v5657
      %v5666 = vpack.c.b16 %v5660, %v5659
      %v5667 = vpack.c.b16 %v5662, %v5661
      %v5668 = vpack.c.b16 %v5663, %v5663
      %v5674 = vsel %vm3978, %v5540, 0
      %v5677 = vsel %vm3978, %v5547, 0
      %v5680 = vsel %vm3978, %v5554, 0
      %v5683 = vsel %vm3978, %v5561, 0
      %v5686 = vsel %vm3978, %v5568, 0
      %v5689 = vsel %vm3978, %v5575, 0
      %v5692 = vsel %vm3978, %v5582, 0
      %v5695 = vsel %vm3978, %v5589, 0
      %v5698 = vsel %vm3978, %v5596, 0
      %v5701 = vsel %vm3978, %v5603, 0
      %v5704 = vsel %vm3978, %v5610, 0
      %v5707 = vsel %vm3978, %v5617, 0
      %v5710 = vsel %vm3978, %v5624, 0
      %v5713 = vsel %vm3978, %v5631, 0
      %v5716 = vsel %vm3978, %v5638, 0
      %v5719 = vsel %vm3978, %v5645, 0
      %v5722 = vsel %vm4027, %v5668, 0
      %5724 = vmatprep.subr.bf16.mxu0 0
      %5725 = vmatpush1.bf16.msra.mxu0 %v5664
      %5726 = vmatprep.subr.bf16.mxu0 0
      %5727 = vmatpush1.bf16.msra.mxu0 %v5665
      %5728 = vmatprep.subr.bf16.mxu0 0
      %5729 = vmatpush1.bf16.msra.mxu0 %v5666
      %5730 = vmatprep.subr.bf16.mxu0 0
      %5731 = vmatpush1.bf16.msra.mxu0 %v5667
      %5732 = vmatprep.subr.bf16.mxu0 0
      %5733 = vmatpush1.bf16.msra.mxu0 %v5722
      %5734 = vmatprep.subr.bf16.mxu0 0
      %5735 = vmatpush1.bf16.msra.mxu0 0
      %5736 = vmatprep.subr.bf16.mxu0 0
      %5737 = vmatpush1.bf16.msra.mxu0 0
      %5738 = vmatprep.subr.bf16.mxu0 0
      %5739 = vmatpush1.bf16.msra.mxu0 0
      %5740 = vmatprep.subr.bf16.mxu0 0
      %5741 = vmatpush1.bf16.msra.mxu0 0
      %5742 = vmatprep.subr.bf16.mxu0 0
      %5743 = vmatpush1.bf16.msra.mxu0 0
      %5744 = vmatprep.subr.bf16.mxu0 0
      %5745 = vmatpush1.bf16.msra.mxu0 0
      %5746 = vmatprep.subr.bf16.mxu0 0
      %5747 = vmatpush1.bf16.msra.mxu0 0
      %5748 = vmatprep.subr.bf16.mxu0 0
      %5749 = vmatpush1.bf16.msra.mxu0 0
      %5750 = vmatprep.subr.bf16.mxu0 0
      %5751 = vmatpush1.bf16.msra.mxu0 0
      %5752 = vmatprep.subr.bf16.mxu0 0
      %5753 = vmatpush1.bf16.msra.mxu0 0
      %5754 = vmatprep.subr.bf16.mxu0 0
      %5755 = vmatpush1.bf16.msra.mxu0 0
      %5756 = vmatprep.mubr.bf16.mxu0 0
      %5757 = vmatmul.mubr.bf16.gmra.mrb[0].mxu0 %v5674
      %v5758 = vpop.f32.mrb[0].mxu0
      %v5759 = vadd.f32 %v5529, %v5758
      %v5760 = vpop.f32.mrb[0].mxu0
      %v5761 = vpop.f32.mrb[0].mxu0
      %v5762 = vadd.f32 %v5529, %v5761
      %v5763 = vpop.f32.mrb[0].mxu0
      %5764 = vmatprep.mubr.bf16.mxu0 0
      %5765 = vmatmul.mubr.bf16.gmra.mrb[0].mxu0 %v5677
      %v5766 = vpop.f32.mrb[0].mxu0
      %v5767 = vadd.f32 %v5529, %v5766
      %v5768 = vpop.f32.mrb[0].mxu0
      %v5769 = vpop.f32.mrb[0].mxu0
      %v5770 = vadd.f32 %v5529, %v5769
      %v5771 = vpop.f32.mrb[0].mxu0
      %5772 = vmatprep.mubr.bf16.mxu0 0
      %5773 = vmatmul.mubr.bf16.gmra.mrb[0].mxu0 %v5680
      %v5774 = vpop.f32.mrb[0].mxu0
      %v5775 = vadd.f32 %v5529, %v5774
      %v5776 = vpop.f32.mrb[0].mxu0
      %v5777 = vpop.f32.mrb[0].mxu0
      %v5778 = vadd.f32 %v5529, %v5777
      %v5779 = vpop.f32.mrb[0].mxu0
      %5780 = vmatprep.mubr.bf16.mxu0 0
      %5781 = vmatmul.mubr.bf16.gmra.mrb[0].mxu0 %v5683
      %v5782 = vpop.f32.mrb[0].mxu0
      %v5783 = vadd.f32 %v5529, %v5782
      %v5784 = vpop.f32.mrb[0].mxu0
      %v5785 = vpop.f32.mrb[0].mxu0
      %v5786 = vadd.f32 %v5529, %v5785
      %v5787 = vpop.f32.mrb[0].mxu0
      %5788 = vmatprep.mubr.bf16.mxu0 0
      %5789 = vmatmul.mubr.bf16.gmra.mrb[0].mxu0 %v5686
      %v5790 = vpop.f32.mrb[0].mxu0
      %v5791 = vadd.f32 %v5529, %v5790
      %v5792 = vpop.f32.mrb[0].mxu0
      %v5793 = vpop.f32.mrb[0].mxu0
      %v5794 = vadd.f32 %v5529, %v5793
      %v5795 = vpop.f32.mrb[0].mxu0
      %5796 = vmatprep.mubr.bf16.mxu0 0
      %5797 = vmatmul.mubr.bf16.gmra.mrb[0].mxu0 %v5689
      %v5798 = vpop.f32.mrb[0].mxu0
      %v5799 = vadd.f32 %v5529, %v5798
      %v5800 = vpop.f32.mrb[0].mxu0
      %v5801 = vpop.f32.mrb[0].mxu0
      %v5802 = vadd.f32 %v5529, %v5801
      %v5803 = vpop.f32.mrb[0].mxu0
      %5804 = vmatprep.mubr.bf16.mxu0 0
      %5805 = vmatmul.mubr.bf16.gmra.mrb[0].mxu0 %v5692
      %v5806 = vpop.f32.mrb[0].mxu0
      %v5807 = vadd.f32 %v5529, %v5806
      %v5808 = vpop.f32.mrb[0].mxu0
      %v5809 = vpop.f32.mrb[0].mxu0
      %v5810 = vadd.f32 %v5529, %v5809
      %v5811 = vpop.f32.mrb[0].mxu0
      %5812 = vmatprep.mubr.bf16.mxu0 0
      %5813 = vmatmul.mubr.bf16.gmra.mrb[0].mxu0 %v5695
      %v5814 = vpop.f32.mrb[0].mxu0
      %v5815 = vadd.f32 %v5529, %v5814
      %v5816 = vpop.f32.mrb[0].mxu0
      %v5817 = vpop.f32.mrb[0].mxu0
      %v5818 = vadd.f32 %v5529, %v5817
      %v5819 = vpop.f32.mrb[0].mxu0
      %5820 = vmatprep.mubr.bf16.mxu0 0
      %5821 = vmatmul.mubr.bf16.gmra.mrb[0].mxu0 %v5698
      %v5822 = vpop.f32.mrb[0].mxu0
      %v5823 = vadd.f32 %v5529, %v5822
      %v5824 = vpop.f32.mrb[0].mxu0
      %v5825 = vpop.f32.mrb[0].mxu0
      %v5826 = vadd.f32 %v5529, %v5825
      %v5827 = vpop.f32.mrb[0].mxu0
      %5828 = vmatprep.mubr.bf16.mxu0 0
      %5829 = vmatmul.mubr.bf16.gmra.mrb[0].mxu0 %v5701
      %v5830 = vpop.f32.mrb[0].mxu0
      %v5831 = vadd.f32 %v5529, %v5830
      %v5832 = vpop.f32.mrb[0].mxu0
      %v5833 = vpop.f32.mrb[0].mxu0
      %v5834 = vadd.f32 %v5529, %v5833
      %v5835 = vpop.f32.mrb[0].mxu0
      %5836 = vmatprep.mubr.bf16.mxu0 0
      %5837 = vmatmul.mubr.bf16.gmra.mrb[0].mxu0 %v5704
      %v5838 = vpop.f32.mrb[0].mxu0
      %v5839 = vadd.f32 %v5529, %v5838
      %v5840 = vpop.f32.mrb[0].mxu0
      %v5841 = vpop.f32.mrb[0].mxu0
      %v5842 = vadd.f32 %v5529, %v5841
      %v5843 = vpop.f32.mrb[0].mxu0
      %5844 = vmatprep.mubr.bf16.mxu0 0
      %5845 = vmatmul.mubr.bf16.gmra.mrb[0].mxu0 %v5707
      %v5846 = vpop.f32.mrb[0].mxu0
      %v5847 = vadd.f32 %v5529, %v5846
      %v5848 = vpop.f32.mrb[0].mxu0
      %v5849 = vpop.f32.mrb[0].mxu0
      %v5850 = vadd.f32 %v5529, %v5849
      %v5851 = vpop.f32.mrb[0].mxu0
      %5852 = vmatprep.mubr.bf16.mxu0 0
      %5853 = vmatmul.mubr.bf16.gmra.mrb[0].mxu0 %v5710
      %v5854 = vpop.f32.mrb[0].mxu0
      %v5855 = vadd.f32 %v5529, %v5854
      %v5856 = vpop.f32.mrb[0].mxu0
      %v5857 = vpop.f32.mrb[0].mxu0
      %v5858 = vadd.f32 %v5529, %v5857
      %v5859 = vpop.f32.mrb[0].mxu0
      %5860 = vmatprep.mubr.bf16.mxu0 0
      %5861 = vmatmul.mubr.bf16.gmra.mrb[0].mxu0 %v5713
      %v5862 = vpop.f32.mrb[0].mxu0
      %v5863 = vadd.f32 %v5529, %v5862
      %v5864 = vpop.f32.mrb[0].mxu0
      %v5865 = vpop.f32.mrb[0].mxu0
      %v5866 = vadd.f32 %v5529, %v5865
      %v5867 = vpop.f32.mrb[0].mxu0
      %5868 = vmatprep.mubr.bf16.mxu0 0
      %5869 = vmatmul.mubr.bf16.gmra.mrb[0].mxu0 %v5716
      %v5870 = vpop.f32.mrb[0].mxu0
      %v5871 = vadd.f32 %v5529, %v5870
      %v5872 = vpop.f32.mrb[0].mxu0
      %v5873 = vpop.f32.mrb[0].mxu0
      %v5874 = vadd.f32 %v5529, %v5873
      %v5875 = vpop.f32.mrb[0].mxu0
      %5876 = vmatprep.mubr.bf16.mxu0 0
      %5877 = vmatmul.mubr.bf16.gmra.mrb[0].mxu0 %v5719
      %v5878 = vpop.f32.mrb[0].mxu0
      %v5879 = vadd.f32 %v5529, %v5878
      %v5880 = vpop.f32.mrb[0].mxu0
      %v5881 = vpop.f32.mrb[0].mxu0
      %v5882 = vadd.f32 %v5529, %v5881
      %v5883 = vpop.f32.mrb[0].mxu0
      %5884 = vdwg.mxu0
      %v5885 = vsel %vm2964, %v5759, 0.0
      %v5886 = vsel %vm2964, %v5762, 0.0
      %v5887 = vadd.f32 %v5885, %v5886
      %v5888 = vsel %vm2964, %v5767, 0.0
      %v5889 = vadd.f32 %v5887, %v5888
      %v5890 = vsel %vm2964, %v5770, 0.0
      %v5891 = vadd.f32 %v5889, %v5890
      %v5892 = vsel %vm2964, %v5775, 0.0
      %v5893 = vadd.f32 %v5891, %v5892
      %v5894 = vsel %vm2964, %v5778, 0.0
      %v5895 = vadd.f32 %v5893, %v5894
      %v5896 = vsel %vm2964, %v5783, 0.0
      %v5897 = vadd.f32 %v5895, %v5896
      %v5898 = vsel %vm2964, %v5786, 0.0
      %v5899 = vadd.f32 %v5897, %v5898
      %v5900 = vsel %vm2964, %v5791, 0.0
      %v5901 = vadd.f32 %v5899, %v5900
      %v5902 = vsel %vm2964, %v5794, 0.0
      %v5903 = vadd.f32 %v5901, %v5902
      %v5904 = vsel %vm2964, %v5799, 0.0
      %v5905 = vadd.f32 %v5903, %v5904
      %v5906 = vsel %vm2964, %v5802, 0.0
      %v5907 = vadd.f32 %v5905, %v5906
      %v5908 = vsel %vm2964, %v5807, 0.0
      %v5909 = vadd.f32 %v5907, %v5908
      %v5910 = vsel %vm2964, %v5810, 0.0
      %v5911 = vadd.f32 %v5909, %v5910
      %v5912 = vsel %vm2964, %v5815, 0.0
      %v5913 = vadd.f32 %v5911, %v5912
      %v5914 = vsel %vm2964, %v5818, 0.0
      %v5915 = vadd.f32 %v5913, %v5914
      %v5916 = vsel %vm2964, %v5823, 0.0
      %v5917 = vadd.f32 %v5915, %v5916
      %v5918 = vsel %vm2964, %v5826, 0.0
      %v5919 = vadd.f32 %v5917, %v5918
      %v5920 = vsel %vm2964, %v5831, 0.0
      %v5921 = vadd.f32 %v5919, %v5920
      %v5922 = vsel %vm2964, %v5834, 0.0
      %v5923 = vadd.f32 %v5921, %v5922
      %v5924 = vsel %vm2964, %v5839, 0.0
      %v5925 = vadd.f32 %v5923, %v5924
      %v5926 = vsel %vm2964, %v5842, 0.0
      %v5927 = vadd.f32 %v5925, %v5926
      %v5928 = vsel %vm2964, %v5847, 0.0
      %v5929 = vadd.f32 %v5927, %v5928
      %v5930 = vsel %vm2964, %v5850, 0.0
      %v5931 = vadd.f32 %v5929, %v5930
      %v5932 = vsel %vm2964, %v5855, 0.0
      %v5933 = vadd.f32 %v5931, %v5932
      %v5934 = vsel %vm2964, %v5858, 0.0
      %v5935 = vadd.f32 %v5933, %v5934
      %v5936 = vsel %vm2964, %v5863, 0.0
      %v5937 = vadd.f32 %v5935, %v5936
      %v5938 = vsel %vm2964, %v5866, 0.0
      %v5939 = vadd.f32 %v5937, %v5938
      %v5940 = vsel %vm2964, %v5871, 0.0
      %v5941 = vadd.f32 %v5939, %v5940
      %v5942 = vsel %vm2964, %v5874, 0.0
      %v5943 = vadd.f32 %v5941, %v5942
      %v5944 = vsel %vm2964, %v5879, 0.0
      %v5945 = vadd.f32 %v5943, %v5944
      %v5946 = vsel %vm2964, %v5882, 0.0
      %v5947 = vadd.f32 %v5945, %v5946
      %5948 = vadd.xlane.f32.xlu0 %v5947
      %v5949 = vpop.xlane.xlu0 %5948
      %v5950 = vrot.slane %v5949, 4
      %v5951 = vadd.f32 %v5949, %v5950
      %v5952 = vrot.slane %v5951, 2
      %v5953 = vadd.f32 %v5951, %v5952
      %v5954 = vrot.slane %v5953, 1
      %v5955 = vadd.f32 %v5953, %v5954
      %s5956 = vtos %v5955
      %s5957 = smul.f32 %s5956, 0.00048828125
      %v5958 = vstv %s5957
      %v5959 = vsub.f32 %v5759, %v5958
      %v5960 = vsub.f32 %v5762, %v5958
      %v5961 = vsub.f32 %v5767, %v5958
      %v5962 = vsub.f32 %v5770, %v5958
      %v5963 = vsub.f32 %v5775, %v5958
      %v5964 = vsub.f32 %v5778, %v5958
      %v5965 = vsub.f32 %v5783, %v5958
      %v5966 = vsub.f32 %v5786, %v5958
      %v5967 = vsub.f32 %v5791, %v5958
      %v5968 = vsub.f32 %v5794, %v5958
      %v5969 = vsub.f32 %v5799, %v5958
      %v5970 = vsub.f32 %v5802, %v5958
      %v5971 = vsub.f32 %v5807, %v5958
      %v5972 = vsub.f32 %v5810, %v5958
      %v5973 = vsub.f32 %v5815, %v5958
      %v5974 = vsub.f32 %v5818, %v5958
      %v5975 = vsub.f32 %v5823, %v5958
      %v5976 = vsub.f32 %v5826, %v5958
      %v5977 = vsub.f32 %v5831, %v5958
      %v5978 = vsub.f32 %v5834, %v5958
      %v5979 = vsub.f32 %v5839, %v5958
      %v5980 = vsub.f32 %v5842, %v5958
      %v5981 = vsub.f32 %v5847, %v5958
      %v5982 = vsub.f32 %v5850, %v5958
      %v5983 = vsub.f32 %v5855, %v5958
      %v5984 = vsub.f32 %v5858, %v5958
      %v5985 = vsub.f32 %v5863, %v5958
      %v5986 = vsub.f32 %v5866, %v5958
      %v5987 = vsub.f32 %v5871, %v5958
      %v5988 = vsub.f32 %v5874, %v5958
      %v5989 = vsub.f32 %v5879, %v5958
      %v5990 = vsub.f32 %v5882, %v5958
      %v5991 = vmul.f32 %v5959, %v5959
      %v5992 = vmul.f32 %v5960, %v5960
      %v5993 = vmul.f32 %v5961, %v5961
      %v5994 = vmul.f32 %v5962, %v5962
      %v5995 = vmul.f32 %v5963, %v5963
      %v5996 = vmul.f32 %v5964, %v5964
      %v5997 = vmul.f32 %v5965, %v5965
      %v5998 = vmul.f32 %v5966, %v5966
      %v5999 = vmul.f32 %v5967, %v5967
      %v6000 = vmul.f32 %v5968, %v5968
      %v6001 = vmul.f32 %v5969, %v5969
      %v6002 = vmul.f32 %v5970, %v5970
      %v6003 = vmul.f32 %v5971, %v5971
      %v6004 = vmul.f32 %v5972, %v5972
      %v6005 = vmul.f32 %v5973, %v5973
      %v6006 = vmul.f32 %v5974, %v5974
      %v6007 = vmul.f32 %v5975, %v5975
      %v6008 = vmul.f32 %v5976, %v5976
      %v6009 = vmul.f32 %v5977, %v5977
      %v6010 = vmul.f32 %v5978, %v5978
      %v6011 = vmul.f32 %v5979, %v5979
      %v6012 = vmul.f32 %v5980, %v5980
      %v6013 = vmul.f32 %v5981, %v5981
      %v6014 = vmul.f32 %v5982, %v5982
      %v6015 = vmul.f32 %v5983, %v5983
      %v6016 = vmul.f32 %v5984, %v5984
      %v6017 = vmul.f32 %v5985, %v5985
      %v6018 = vmul.f32 %v5986, %v5986
      %v6019 = vmul.f32 %v5987, %v5987
      %v6020 = vmul.f32 %v5988, %v5988
      %v6021 = vmul.f32 %v5989, %v5989
      %v6022 = vmul.f32 %v5990, %v5990
      %v6023 = vsel %vm2964, %v5991, 0.0
      %v6024 = vsel %vm2964, %v5992, 0.0
      %v6025 = vadd.f32 %v6023, %v6024
      %v6026 = vsel %vm2964, %v5993, 0.0
      %v6027 = vadd.f32 %v6025, %v6026
      %v6028 = vsel %vm2964, %v5994, 0.0
      %v6029 = vadd.f32 %v6027, %v6028
      %v6030 = vsel %vm2964, %v5995, 0.0
      %v6031 = vadd.f32 %v6029, %v6030
      %v6032 = vsel %vm2964, %v5996, 0.0
      %v6033 = vadd.f32 %v6031, %v6032
      %v6034 = vsel %vm2964, %v5997, 0.0
      %v6035 = vadd.f32 %v6033, %v6034
      %v6036 = vsel %vm2964, %v5998, 0.0
      %v6037 = vadd.f32 %v6035, %v6036
      %v6038 = vsel %vm2964, %v5999, 0.0
      %v6039 = vadd.f32 %v6037, %v6038
      %v6040 = vsel %vm2964, %v6000, 0.0
      %v6041 = vadd.f32 %v6039, %v6040
      %v6042 = vsel %vm2964, %v6001, 0.0
      %v6043 = vadd.f32 %v6041, %v6042
      %v6044 = vsel %vm2964, %v6002, 0.0
      %v6045 = vadd.f32 %v6043, %v6044
      %v6046 = vsel %vm2964, %v6003, 0.0
      %v6047 = vadd.f32 %v6045, %v6046
      %v6048 = vsel %vm2964, %v6004, 0.0
      %v6049 = vadd.f32 %v6047, %v6048
      %v6050 = vsel %vm2964, %v6005, 0.0
      %v6051 = vadd.f32 %v6049, %v6050
      %v6052 = vsel %vm2964, %v6006, 0.0
      %v6053 = vadd.f32 %v6051, %v6052
      %v6054 = vsel %vm2964, %v6007, 0.0
      %v6055 = vadd.f32 %v6053, %v6054
      %v6056 = vsel %vm2964, %v6008, 0.0
      %v6057 = vadd.f32 %v6055, %v6056
      %v6058 = vsel %vm2964, %v6009, 0.0
      %v6059 = vadd.f32 %v6057, %v6058
      %v6060 = vsel %vm2964, %v6010, 0.0
      %v6061 = vadd.f32 %v6059, %v6060
      %v6062 = vsel %vm2964, %v6011, 0.0
      %v6063 = vadd.f32 %v6061, %v6062
      %v6064 = vsel %vm2964, %v6012, 0.0
      %v6065 = vadd.f32 %v6063, %v6064
      %v6066 = vsel %vm2964, %v6013, 0.0
      %v6067 = vadd.f32 %v6065, %v6066
      %v6068 = vsel %vm2964, %v6014, 0.0
      %v6069 = vadd.f32 %v6067, %v6068
      %v6070 = vsel %vm2964, %v6015, 0.0
      %v6071 = vadd.f32 %v6069, %v6070
      %v6072 = vsel %vm2964, %v6016, 0.0
      %v6073 = vadd.f32 %v6071, %v6072
      %v6074 = vsel %vm2964, %v6017, 0.0
      %v6075 = vadd.f32 %v6073, %v6074
      %v6076 = vsel %vm2964, %v6018, 0.0
      %v6077 = vadd.f32 %v6075, %v6076
      %v6078 = vsel %vm2964, %v6019, 0.0
      %v6079 = vadd.f32 %v6077, %v6078
      %v6080 = vsel %vm2964, %v6020, 0.0
      %v6081 = vadd.f32 %v6079, %v6080
      %v6082 = vsel %vm2964, %v6021, 0.0
      %v6083 = vadd.f32 %v6081, %v6082
      %v6084 = vsel %vm2964, %v6022, 0.0
      %v6085 = vadd.f32 %v6083, %v6084
      %6086 = vadd.xlane.f32.xlu0 %v6085
      %v6087 = vpop.xlane.xlu0 %6086
      %v6088 = vrot.slane %v6087, 4
      %v6089 = vadd.f32 %v6087, %v6088
      %v6090 = vrot.slane %v6089, 2
      %v6091 = vadd.f32 %v6089, %v6090
      %v6092 = vrot.slane %v6091, 1
      %v6093 = vadd.f32 %v6091, %v6092
      %s6094 = vtos %v6093
      %s6095 = smul.f32 %s6094, 0.00048828125
      %s6096 = sadd.f32 %s6095, 1e-05
      %v6097 = vstv %s6096
      %v6098 = vrsqrt.pop %v6097
      %s6099 = vtos %v6098
      %v6100 = vstv %s6099
      %v6101 = vmul.f32 %v5959, %v6100
      %v6102 = vmul.f32 %v5960, %v6100
      %v6103 = vmul.f32 %v5961, %v6100
      %v6104 = vmul.f32 %v5962, %v6100
      %v6105 = vmul.f32 %v5963, %v6100
      %v6106 = vmul.f32 %v5964, %v6100
      %v6107 = vmul.f32 %v5965, %v6100
      %v6108 = vmul.f32 %v5966, %v6100
      %v6109 = vmul.f32 %v5967, %v6100
      %v6110 = vmul.f32 %v5968, %v6100
      %v6111 = vmul.f32 %v5969, %v6100
      %v6112 = vmul.f32 %v5970, %v6100
      %v6113 = vmul.f32 %v5971, %v6100
      %v6114 = vmul.f32 %v5972, %v6100
      %v6115 = vmul.f32 %v5973, %v6100
      %v6116 = vmul.f32 %v5974, %v6100
      %v6117 = vmul.f32 %v5975, %v6100
      %v6118 = vmul.f32 %v5976, %v6100
      %v6119 = vmul.f32 %v5977, %v6100
      %v6120 = vmul.f32 %v5978, %v6100
      %v6121 = vmul.f32 %v5979, %v6100
      %v6122 = vmul.f32 %v5980, %v6100
      %v6123 = vmul.f32 %v5981, %v6100
      %v6124 = vmul.f32 %v5982, %v6100
      %v6125 = vmul.f32 %v5983, %v6100
      %v6126 = vmul.f32 %v5984, %v6100
      %v6127 = vmul.f32 %v5985, %v6100
      %v6128 = vmul.f32 %v5986, %v6100
      %v6129 = vmul.f32 %v5987, %v6100
      %v6130 = vmul.f32 %v5988, %v6100
      %v6131 = vmul.f32 %v5989, %v6100
      %v6132 = vmul.f32 %v5990, %v6100
      %v6134 = vlaneseq
      %v6135 = vshrl.u32 %v6134, 7
      %v6136 = vsub.s32 0, %v6135
      %v6137 = vrot.slane %v5523, %v6136
      %v6139 = vmul.f32 %v6101, %v6137
      %v6140 = vmul.f32 %v6102, %v6137
      %v6141 = vmul.f32 %v6103, %v6137
      %v6142 = vmul.f32 %v6104, %v6137
      %v6143 = vmul.f32 %v6105, %v6137
      %v6144 = vmul.f32 %v6106, %v6137
      %v6145 = vmul.f32 %v6107, %v6137
      %v6146 = vmul.f32 %v6108, %v6137
      %v6147 = vmul.f32 %v6109, %v6137
      %v6148 = vmul.f32 %v6110, %v6137
      %v6149 = vmul.f32 %v6111, %v6137
      %v6150 = vmul.f32 %v6112, %v6137
      %v6151 = vmul.f32 %v6113, %v6137
      %v6152 = vmul.f32 %v6114, %v6137
      %v6153 = vmul.f32 %v6115, %v6137
      %v6154 = vmul.f32 %v6116, %v6137
      %v6155 = vmul.f32 %v6117, %v6137
      %v6156 = vmul.f32 %v6118, %v6137
      %v6157 = vmul.f32 %v6119, %v6137
      %v6158 = vmul.f32 %v6120, %v6137
      %v6159 = vmul.f32 %v6121, %v6137
      %v6160 = vmul.f32 %v6122, %v6137
      %v6161 = vmul.f32 %v6123, %v6137
      %v6162 = vmul.f32 %v6124, %v6137
      %v6163 = vmul.f32 %v6125, %v6137
      %v6164 = vmul.f32 %v6126, %v6137
      %v6165 = vmul.f32 %v6127, %v6137
      %v6166 = vmul.f32 %v6128, %v6137
      %v6167 = vmul.f32 %v6129, %v6137
      %v6168 = vmul.f32 %v6130, %v6137
      %v6169 = vmul.f32 %v6131, %v6137
      %v6170 = vmul.f32 %v6132, %v6137
      %v6172 = vlaneseq
      %v6173 = vshrl.u32 %v6172, 7
      %v6174 = vsub.s32 0, %v6173
      %v6175 = vrot.slane %v5524, %v6174
      %v6177 = vadd.f32 %v6139, %v6175
      %v6178 = vadd.f32 %v6140, %v6175
      %v6179 = vadd.f32 %v6141, %v6175
      %v6180 = vadd.f32 %v6142, %v6175
      %v6181 = vadd.f32 %v6143, %v6175
      %v6182 = vadd.f32 %v6144, %v6175
      %v6183 = vadd.f32 %v6145, %v6175
      %v6184 = vadd.f32 %v6146, %v6175
      %v6185 = vadd.f32 %v6147, %v6175
      %v6186 = vadd.f32 %v6148, %v6175
      %v6187 = vadd.f32 %v6149, %v6175
      %v6188 = vadd.f32 %v6150, %v6175
      %v6189 = vadd.f32 %v6151, %v6175
      %v6190 = vadd.f32 %v6152, %v6175
      %v6191 = vadd.f32 %v6153, %v6175
      %v6192 = vadd.f32 %v6154, %v6175
      %v6193 = vadd.f32 %v6155, %v6175
      %v6194 = vadd.f32 %v6156, %v6175
      %v6195 = vadd.f32 %v6157, %v6175
      %v6196 = vadd.f32 %v6158, %v6175
      %v6197 = vadd.f32 %v6159, %v6175
      %v6198 = vadd.f32 %v6160, %v6175
      %v6199 = vadd.f32 %v6161, %v6175
      %v6200 = vadd.f32 %v6162, %v6175
      %v6201 = vadd.f32 %v6163, %v6175
      %v6202 = vadd.f32 %v6164, %v6175
      %v6203 = vadd.f32 %v6165, %v6175
      %v6204 = vadd.f32 %v6166, %v6175
      %v6205 = vadd.f32 %v6167, %v6175
      %v6206 = vadd.f32 %v6168, %v6175
      %v6207 = vadd.f32 %v6169, %v6175
      %v6208 = vadd.f32 %v6170, %v6175
      %v6209 = vmax.f32 %v6177, 0.0
      %v6210 = vmax.f32 %v6178, 0.0
      %v6211 = vmax.f32 %v6179, 0.0
      %v6212 = vmax.f32 %v6180, 0.0
      %v6213 = vmax.f32 %v6181, 0.0
      %v6214 = vmax.f32 %v6182, 0.0
      %v6215 = vmax.f32 %v6183, 0.0
      %v6216 = vmax.f32 %v6184, 0.0
      %v6217 = vmax.f32 %v6185, 0.0
      %v6218 = vmax.f32 %v6186, 0.0
      %v6219 = vmax.f32 %v6187, 0.0
      %v6220 = vmax.f32 %v6188, 0.0
      %v6221 = vmax.f32 %v6189, 0.0
      %v6222 = vmax.f32 %v6190, 0.0
      %v6223 = vmax.f32 %v6191, 0.0
      %v6224 = vmax.f32 %v6192, 0.0
      %v6225 = vmax.f32 %v6193, 0.0
      %v6226 = vmax.f32 %v6194, 0.0
      %v6227 = vmax.f32 %v6195, 0.0
      %v6228 = vmax.f32 %v6196, 0.0
      %v6229 = vmax.f32 %v6197, 0.0
      %v6230 = vmax.f32 %v6198, 0.0
      %v6231 = vmax.f32 %v6199, 0.0
      %v6232 = vmax.f32 %v6200, 0.0
      %v6233 = vmax.f32 %v6201, 0.0
      %v6234 = vmax.f32 %v6202, 0.0
      %v6235 = vmax.f32 %v6203, 0.0
      %v6236 = vmax.f32 %v6204, 0.0
      %v6237 = vmax.f32 %v6205, 0.0
      %v6238 = vmax.f32 %v6206, 0.0
      %v6239 = vmax.f32 %v6207, 0.0
      %v6240 = vmax.f32 %v6208, 0.0
      %v6241 = vlaneseq
      %v6242 = vand.u32 %v6241, 127
      %vm6243 = vcmp.eq.s32.totalorder %v512, %v6242
      %v6244 = vsel %vm6243, 1, 0
      %v6245 = vcvt.s32.f32 %v6244
      %v6247 = vsel %vm2964, %v6245, 0
      %v6250 = vsel %vm2964, %v6209, 0
      %v6253 = vsel %vm2964, %v6210, 0
      %v6256 = vsel %vm2964, %v6211, 0
      %v6259 = vsel %vm2964, %v6212, 0
      %v6262 = vsel %vm2964, %v6213, 0
      %v6265 = vsel %vm2964, %v6214, 0
      %v6268 = vsel %vm2964, %v6215, 0
      %v6271 = vsel %vm2964, %v6216, 0
      %v6274 = vsel %vm2964, %v6217, 0
      %v6277 = vsel %vm2964, %v6218, 0
      %v6280 = vsel %vm2964, %v6219, 0
      %v6283 = vsel %vm2964, %v6220, 0
      %v6286 = vsel %vm2964, %v6221, 0
      %v6289 = vsel %vm2964, %v6222, 0
      %v6292 = vsel %vm2964, %v6223, 0
      %v6295 = vsel %vm2964, %v6224, 0
      %v6298 = vsel %vm2964, %v6225, 0
      %v6301 = vsel %vm2964, %v6226, 0
      %v6304 = vsel %vm2964, %v6227, 0
      %v6307 = vsel %vm2964, %v6228, 0
      %v6310 = vsel %vm2964, %v6229, 0
      %v6313 = vsel %vm2964, %v6230, 0
      %v6316 = vsel %vm2964, %v6231, 0
      %v6319 = vsel %vm2964, %v6232, 0
      %v6322 = vsel %vm2964, %v6233, 0
      %v6325 = vsel %vm2964, %v6234, 0
      %v6328 = vsel %vm2964, %v6235, 0
      %v6331 = vsel %vm2964, %v6236, 0
      %v6334 = vsel %vm2964, %v6237, 0
      %v6337 = vsel %vm2964, %v6238, 0
      %v6340 = vsel %vm2964, %v6239, 0
      %v6343 = vsel %vm2964, %v6240, 0
      %6345 = vmatprep.subr.mxu0 0.0
      %6346 = vmatpush1.xpose.msra.mxu0 %v6250
      %6347 = vmatprep.subr.mxu0 0.0
      %6348 = vmatpush1.xpose.msra.mxu0 %v6253
      %6349 = vmatprep.subr.mxu0 0.0
      %6350 = vmatpush1.xpose.msra.mxu0 %v6256
      %6351 = vmatprep.subr.mxu0 0.0
      %6352 = vmatpush1.xpose.msra.mxu0 %v6259
      %6353 = vmatprep.subr.mxu0 0.0
      %6354 = vmatpush1.xpose.msra.mxu0 %v6262
      %6355 = vmatprep.subr.mxu0 0.0
      %6356 = vmatpush1.xpose.msra.mxu0 %v6265
      %6357 = vmatprep.subr.mxu0 0.0
      %6358 = vmatpush1.xpose.msra.mxu0 %v6268
      %6359 = vmatprep.subr.mxu0 0.0
      %6360 = vmatpush1.xpose.msra.mxu0 %v6271
      %6361 = vmatprep.subr.mxu0 0.0
      %6362 = vmatpush1.xpose.msra.mxu0 %v6274
      %6363 = vmatprep.subr.mxu0 0.0
      %6364 = vmatpush1.xpose.msra.mxu0 %v6277
      %6365 = vmatprep.subr.mxu0 0.0
      %6366 = vmatpush1.xpose.msra.mxu0 %v6280
      %6367 = vmatprep.subr.mxu0 0.0
      %6368 = vmatpush1.xpose.msra.mxu0 %v6283
      %6369 = vmatprep.subr.mxu0 0.0
      %6370 = vmatpush1.xpose.msra.mxu0 %v6286
      %6371 = vmatprep.subr.mxu0 0.0
      %6372 = vmatpush1.xpose.msra.mxu0 %v6289
      %6373 = vmatprep.subr.mxu0 0.0
      %6374 = vmatpush1.xpose.msra.mxu0 %v6292
      %6375 = vmatprep.subr.mxu0 0.0
      %6376 = vmatpush1.xpose.msra.mxu0 %v6295
      %6377 = vmatprep.subr.mxu0 0.0
      %6378 = vmatpush1.xpose.msra.mxu0 %v6298
      %6379 = vmatprep.subr.mxu0 0.0
      %6380 = vmatpush1.xpose.msra.mxu0 %v6301
      %6381 = vmatprep.subr.mxu0 0.0
      %6382 = vmatpush1.xpose.msra.mxu0 %v6304
      %6383 = vmatprep.subr.mxu0 0.0
      %6384 = vmatpush1.xpose.msra.mxu0 %v6307
      %6385 = vmatprep.subr.mxu0 0.0
      %6386 = vmatpush1.xpose.msra.mxu0 %v6310
      %6387 = vmatprep.subr.mxu0 0.0
      %6388 = vmatpush1.xpose.msra.mxu0 %v6313
      %6389 = vmatprep.subr.mxu0 0.0
      %6390 = vmatpush1.xpose.msra.mxu0 %v6316
      %6391 = vmatprep.subr.mxu0 0.0
      %6392 = vmatpush1.xpose.msra.mxu0 %v6319
      %6393 = vmatprep.subr.mxu0 0.0
      %6394 = vmatpush1.xpose.msra.mxu0 %v6322
      %6395 = vmatprep.subr.mxu0 0.0
      %6396 = vmatpush1.xpose.msra.mxu0 %v6325
      %6397 = vmatprep.subr.mxu0 0.0
      %6398 = vmatpush1.xpose.msra.mxu0 %v6328
      %6399 = vmatprep.subr.mxu0 0.0
      %6400 = vmatpush1.xpose.msra.mxu0 %v6331
      %6401 = vmatprep.subr.mxu0 0.0
      %6402 = vmatpush1.xpose.msra.mxu0 %v6334
      %6403 = vmatprep.subr.mxu0 0.0
      %6404 = vmatpush1.xpose.msra.mxu0 %v6337
      %6405 = vmatprep.subr.mxu0 0.0
      %6406 = vmatpush1.xpose.msra.mxu0 %v6340
      %6407 = vmatprep.subr.mxu0 0.0
      %6408 = vmatpush1.xpose.msra.mxu0 %v6343
      %6409 = vmatprep.mubr.f32.mxu0 0.0
      %6410 = vmatmul.mubr.f32.gmra.mrb[0].mxu0 %v6247
      %v6411 = vpop.f32.mrb[0].mxu0
      %v6412 = vadd.f32 0.0, %v6411
      %v6413 = vpop.f32.mrb[0].mxu0
      %v6414 = vadd.f32 0.0, %v6413
      %6415 = vdwg.mxu0
      %6416 = vst [vmem:[%s379] sm:$0xff] %v6412
      %6417 = vst [vmem:[%s379 + $0x8] sm:$0xff] %v6414
      %p6418 = scmp.lt.s32.totalorder %s21, 1
      %s6419 = scalar_select %p6418, %s21, 1
      %s6420 = smul.addr %s6419, 2
      %s6421 = smul.addr %s6420, 8
      %s6422 = scalar_lea.vmem %s10, %s6421
      // Predicated region
      $region61: #{up_forward.3} parent=59 // pred_check
        %p6423 = pneg %p259
      $region62: #{up_forward.3} parent=59 // pred_check_branch
        %6425 = sbr.rel (%p6423) target = $region64
      $region63: #{up_forward.3} parent=59 // pred_region
        _
      $region64: #{up_forward.3} parent=59 // pred_fallthru
        _
    $region60: #{up_forward.3} parent=5 // pred_fallthru
      _
    %p6426 = scmp.le.s32.totalorder 2, %s16
    // Predicated region
    $region65: #{up_forward.3} parent=5 // pred_check
      %p6427 = pneg %p6426
    $region66: #{up_forward.3} parent=5 // pred_check_branch
      %6429 = sbr.rel (%p6427) target = $region68
    $region67: #{up_forward.3} parent=5 // pred_region
      %s6430 = ssub.s32 %s16, 2
      // Predicated region
      $region69: #{up_forward.3} parent=67 // pred_check
        %p6431 = pneg %p265
      $region70: #{up_forward.3} parent=67 // pred_check_branch
        %6433 = sbr.rel (%p6431) target = $region72
      $region71: #{up_forward.3} parent=67 // pred_region
        %p6434 = scmp.lt.s32.totalorder %s22, 1
        %s6435 = scalar_select %p6434, %s22, 1
        %s6436 = smul.addr %s6435, 2
        %s6437 = smul.addr %s6436, 8
        %s6438 = scalar_lea.vmem %s10, %s6437
      $region72: #{up_forward.3} parent=67 // pred_fallthru
        _
    $region68: #{up_forward.3} parent=5 // pred_fallthru
      _
  $region6: #{up_forward.3} parent=0 // loop_footer
    %s20 = sadd.s32 1, %s16
  $region7: #{up_forward.3} parent=0 // loop_footer_branch
    %15 = sbr.rel target = $region3
  $region8: #{up_forward.3} parent=0 // loop_exit
    _

</llo_original>
